<compile_context>
chip_gen: v7x
topology: tpu7x:2x2x1
jax: 0.10.0
libtpu: 0.0.40
codegen_flags: <defaults>
</compile_context>

<pallas_src>
import jax
import jax.numpy as jnp
from jax.experimental import pallas as pl
from jax.experimental.pallas import tpu as pltpu

LEAKY_SLOPE = 0.01          # F.leaky_relu default
LATENT = 10                 # fc31/fc32 output width
LPAD = 128                  # latent dim padded to a full lane width
H1, H2 = 1000, 300          # hidden widths of the torch module


def _round_up(n, m):
    return (n + m - 1) // m * m


def _leaky_relu(x):
    # single vmax instead of compare + select
    return jnp.maximum(x, LEAKY_SLOPE * x)


def _bdot(a, w_ref):
    # bf16 MXU inputs, f32 accumulation
    return jnp.dot(a.astype(jnp.bfloat16), w_ref[...],
                   preferred_element_type=jnp.float32)


def vae1_kernel(
    x_ref, eps_ref,
    w1_ref, b1_ref, w2_ref, b2_ref,
    w3_ref, b3_ref,                       # fused fc31|fc32, lane-padded to 2*LPAD
    w4_ref, b4_ref, w5_ref, b5_ref, w6_ref, b6_ref,
    recon_ref, mulv_ref,
):
    x = x_ref[...]                                               # (tb, Ppad) f32

    # ---- encode ----
    h1 = _leaky_relu(_bdot(x, w1_ref) + b1_ref[...])             # (tb, 1000)
    h2 = _leaky_relu(_bdot(h1, w2_ref) + b2_ref[...])            # (tb, 300)
    mulv = _bdot(h2, w3_ref) + b3_ref[...]                       # (tb, 2*LPAD)
    mu = mulv[:, :LPAD]
    log_var = mulv[:, LPAD:]

    # ---- reparametrise ---- (eps ~ N(0,1) supplied from the host)
    z = mu + eps_ref[...] * jnp.exp(0.5 * log_var)               # (tb, LPAD)

    # ---- decode ---- (padded z lanes hit zero rows of w4 -> exact)
    h4 = _leaky_relu(_bdot(z, w4_ref) + b4_ref[...])             # (tb, 300)
    h5 = _leaky_relu(_bdot(h4, w5_ref) + b5_ref[...])            # (tb, 1000)
    recon = _bdot(h5, w6_ref) + b6_ref[...]                      # (tb, Ppad)

    recon_ref[...] = recon
    mulv_ref[...] = mulv


def prepare_kernel_params(params):
    """Pack torch-layout f32 params into kernel layout: bf16 weights, fused
    lane-padded fc31+fc32 head, zero-padded fc4 rows, lane-padded fc1/fc6."""
    P = params["w1"].shape[0]
    Ppad = _round_up(P, 128)
    bf = jnp.bfloat16
    f32 = jnp.float32

    w1 = jnp.zeros((Ppad, H1), bf).at[:P, :].set(params["w1"].astype(bf))
    b1 = params["b1"].astype(f32)
    w2 = params["w2"].astype(bf)
    b2 = params["b2"].astype(f32)

    w3 = jnp.zeros((H2, 2 * LPAD), bf)
    w3 = w3.at[:, :LATENT].set(params["w31"].astype(bf))
    w3 = w3.at[:, LPAD:LPAD + LATENT].set(params["w32"].astype(bf))
    b3 = jnp.zeros((1, 2 * LPAD), f32)
    b3 = b3.at[:, :LATENT].set(params["b31"].astype(f32))
    b3 = b3.at[:, LPAD:LPAD + LATENT].set(params["b32"].astype(f32))

    w4 = jnp.zeros((LPAD, H2), bf).at[:LATENT, :].set(params["w4"].astype(bf))
    b4 = params["b4"].astype(f32)
    w5 = params["w5"].astype(bf)
    b5 = params["b5"].astype(f32)
    w6 = jnp.zeros((H1, Ppad), bf).at[:, :P].set(params["w6"].astype(bf))
    b6 = jnp.zeros((1, Ppad), f32).at[:, :P].set(params["b6"].astype(f32))

    return dict(w1=w1, b1=b1, w2=w2, b2=b2, w3=w3, b3=b3,
                w4=w4, b4=b4, w5=w5, b5=b5, w6=w6, b6=b6,
                P=P, Ppad=Ppad)


def vae1_forward(x, eps, kp, *, tile_b=256):
    B, P = x.shape
    assert P == kp["P"]
    Ppad = kp["Ppad"]

    # batch tile: multiple of 8 sublanes, up to tile_b rows
    tb = min(tile_b, _round_up(B, 8))
    Bp = _round_up(B, tb)

    x_p = jnp.zeros((Bp, Ppad), jnp.float32).at[:B, :P].set(x.astype(jnp.float32))
    eps_p = jnp.zeros((Bp, LPAD), jnp.float32).at[:B, :LATENT].set(
        eps.astype(jnp.float32))

    grid = (Bp // tb,)
    tile_map = lambda i: (i, 0)
    whole = lambda i: (0, 0)          # constant -> weights stay VMEM-resident

    weight_names = ("w1", "b1", "w2", "b2", "w3", "b3",
                    "w4", "b4", "w5", "b5", "w6", "b6")
    weight_args = [kp[n] for n in weight_names]
    weight_specs = [pl.BlockSpec(a.shape, whole) for a in weight_args]

    in_specs = [
        pl.BlockSpec((tb, Ppad), tile_map),       # x
        pl.BlockSpec((tb, LPAD), tile_map),       # eps
    ] + weight_specs

    out_specs = (
        pl.BlockSpec((tb, Ppad), tile_map),       # recon
        pl.BlockSpec((tb, 2 * LPAD), tile_map),   # [mu | log_var] slab
    )

    # advisory cost estimate for the XLA scheduler
    flops = 2 * Bp * (Ppad * H1 + H1 * H2 + H2 * 2 * LPAD
                      + LPAD * H2 + H2 * H1 + H1 * Ppad)
    weight_bytes = int(sum(a.size * a.dtype.itemsize for a in weight_args))
    io_bytes = int((x_p.size + eps_p.size + Bp * Ppad + Bp * 2 * LPAD) * 4)
    cost = pl.CostEstimate(flops=int(flops),
                           transcendentals=int(Bp * LPAD),
                           bytes_accessed=weight_bytes + io_bytes)

    # VMEM budget: (double-buffered) weights + streamed tiles + live
    # activations + headroom, clamped below v7x's 64 MiB physical VMEM.
    stream_bytes = 4 * tb * (Ppad + LPAD + Ppad + 2 * LPAD)
    act_bytes = 4 * tb * (H1 + H2 + 2 * LPAD + H2 + H1)
    vmem_limit = 2 * weight_bytes + 2 * stream_bytes + act_bytes + (8 << 20)
    vmem_limit = int(min(vmem_limit, 56 << 20))
    # TODO(synk): for profile_len large enough that fc1/fc6 weights alone blow
    # the ~56 MiB v7x budget, tile those two matmuls along K/N (grid axis
    # marked "arbitrary" with an f32 VMEM accumulator) instead of keeping them
    # fully resident.

    recon_p, mulv_p = pl.pallas_call(
        vae1_kernel,
        out_shape=(
            jax.ShapeDtypeStruct((Bp, Ppad), jnp.float32),
            jax.ShapeDtypeStruct((Bp, 2 * LPAD), jnp.float32),
        ),
        grid=grid,
        in_specs=in_specs,
        out_specs=out_specs,
        compiler_params=pltpu.CompilerParams(
            dimension_semantics=("parallel",),   # shard batch across TCs (v7x)
            vmem_limit_bytes=vmem_limit,
        ),
        cost_estimate=cost,
    )(x_p, eps_p, *weight_args)

    recon = recon_p[:B, :P]
    mu = mulv_p[:B, :LATENT]
    log_var = mulv_p[:B, LPAD:LPAD + LATENT]
    return recon, mu, log_var


def init_params(key, profile_len):
    """Deterministic init mimicking nn.Linear's U(-1/sqrt(fan_in), 1/sqrt(fan_in)).
    Weights are stored transposed vs. torch (in_feats, out_feats)."""
    dims = {
        "1": (profile_len, H1),
        "2": (H1, H2),
        "31": (H2, LATENT),
        "32": (H2, LATENT),
        "4": (LATENT, H2),
        "5": (H2, H1),
        "6": (H1, profile_len),
    }
    params = {}
    keys = jax.random.split(key, 2 * len(dims))
    for i, (name, (fan_in, fan_out)) in enumerate(dims.items()):
        bound = 1.0 / jnp.sqrt(fan_in)
        params[f"w{name}"] = jax.random.uniform(
            keys[2 * i], (fan_in, fan_out), jnp.float32, -bound, bound)
        params[f"b{name}"] = jax.random.uniform(
            keys[2 * i + 1], (1, fan_out), jnp.float32, -bound, bound)
    return params


def vae1_reference(x, eps, params):
    """Plain-JAX reference using the same bf16-input / f32-accumulate matmuls."""
    bf = jnp.bfloat16
    dot = lambda a, w: jnp.dot(a.astype(bf), w.astype(bf),
                               preferred_element_type=jnp.float32)
    lr = lambda v: jnp.maximum(v, LEAKY_SLOPE * v)
    h1 = lr(dot(x, params["w1"]) + params["b1"])
    h2 = lr(dot(h1, params["w2"]) + params["b2"])
    mu = dot(h2, params["w31"]) + params["b31"]
    log_var = dot(h2, params["w32"]) + params["b32"]
    z = mu + eps * jnp.exp(0.5 * log_var)
    h4 = lr(dot(z, params["w4"]) + params["b4"])
    h5 = lr(dot(h4, params["w5"]) + params["b5"])
    recon = dot(h5, params["w6"]) + params["b6"]
    return recon, mu, log_var


if __name__ == "__main__":
    B = 8             # small batch
    PROFILE_LEN = 64  # conf.profile_len (small synthetic value)

    key = jax.random.PRNGKey(0)
    k_x, k_eps, k_params = jax.random.split(key, 3)

    x = jax.random.normal(k_x, (B, PROFILE_LEN), jnp.float32)
    eps = jax.random.normal(k_eps, (B, LATENT), jnp.float32)  # randn_like(std)
    params = init_params(k_params, PROFILE_LEN)
    kp = prepare_kernel_params(params)

    recon, mu, log_var = jax.block_until_ready(vae1_forward(x, eps, kp))

    r_ref, m_ref, lv_ref = vae1_reference(x, eps, params)
    assert recon.shape == (B, PROFILE_LEN)
    assert mu.shape == (B, LATENT) and log_var.shape == (B, LATENT)
    assert jnp.allclose(recon, r_ref, atol=2e-2, rtol=2e-2)
    assert jnp.allclose(mu, m_ref, atol=2e-2, rtol=2e-2)
    assert jnp.allclose(log_var, lv_ref, atol=2e-2, rtol=2e-2)

    print("KERNEL_OK")
</pallas_src>

<mosaic_0001>
module attributes {stable_mosaic.version = 11 : i64} {
  func.func @vae1_kernel(%arg0: i32, %arg1: memref<8x128xf32, #tpu.memory_space<vmem>>, %arg2: memref<8x128xf32, #tpu.memory_space<vmem>>, %arg3: memref<128x1000xbf16, #tpu.memory_space<vmem>>, %arg4: memref<1x1000xf32, #tpu.memory_space<vmem>>, %arg5: memref<1000x300xbf16, #tpu.memory_space<vmem>>, %arg6: memref<1x300xf32, #tpu.memory_space<vmem>>, %arg7: memref<300x256xbf16, #tpu.memory_space<vmem>>, %arg8: memref<1x256xf32, #tpu.memory_space<vmem>>, %arg9: memref<128x300xbf16, #tpu.memory_space<vmem>>, %arg10: memref<1x300xf32, #tpu.memory_space<vmem>>, %arg11: memref<300x1000xbf16, #tpu.memory_space<vmem>>, %arg12: memref<1x1000xf32, #tpu.memory_space<vmem>>, %arg13: memref<1000x128xbf16, #tpu.memory_space<vmem>>, %arg14: memref<1x128xf32, #tpu.memory_space<vmem>>, %arg15: memref<8x128xf32, #tpu.memory_space<vmem>>, %arg16: memref<8x256xf32, #tpu.memory_space<vmem>>) attributes {dimension_semantics = [#tpu.dimension_semantics<parallel>], iteration_bounds = array<i64: 1>, scalar_prefetch = 0 : i64, scratch_operands = 0 : i64, tpu.core_type = #tpu.core_type<tc>, window_params = [{transform_indices = @transform_0, window_bounds = array<i64: 8, 128>}, {transform_indices = @transform_1, window_bounds = array<i64: 8, 128>}, {pipeline_mode = #tpu.pipeline_mode<synchronous>, transform_indices = @transform_2, window_bounds = array<i64: 128, 1000>}, {pipeline_mode = #tpu.pipeline_mode<synchronous>, transform_indices = @transform_3, window_bounds = array<i64: 1, 1000>}, {pipeline_mode = #tpu.pipeline_mode<synchronous>, transform_indices = @transform_4, window_bounds = array<i64: 1000, 300>}, {pipeline_mode = #tpu.pipeline_mode<synchronous>, transform_indices = @transform_5, window_bounds = array<i64: 1, 300>}, {pipeline_mode = #tpu.pipeline_mode<synchronous>, transform_indices = @transform_6, window_bounds = array<i64: 300, 256>}, {pipeline_mode = #tpu.pipeline_mode<synchronous>, transform_indices = @transform_7, window_bounds = array<i64: 1, 256>}, {pipeline_mode = #tpu.pipeline_mode<synchronous>, transform_indices = @transform_8, window_bounds = array<i64: 128, 300>}, {pipeline_mode = #tpu.pipeline_mode<synchronous>, transform_indices = @transform_9, window_bounds = array<i64: 1, 300>}, {pipeline_mode = #tpu.pipeline_mode<synchronous>, transform_indices = @transform_10, window_bounds = array<i64: 300, 1000>}, {pipeline_mode = #tpu.pipeline_mode<synchronous>, transform_indices = @transform_11, window_bounds = array<i64: 1, 1000>}, {pipeline_mode = #tpu.pipeline_mode<synchronous>, transform_indices = @transform_12, window_bounds = array<i64: 1000, 128>}, {pipeline_mode = #tpu.pipeline_mode<synchronous>, transform_indices = @transform_13, window_bounds = array<i64: 1, 128>}, {transform_indices = @transform_14, window_bounds = array<i64: 8, 128>}, {transform_indices = @transform_15, window_bounds = array<i64: 8, 256>}]} {
    %c0 = arith.constant 0 : index
    %c0_0 = arith.constant 0 : index
    %0 = vector.load %arg1[%c0, %c0_0] : memref<8x128xf32, #tpu.memory_space<vmem>>, vector<8x128xf32>
    %1 = arith.truncf %0 : vector<8x128xf32> to vector<8x128xbf16>
    %c0_1 = arith.constant 0 : index
    %c0_2 = arith.constant 0 : index
    %2 = vector.load %arg3[%c0_1, %c0_2] : memref<128x1000xbf16, #tpu.memory_space<vmem>>, vector<128x1000xbf16>
    %cst = arith.constant dense<0.000000e+00> : vector<8x1000xf32>
    %3 = tpu.matmul %1, %2, %cst {dimension_numbers = #tpu.dot_dimension_numbers<[1], [0], [0], [1], [0, 0, 1, 1], [], []>} : vector<8x128xbf16>, vector<128x1000xbf16>, vector<8x1000xf32> -> vector<8x1000xf32>
    %c0_3 = arith.constant 0 : index
    %c0_4 = arith.constant 0 : index
    %4 = vector.load %arg4[%c0_3, %c0_4] : memref<1x1000xf32, #tpu.memory_space<vmem>>, vector<1x1000xf32>
    %5 = vector.broadcast %4 : vector<1x1000xf32> to vector<8x1000xf32>
    %6 = arith.addf %3, %5 : vector<8x1000xf32>
    %cst_5 = arith.constant 0.00999999977 : f32
    %7 = vector.broadcast %cst_5 : f32 to vector<8x1000xf32>
    %8 = arith.mulf %7, %6 : vector<8x1000xf32>
    %9 = arith.maximumf %6, %8 : vector<8x1000xf32>
    %10 = arith.truncf %9 : vector<8x1000xf32> to vector<8x1000xbf16>
    %c0_6 = arith.constant 0 : index
    %c0_7 = arith.constant 0 : index
    %11 = vector.load %arg5[%c0_6, %c0_7] : memref<1000x300xbf16, #tpu.memory_space<vmem>>, vector<1000x300xbf16>
    %cst_8 = arith.constant dense<0.000000e+00> : vector<8x300xf32>
    %12 = tpu.matmul %10, %11, %cst_8 {dimension_numbers = #tpu.dot_dimension_numbers<[1], [0], [0], [1], [0, 0, 1, 1], [], []>} : vector<8x1000xbf16>, vector<1000x300xbf16>, vector<8x300xf32> -> vector<8x300xf32>
    %c0_9 = arith.constant 0 : index
    %c0_10 = arith.constant 0 : index
    %13 = vector.load %arg6[%c0_9, %c0_10] : memref<1x300xf32, #tpu.memory_space<vmem>>, vector<1x300xf32>
    %14 = vector.broadcast %13 : vector<1x300xf32> to vector<8x300xf32>
    %15 = arith.addf %12, %14 : vector<8x300xf32>
    %cst_11 = arith.constant 0.00999999977 : f32
    %16 = vector.broadcast %cst_11 : f32 to vector<8x300xf32>
    %17 = arith.mulf %16, %15 : vector<8x300xf32>
    %18 = arith.maximumf %15, %17 : vector<8x300xf32>
    %19 = arith.truncf %18 : vector<8x300xf32> to vector<8x300xbf16>
    %c0_12 = arith.constant 0 : index
    %c0_13 = arith.constant 0 : index
    %20 = vector.load %arg7[%c0_12, %c0_13] : memref<300x256xbf16, #tpu.memory_space<vmem>>, vector<300x256xbf16>
    %cst_14 = arith.constant dense<0.000000e+00> : vector<8x256xf32>
    %21 = tpu.matmul %19, %20, %cst_14 {dimension_numbers = #tpu.dot_dimension_numbers<[1], [0], [0], [1], [0, 0, 1, 1], [], []>} : vector<8x300xbf16>, vector<300x256xbf16>, vector<8x256xf32> -> vector<8x256xf32>
    %c0_15 = arith.constant 0 : index
    %c0_16 = arith.constant 0 : index
    %22 = vector.load %arg8[%c0_15, %c0_16] : memref<1x256xf32, #tpu.memory_space<vmem>>, vector<1x256xf32>
    %23 = vector.broadcast %22 : vector<1x256xf32> to vector<8x256xf32>
    %24 = arith.addf %21, %23 : vector<8x256xf32>
    %25 = vector.extract_strided_slice %24 {offsets = [0, 0], sizes = [8, 128], strides = [1, 1]} : vector<8x256xf32> to vector<8x128xf32>
    %26 = vector.extract_strided_slice %24 {offsets = [0, 128], sizes = [8, 128], strides = [1, 1]} : vector<8x256xf32> to vector<8x128xf32>
    %c0_17 = arith.constant 0 : index
    %c0_18 = arith.constant 0 : index
    %27 = vector.load %arg2[%c0_17, %c0_18] : memref<8x128xf32, #tpu.memory_space<vmem>>, vector<8x128xf32>
    %cst_19 = arith.constant 5.000000e-01 : f32
    %28 = vector.broadcast %cst_19 : f32 to vector<8x128xf32>
    %29 = arith.mulf %28, %26 : vector<8x128xf32>
    %30 = math.exp %29 : vector<8x128xf32>
    %31 = arith.mulf %27, %30 : vector<8x128xf32>
    %32 = arith.addf %25, %31 : vector<8x128xf32>
    %33 = arith.truncf %32 : vector<8x128xf32> to vector<8x128xbf16>
    %c0_20 = arith.constant 0 : index
    %c0_21 = arith.constant 0 : index
    %34 = vector.load %arg9[%c0_20, %c0_21] : memref<128x300xbf16, #tpu.memory_space<vmem>>, vector<128x300xbf16>
    %cst_22 = arith.constant dense<0.000000e+00> : vector<8x300xf32>
    %35 = tpu.matmul %33, %34, %cst_22 {dimension_numbers = #tpu.dot_dimension_numbers<[1], [0], [0], [1], [0, 0, 1, 1], [], []>} : vector<8x128xbf16>, vector<128x300xbf16>, vector<8x300xf32> -> vector<8x300xf32>
    %c0_23 = arith.constant 0 : index
    %c0_24 = arith.constant 0 : index
    %36 = vector.load %arg10[%c0_23, %c0_24] : memref<1x300xf32, #tpu.memory_space<vmem>>, vector<1x300xf32>
    %37 = vector.broadcast %36 : vector<1x300xf32> to vector<8x300xf32>
    %38 = arith.addf %35, %37 : vector<8x300xf32>
    %cst_25 = arith.constant 0.00999999977 : f32
    %39 = vector.broadcast %cst_25 : f32 to vector<8x300xf32>
    %40 = arith.mulf %39, %38 : vector<8x300xf32>
    %41 = arith.maximumf %38, %40 : vector<8x300xf32>
    %42 = arith.truncf %41 : vector<8x300xf32> to vector<8x300xbf16>
    %c0_26 = arith.constant 0 : index
    %c0_27 = arith.constant 0 : index
    %43 = vector.load %arg11[%c0_26, %c0_27] : memref<300x1000xbf16, #tpu.memory_space<vmem>>, vector<300x1000xbf16>
    %cst_28 = arith.constant dense<0.000000e+00> : vector<8x1000xf32>
    %44 = tpu.matmul %42, %43, %cst_28 {dimension_numbers = #tpu.dot_dimension_numbers<[1], [0], [0], [1], [0, 0, 1, 1], [], []>} : vector<8x300xbf16>, vector<300x1000xbf16>, vector<8x1000xf32> -> vector<8x1000xf32>
    %c0_29 = arith.constant 0 : index
    %c0_30 = arith.constant 0 : index
    %45 = vector.load %arg12[%c0_29, %c0_30] : memref<1x1000xf32, #tpu.memory_space<vmem>>, vector<1x1000xf32>
    %46 = vector.broadcast %45 : vector<1x1000xf32> to vector<8x1000xf32>
    %47 = arith.addf %44, %46 : vector<8x1000xf32>
    %cst_31 = arith.constant 0.00999999977 : f32
    %48 = vector.broadcast %cst_31 : f32 to vector<8x1000xf32>
    %49 = arith.mulf %48, %47 : vector<8x1000xf32>
    %50 = arith.maximumf %47, %49 : vector<8x1000xf32>
    %51 = arith.truncf %50 : vector<8x1000xf32> to vector<8x1000xbf16>
    %c0_32 = arith.constant 0 : index
    %c0_33 = arith.constant 0 : index
    %52 = vector.load %arg13[%c0_32, %c0_33] : memref<1000x128xbf16, #tpu.memory_space<vmem>>, vector<1000x128xbf16>
    %cst_34 = arith.constant dense<0.000000e+00> : vector<8x128xf32>
    %53 = tpu.matmul %51, %52, %cst_34 {dimension_numbers = #tpu.dot_dimension_numbers<[1], [0], [0], [1], [0, 0, 1, 1], [], []>} : vector<8x1000xbf16>, vector<1000x128xbf16>, vector<8x128xf32> -> vector<8x128xf32>
    %c0_35 = arith.constant 0 : index
    %c0_36 = arith.constant 0 : index
    %54 = vector.load %arg14[%c0_35, %c0_36] : memref<1x128xf32, #tpu.memory_space<vmem>>, vector<1x128xf32>
    %55 = vector.broadcast %54 : vector<1x128xf32> to vector<8x128xf32>
    %56 = arith.addf %53, %55 : vector<8x128xf32>
    %c0_37 = arith.constant 0 : index
    %c0_38 = arith.constant 0 : index
    %57 = vector.load %arg15[%c0_37, %c0_38] : memref<8x128xf32, #tpu.memory_space<vmem>>, vector<8x128xf32>
    tpu.vector_store %arg15[%c0_37, %c0_38], %56 {strides = array<i32>} : memref<8x128xf32, #tpu.memory_space<vmem>>, vector<8x128xf32>,
    %c0_39 = arith.constant 0 : index
    %c0_40 = arith.constant 0 : index
    %58 = vector.load %arg16[%c0_39, %c0_40] : memref<8x256xf32, #tpu.memory_space<vmem>>, vector<8x256xf32>
    tpu.vector_store %arg16[%c0_39, %c0_40], %24 {strides = array<i32>} : memref<8x256xf32, #tpu.memory_space<vmem>>, vector<8x256xf32>,
    return
  }
  func.func @transform_0(%arg0: i32) -> (i32, i32) {
    %c0_i32 = arith.constant 0 : i32
    %c0_i32_0 = arith.constant 0 : i32
    return %arg0, %c0_i32 : i32, i32
  }
  func.func @transform_1(%arg0: i32) -> (i32, i32) {
    %c0_i32 = arith.constant 0 : i32
    %c0_i32_0 = arith.constant 0 : i32
    return %arg0, %c0_i32 : i32, i32
  }
  func.func @transform_2(%arg0: i32) -> (i32, i32) {
    %c0_i32 = arith.constant 0 : i32
    %c0_i32_0 = arith.constant 0 : i32
    %c0_i32_1 = arith.constant 0 : i32
    return %c0_i32, %c0_i32_0 : i32, i32
  }
  func.func @transform_3(%arg0: i32) -> (i32, i32) {
    %c0_i32 = arith.constant 0 : i32
    %c0_i32_0 = arith.constant 0 : i32
    %c0_i32_1 = arith.constant 0 : i32
    return %c0_i32, %c0_i32_0 : i32, i32
  }
  func.func @transform_4(%arg0: i32) -> (i32, i32) {
    %c0_i32 = arith.constant 0 : i32
    %c0_i32_0 = arith.constant 0 : i32
    %c0_i32_1 = arith.constant 0 : i32
    return %c0_i32, %c0_i32_0 : i32, i32
  }
  func.func @transform_5(%arg0: i32) -> (i32, i32) {
    %c0_i32 = arith.constant 0 : i32
    %c0_i32_0 = arith.constant 0 : i32
    %c0_i32_1 = arith.constant 0 : i32
    return %c0_i32, %c0_i32_0 : i32, i32
  }
  func.func @transform_6(%arg0: i32) -> (i32, i32) {
    %c0_i32 = arith.constant 0 : i32
    %c0_i32_0 = arith.constant 0 : i32
    %c0_i32_1 = arith.constant 0 : i32
    return %c0_i32, %c0_i32_0 : i32, i32
  }
  func.func @transform_7(%arg0: i32) -> (i32, i32) {
    %c0_i32 = arith.constant 0 : i32
    %c0_i32_0 = arith.constant 0 : i32
    %c0_i32_1 = arith.constant 0 : i32
    return %c0_i32, %c0_i32_0 : i32, i32
  }
  func.func @transform_8(%arg0: i32) -> (i32, i32) {
    %c0_i32 = arith.constant 0 : i32
    %c0_i32_0 = arith.constant 0 : i32
    %c0_i32_1 = arith.constant 0 : i32
    return %c0_i32, %c0_i32_0 : i32, i32
  }
  func.func @transform_9(%arg0: i32) -> (i32, i32) {
    %c0_i32 = arith.constant 0 : i32
    %c0_i32_0 = arith.constant 0 : i32
    %c0_i32_1 = arith.constant 0 : i32
    return %c0_i32, %c0_i32_0 : i32, i32
  }
  func.func @transform_10(%arg0: i32) -> (i32, i32) {
    %c0_i32 = arith.constant 0 : i32
    %c0_i32_0 = arith.constant 0 : i32
    %c0_i32_1 = arith.constant 0 : i32
    return %c0_i32, %c0_i32_0 : i32, i32
  }
  func.func @transform_11(%arg0: i32) -> (i32, i32) {
    %c0_i32 = arith.constant 0 : i32
    %c0_i32_0 = arith.constant 0 : i32
    %c0_i32_1 = arith.constant 0 : i32
    return %c0_i32, %c0_i32_0 : i32, i32
  }
  func.func @transform_12(%arg0: i32) -> (i32, i32) {
    %c0_i32 = arith.constant 0 : i32
    %c0_i32_0 = arith.constant 0 : i32
    %c0_i32_1 = arith.constant 0 : i32
    return %c0_i32, %c0_i32_0 : i32, i32
  }
  func.func @transform_13(%arg0: i32) -> (i32, i32) {
    %c0_i32 = arith.constant 0 : i32
    %c0_i32_0 = arith.constant 0 : i32
    %c0_i32_1 = arith.constant 0 : i32
    return %c0_i32, %c0_i32_0 : i32, i32
  }
  func.func @transform_14(%arg0: i32) -> (i32, i32) {
    %c0_i32 = arith.constant 0 : i32
    %c0_i32_0 = arith.constant 0 : i32
    return %arg0, %c0_i32 : i32, i32
  }
  func.func @transform_15(%arg0: i32) -> (i32, i32) {
    %c0_i32 = arith.constant 0 : i32
    %c0_i32_0 = arith.constant 0 : i32
    return %arg0, %c0_i32 : i32, i32
  }
}

</mosaic_0001>

<llo_original>
// kernel: tpu_custom_call.1
$region0: #{tpu_custom_call.1}
  #allocation0 [shape = 'u32[]', space=smem, size = 0x4, offset = 0x4, fixed_abs, tag = 'smem constant byte address 0x4 - core index']
  #allocation1 [shape = 'u32[144,128]{1,0:T(1,128)}', space=vmem, size = 0x12000, scoped, tag = 'internal scratch']
  %s0 = inlined_call_operand.vmem [shape: f32[8,128], index: 0, kind: input, shape index: {}]
  %s1 = inlined_call_operand.vmem [shape: f32[8,128], index: 1, kind: input, shape index: {}]
  %s2 = inlined_call_operand.vmem [shape: bf16[128,1000], index: 2, kind: input, shape index: {}]
  %s3 = inlined_call_operand.vmem [shape: f32[1,1000], index: 3, kind: input, shape index: {}]
  %s4 = inlined_call_operand.vmem [shape: bf16[1000,300], index: 4, kind: input, shape index: {}]
  %s5 = inlined_call_operand.vmem [shape: f32[1,300], index: 5, kind: input, shape index: {}]
  %s6 = inlined_call_operand.vmem [shape: bf16[300,256], index: 6, kind: input, shape index: {}]
  %s7 = inlined_call_operand.vmem [shape: f32[1,256], index: 7, kind: input, shape index: {}]
  %s8 = inlined_call_operand.vmem [shape: bf16[128,300], index: 8, kind: input, shape index: {}]
  %s9 = inlined_call_operand.vmem [shape: f32[1,300], index: 9, kind: input, shape index: {}]
  %s10 = inlined_call_operand.vmem [shape: bf16[300,1000], index: 10, kind: input, shape index: {}]
  %s11 = inlined_call_operand.vmem [shape: f32[1,1000], index: 11, kind: input, shape index: {}]
  %s12 = inlined_call_operand.vmem [shape: bf16[1000,128], index: 12, kind: input, shape index: {}]
  %s13 = inlined_call_operand.vmem [shape: f32[1,128], index: 13, kind: input, shape index: {}]
  %s14 = inlined_call_operand.hbm [shape: f32[8,128], index: 14, kind: output, shape index: {0}]
  %s15 = inlined_call_operand.hbm [shape: f32[8,256], index: 15, kind: output, shape index: {1}]
  %16 = xla_tuple %s14, %s15
  %s17 = sld [smem:[#allocation0]]
  $region74: #{tpu_custom_call.1} parent=0
    _
  %s19 = ssub.s32 1, %s17
  %s20 = scalar_select 0, %s19, %s17
  $region1: #{tpu_custom_call.1} parent=0
    #allocation2 [shape = 'u8[4096]{0}', space=vmem, size = 0x1000, scoped, tag = 'output window, operand 0, single buffered']
    #allocation3 [shape = 's32[1]{0}', space=sflag, size = 0x4, scoped, tag = 'scoped memory for tpu_custom_call.1']
    #allocation4 [shape = 'u8[8192]{0}', space=vmem, size = 0x2000, scoped, tag = 'output window, operand 1, single buffered']
    #allocation5 [shape = 's32[1]{0}', space=sflag, size = 0x4, scoped, tag = 'scoped memory for tpu_custom_call.1']
    %21 = vsyncpa [#allocation3], 0
    %22 = vsyncpa [#allocation5], 0
    // Predicated region
    $region2: #{tpu_custom_call.1} parent=1 // pred_check
      _
    $region3: #{tpu_custom_call.1} parent=1 // pred_check_branch
      %24 = sbr.rel (0) target = $region5
    $region4: #{tpu_custom_call.1} parent=1 // pred_region
      _
    $region5: #{tpu_custom_call.1} parent=1 // pred_fallthru
      _
    // Predicated region
    $region6: #{tpu_custom_call.1} parent=1 // pred_check
      _
    $region7: #{tpu_custom_call.1} parent=1 // pred_check_branch
      %26 = sbr.rel (0) target = $region9
    $region8: #{tpu_custom_call.1} parent=1 // pred_region
      _
    $region9: #{tpu_custom_call.1} parent=1 // pred_fallthru
      _
    // Predicated region
    $region10: #{tpu_custom_call.1} parent=1 // pred_check
      _
    $region11: #{tpu_custom_call.1} parent=1 // pred_check_branch
      %28 = sbr.rel (0) target = $region13
    $region12: #{tpu_custom_call.1} parent=1 // pred_region
      _
    $region13: #{tpu_custom_call.1} parent=1 // pred_fallthru
      _
    // Predicated region
    $region14: #{tpu_custom_call.1} parent=1 // pred_check
      _
    $region15: #{tpu_custom_call.1} parent=1 // pred_check_branch
      %30 = sbr.rel (0) target = $region17
    $region16: #{tpu_custom_call.1} parent=1 // pred_region
      _
    $region17: #{tpu_custom_call.1} parent=1 // pred_fallthru
      _
    // Predicated region
    $region18: #{tpu_custom_call.1} parent=1 // pred_check
      _
    $region19: #{tpu_custom_call.1} parent=1 // pred_check_branch
      %32 = sbr.rel (0) target = $region21
    $region20: #{tpu_custom_call.1} parent=1 // pred_region
      _
    $region21: #{tpu_custom_call.1} parent=1 // pred_fallthru
      _
    // Predicated region
    $region22: #{tpu_custom_call.1} parent=1 // pred_check
      _
    $region23: #{tpu_custom_call.1} parent=1 // pred_check_branch
      %34 = sbr.rel (0) target = $region25
    $region24: #{tpu_custom_call.1} parent=1 // pred_region
      _
    $region25: #{tpu_custom_call.1} parent=1 // pred_fallthru
      _
    // Predicated region
    $region26: #{tpu_custom_call.1} parent=1 // pred_check
      _
    $region27: #{tpu_custom_call.1} parent=1 // pred_check_branch
      %36 = sbr.rel (0) target = $region29
    $region28: #{tpu_custom_call.1} parent=1 // pred_region
      _
    $region29: #{tpu_custom_call.1} parent=1 // pred_fallthru
      _
    // Predicated region
    $region30: #{tpu_custom_call.1} parent=1 // pred_check
      _
    $region31: #{tpu_custom_call.1} parent=1 // pred_check_branch
      %38 = sbr.rel (0) target = $region33
    $region32: #{tpu_custom_call.1} parent=1 // pred_region
      _
    $region33: #{tpu_custom_call.1} parent=1 // pred_fallthru
      _
    // Predicated region
    $region34: #{tpu_custom_call.1} parent=1 // pred_check
      _
    $region35: #{tpu_custom_call.1} parent=1 // pred_check_branch
      %40 = sbr.rel (0) target = $region37
    $region36: #{tpu_custom_call.1} parent=1 // pred_region
      _
    $region37: #{tpu_custom_call.1} parent=1 // pred_fallthru
      _
    // Predicated region
    $region38: #{tpu_custom_call.1} parent=1 // pred_check
      _
    $region39: #{tpu_custom_call.1} parent=1 // pred_check_branch
      %42 = sbr.rel (0) target = $region41
    $region40: #{tpu_custom_call.1} parent=1 // pred_region
      _
    $region41: #{tpu_custom_call.1} parent=1 // pred_fallthru
      _
    // Predicated region
    $region42: #{tpu_custom_call.1} parent=1 // pred_check
      _
    $region43: #{tpu_custom_call.1} parent=1 // pred_check_branch
      %44 = sbr.rel (0) target = $region45
    $region44: #{tpu_custom_call.1} parent=1 // pred_region
      _
    $region45: #{tpu_custom_call.1} parent=1 // pred_fallthru
      _
    // Predicated region
    $region46: #{tpu_custom_call.1} parent=1 // pred_check
      _
    $region47: #{tpu_custom_call.1} parent=1 // pred_check_branch
      %46 = sbr.rel (0) target = $region49
    $region48: #{tpu_custom_call.1} parent=1 // pred_region
      _
    $region49: #{tpu_custom_call.1} parent=1 // pred_fallthru
      _
    // Predicated region
    $region50: #{tpu_custom_call.1} parent=1 // pred_check
      _
    $region51: #{tpu_custom_call.1} parent=1 // pred_check_branch
      %48 = sbr.rel (0) target = $region53
    $region52: #{tpu_custom_call.1} parent=1 // pred_region
      _
    $region53: #{tpu_custom_call.1} parent=1 // pred_fallthru
      _
    // Predicated region
    $region54: #{tpu_custom_call.1} parent=1 // pred_check
      _
    $region55: #{tpu_custom_call.1} parent=1 // pred_check_branch
      %50 = sbr.rel (0) target = $region57
    $region56: #{tpu_custom_call.1} parent=1 // pred_region
      _
    $region57: #{tpu_custom_call.1} parent=1 // pred_fallthru
      _
    %v52 = vld [vmem:[%s0] sm:$0xff]
    %v53 = vpack.c.bf16 %v52, %v52
    %v54 = vld [vmem:[%s2] sm:$0xff]
    %v55 = vld [vmem:[%s2 + $0x8] sm:$0xff]
    %v56 = vld [vmem:[%s2 + $0x10] sm:$0xff]
    %v57 = vld [vmem:[%s2 + $0x18] sm:$0xff]
    %v58 = vld [vmem:[%s2 + $0x20] sm:$0xff]
    %v59 = vld [vmem:[%s2 + $0x28] sm:$0xff]
    %v60 = vld [vmem:[%s2 + $0x30] sm:$0xff]
    %v61 = vld [vmem:[%s2 + $0x38] sm:$0xff]
    %v62 = vld [vmem:[%s2 + $0x40] sm:$0xff]
    %v63 = vld [vmem:[%s2 + $0x48] sm:$0xff]
    %v64 = vld [vmem:[%s2 + $0x50] sm:$0xff]
    %v65 = vld [vmem:[%s2 + $0x58] sm:$0xff]
    %v66 = vld [vmem:[%s2 + $0x60] sm:$0xff]
    %v67 = vld [vmem:[%s2 + $0x68] sm:$0xff]
    %v68 = vld [vmem:[%s2 + $0x70] sm:$0xff]
    %v69 = vld [vmem:[%s2 + $0x78] sm:$0xff]
    %v70 = vld [vmem:[%s2 + $0x80] sm:$0xff]
    %v71 = vld [vmem:[%s2 + $0x88] sm:$0xff]
    %v72 = vld [vmem:[%s2 + $0x90] sm:$0xff]
    %v73 = vld [vmem:[%s2 + $0x98] sm:$0xff]
    %v74 = vld [vmem:[%s2 + $0xa0] sm:$0xff]
    %v75 = vld [vmem:[%s2 + $0xa8] sm:$0xff]
    %v76 = vld [vmem:[%s2 + $0xb0] sm:$0xff]
    %v77 = vld [vmem:[%s2 + $0xb8] sm:$0xff]
    %v78 = vld [vmem:[%s2 + $0xc0] sm:$0xff]
    %v79 = vld [vmem:[%s2 + $0xc8] sm:$0xff]
    %v80 = vld [vmem:[%s2 + $0xd0] sm:$0xff]
    %v81 = vld [vmem:[%s2 + $0xd8] sm:$0xff]
    %v82 = vld [vmem:[%s2 + $0xe0] sm:$0xff]
    %v83 = vld [vmem:[%s2 + $0xe8] sm:$0xff]
    %v84 = vld [vmem:[%s2 + $0xf0] sm:$0xff]
    %v85 = vld [vmem:[%s2 + $0xf8] sm:$0xff]
    %v86 = vld [vmem:[%s2 + $0x100] sm:$0xff]
    %v87 = vld [vmem:[%s2 + $0x108] sm:$0xff]
    %v88 = vld [vmem:[%s2 + $0x110] sm:$0xff]
    %v89 = vld [vmem:[%s2 + $0x118] sm:$0xff]
    %v90 = vld [vmem:[%s2 + $0x120] sm:$0xff]
    %v91 = vld [vmem:[%s2 + $0x128] sm:$0xff]
    %v92 = vld [vmem:[%s2 + $0x130] sm:$0xff]
    %v93 = vld [vmem:[%s2 + $0x138] sm:$0xff]
    %v94 = vld [vmem:[%s2 + $0x140] sm:$0xff]
    %v95 = vld [vmem:[%s2 + $0x148] sm:$0xff]
    %v96 = vld [vmem:[%s2 + $0x150] sm:$0xff]
    %v97 = vld [vmem:[%s2 + $0x158] sm:$0xff]
    %v98 = vld [vmem:[%s2 + $0x160] sm:$0xff]
    %v99 = vld [vmem:[%s2 + $0x168] sm:$0xff]
    %v100 = vld [vmem:[%s2 + $0x170] sm:$0xff]
    %v101 = vld [vmem:[%s2 + $0x178] sm:$0xff]
    %v102 = vld [vmem:[%s2 + $0x180] sm:$0xff]
    %v103 = vld [vmem:[%s2 + $0x188] sm:$0xff]
    %v104 = vld [vmem:[%s2 + $0x190] sm:$0xff]
    %v105 = vld [vmem:[%s2 + $0x198] sm:$0xff]
    %v106 = vld [vmem:[%s2 + $0x1a0] sm:$0xff]
    %v107 = vld [vmem:[%s2 + $0x1a8] sm:$0xff]
    %v108 = vld [vmem:[%s2 + $0x1b0] sm:$0xff]
    %v109 = vld [vmem:[%s2 + $0x1b8] sm:$0xff]
    %v110 = vld [vmem:[%s2 + $0x1c0] sm:$0xff]
    %v111 = vld [vmem:[%s2 + $0x1c8] sm:$0xff]
    %v112 = vld [vmem:[%s2 + $0x1d0] sm:$0xff]
    %v113 = vld [vmem:[%s2 + $0x1d8] sm:$0xff]
    %v114 = vld [vmem:[%s2 + $0x1e0] sm:$0xff]
    %v115 = vld [vmem:[%s2 + $0x1e8] sm:$0xff]
    %v116 = vld [vmem:[%s2 + $0x1f0] sm:$0xff]
    %v117 = vld [vmem:[%s2 + $0x1f8] sm:$0xff]
    %v118 = vld [vmem:[%s3] sm:$0xff]
    %v120 = vlaneseq
    %v121 = vshrl.u32 %v120, 7
    %v122 = vsub.s32 0, %v121
    %v123 = vrot.slane %v118, %v122
    %v124 = vlaneseq
    %v125 = vshrl.u32 %v124, 7
    %v126 = vsub.s32 1, %v125
    %v127 = vrot.slane %v118, %v126
    %v128 = vlaneseq
    %v129 = vshrl.u32 %v128, 7
    %v130 = vsub.s32 2, %v129
    %v131 = vrot.slane %v118, %v130
    %v132 = vlaneseq
    %v133 = vshrl.u32 %v132, 7
    %v134 = vsub.s32 3, %v133
    %v135 = vrot.slane %v118, %v134
    %v136 = vlaneseq
    %v137 = vshrl.u32 %v136, 7
    %v138 = vsub.s32 4, %v137
    %v139 = vrot.slane %v118, %v138
    %v140 = vlaneseq
    %v141 = vshrl.u32 %v140, 7
    %v142 = vsub.s32 5, %v141
    %v143 = vrot.slane %v118, %v142
    %v144 = vlaneseq
    %v145 = vshrl.u32 %v144, 7
    %v146 = vsub.s32 6, %v145
    %v147 = vrot.slane %v118, %v146
    %v148 = vlaneseq
    %v149 = vshrl.u32 %v148, 7
    %v150 = vsub.s32 7, %v149
    %v151 = vrot.slane %v118, %v150
    %v224 = vunpack.c.l.b16 %v54
    %v225 = vunpack.c.h.b16 %v54
    %v226 = vunpack.c.l.b16 %v55
    %v227 = vunpack.c.h.b16 %v55
    %v228 = vunpack.c.l.b16 %v56
    %v229 = vunpack.c.h.b16 %v56
    %v230 = vunpack.c.l.b16 %v57
    %v231 = vunpack.c.h.b16 %v57
    %v232 = vunpack.c.l.b16 %v58
    %v233 = vunpack.c.h.b16 %v58
    %v234 = vunpack.c.l.b16 %v59
    %v235 = vunpack.c.h.b16 %v59
    %v236 = vunpack.c.l.b16 %v60
    %v237 = vunpack.c.h.b16 %v60
    %v238 = vunpack.c.l.b16 %v61
    %v239 = vunpack.c.h.b16 %v61
    %v240 = vunpack.c.l.b16 %v62
    %v241 = vunpack.c.h.b16 %v62
    %v242 = vunpack.c.l.b16 %v63
    %v243 = vunpack.c.h.b16 %v63
    %v244 = vunpack.c.l.b16 %v64
    %v245 = vunpack.c.h.b16 %v64
    %v246 = vunpack.c.l.b16 %v65
    %v247 = vunpack.c.h.b16 %v65
    %v248 = vunpack.c.l.b16 %v66
    %v249 = vunpack.c.h.b16 %v66
    %v250 = vunpack.c.l.b16 %v67
    %v251 = vunpack.c.h.b16 %v67
    %v252 = vunpack.c.l.b16 %v68
    %v253 = vunpack.c.h.b16 %v68
    %v254 = vunpack.c.l.b16 %v69
    %v255 = vunpack.c.h.b16 %v69
    %v256 = vunpack.c.l.b16 %v70
    %v257 = vunpack.c.h.b16 %v70
    %v258 = vunpack.c.l.b16 %v71
    %v259 = vunpack.c.h.b16 %v71
    %v260 = vunpack.c.l.b16 %v72
    %v261 = vunpack.c.h.b16 %v72
    %v262 = vunpack.c.l.b16 %v73
    %v263 = vunpack.c.h.b16 %v73
    %v264 = vunpack.c.l.b16 %v74
    %v265 = vunpack.c.h.b16 %v74
    %v266 = vunpack.c.l.b16 %v75
    %v267 = vunpack.c.h.b16 %v75
    %v268 = vunpack.c.l.b16 %v76
    %v269 = vunpack.c.h.b16 %v76
    %v270 = vunpack.c.l.b16 %v77
    %v271 = vunpack.c.h.b16 %v77
    %v272 = vunpack.c.l.b16 %v78
    %v273 = vunpack.c.h.b16 %v78
    %v274 = vunpack.c.l.b16 %v79
    %v275 = vunpack.c.h.b16 %v79
    %v276 = vunpack.c.l.b16 %v80
    %v277 = vunpack.c.h.b16 %v80
    %v278 = vunpack.c.l.b16 %v81
    %v279 = vunpack.c.h.b16 %v81
    %v280 = vunpack.c.l.b16 %v82
    %v281 = vunpack.c.h.b16 %v82
    %v282 = vunpack.c.l.b16 %v83
    %v283 = vunpack.c.h.b16 %v83
    %v284 = vunpack.c.l.b16 %v84
    %v285 = vunpack.c.h.b16 %v84
    %v286 = vunpack.c.l.b16 %v85
    %v287 = vunpack.c.h.b16 %v85
    %v288 = vunpack.c.l.b16 %v86
    %v289 = vunpack.c.h.b16 %v86
    %v290 = vunpack.c.l.b16 %v87
    %v291 = vunpack.c.h.b16 %v87
    %v292 = vunpack.c.l.b16 %v88
    %v293 = vunpack.c.h.b16 %v88
    %v294 = vunpack.c.l.b16 %v89
    %v295 = vunpack.c.h.b16 %v89
    %v296 = vunpack.c.l.b16 %v90
    %v297 = vunpack.c.h.b16 %v90
    %v298 = vunpack.c.l.b16 %v91
    %v299 = vunpack.c.h.b16 %v91
    %v300 = vunpack.c.l.b16 %v92
    %v301 = vunpack.c.h.b16 %v92
    %v302 = vunpack.c.l.b16 %v93
    %v303 = vunpack.c.h.b16 %v93
    %v304 = vunpack.c.l.b16 %v94
    %v305 = vunpack.c.h.b16 %v94
    %v306 = vunpack.c.l.b16 %v95
    %v307 = vunpack.c.h.b16 %v95
    %v308 = vunpack.c.l.b16 %v96
    %v309 = vunpack.c.h.b16 %v96
    %v310 = vunpack.c.l.b16 %v97
    %v311 = vunpack.c.h.b16 %v97
    %v312 = vunpack.c.l.b16 %v98
    %v313 = vunpack.c.h.b16 %v98
    %v314 = vunpack.c.l.b16 %v99
    %v315 = vunpack.c.h.b16 %v99
    %v316 = vunpack.c.l.b16 %v100
    %v317 = vunpack.c.h.b16 %v100
    %v318 = vunpack.c.l.b16 %v101
    %v319 = vunpack.c.h.b16 %v101
    %v320 = vunpack.c.l.b16 %v102
    %v321 = vunpack.c.h.b16 %v102
    %v322 = vunpack.c.l.b16 %v103
    %v323 = vunpack.c.h.b16 %v103
    %v324 = vunpack.c.l.b16 %v104
    %v325 = vunpack.c.h.b16 %v104
    %v326 = vunpack.c.l.b16 %v105
    %v327 = vunpack.c.h.b16 %v105
    %v328 = vunpack.c.l.b16 %v106
    %v329 = vunpack.c.h.b16 %v106
    %v330 = vunpack.c.l.b16 %v107
    %v331 = vunpack.c.h.b16 %v107
    %v332 = vunpack.c.l.b16 %v108
    %v333 = vunpack.c.h.b16 %v108
    %v334 = vunpack.c.l.b16 %v109
    %v335 = vunpack.c.h.b16 %v109
    %v336 = vunpack.c.l.b16 %v110
    %v337 = vunpack.c.h.b16 %v110
    %v338 = vunpack.c.l.b16 %v111
    %v339 = vunpack.c.h.b16 %v111
    %v340 = vunpack.c.l.b16 %v112
    %v341 = vunpack.c.h.b16 %v112
    %v342 = vunpack.c.l.b16 %v113
    %v343 = vunpack.c.h.b16 %v113
    %v344 = vunpack.c.l.b16 %v114
    %v345 = vunpack.c.h.b16 %v114
    %v346 = vunpack.c.l.b16 %v115
    %v347 = vunpack.c.h.b16 %v115
    %v348 = vunpack.c.l.b16 %v116
    %v349 = vunpack.c.h.b16 %v116
    %v350 = vunpack.c.l.b16 %v117
    %v351 = vunpack.c.h.b16 %v117
    %v352 = vpack.c.b16 %v232, %v224
    %v353 = vpack.c.b16 %v233, %v225
    %v354 = vpack.c.b16 %v234, %v226
    %v355 = vpack.c.b16 %v235, %v227
    %v356 = vpack.c.b16 %v236, %v228
    %v357 = vpack.c.b16 %v237, %v229
    %v358 = vpack.c.b16 %v238, %v230
    %v359 = vpack.c.b16 %v239, %v231
    %v360 = vpack.c.b16 %v248, %v240
    %v361 = vpack.c.b16 %v249, %v241
    %v362 = vpack.c.b16 %v250, %v242
    %v363 = vpack.c.b16 %v251, %v243
    %v364 = vpack.c.b16 %v252, %v244
    %v365 = vpack.c.b16 %v253, %v245
    %v366 = vpack.c.b16 %v254, %v246
    %v367 = vpack.c.b16 %v255, %v247
    %v368 = vpack.c.b16 %v264, %v256
    %v369 = vpack.c.b16 %v265, %v257
    %v370 = vpack.c.b16 %v266, %v258
    %v371 = vpack.c.b16 %v267, %v259
    %v372 = vpack.c.b16 %v268, %v260
    %v373 = vpack.c.b16 %v269, %v261
    %v374 = vpack.c.b16 %v270, %v262
    %v375 = vpack.c.b16 %v271, %v263
    %v376 = vpack.c.b16 %v280, %v272
    %v377 = vpack.c.b16 %v281, %v273
    %v378 = vpack.c.b16 %v282, %v274
    %v379 = vpack.c.b16 %v283, %v275
    %v380 = vpack.c.b16 %v284, %v276
    %v381 = vpack.c.b16 %v285, %v277
    %v382 = vpack.c.b16 %v286, %v278
    %v383 = vpack.c.b16 %v287, %v279
    %v384 = vpack.c.b16 %v296, %v288
    %v385 = vpack.c.b16 %v297, %v289
    %v386 = vpack.c.b16 %v298, %v290
    %v387 = vpack.c.b16 %v299, %v291
    %v388 = vpack.c.b16 %v300, %v292
    %v389 = vpack.c.b16 %v301, %v293
    %v390 = vpack.c.b16 %v302, %v294
    %v391 = vpack.c.b16 %v303, %v295
    %v392 = vpack.c.b16 %v312, %v304
    %v393 = vpack.c.b16 %v313, %v305
    %v394 = vpack.c.b16 %v314, %v306
    %v395 = vpack.c.b16 %v315, %v307
    %v396 = vpack.c.b16 %v316, %v308
    %v397 = vpack.c.b16 %v317, %v309
    %v398 = vpack.c.b16 %v318, %v310
    %v399 = vpack.c.b16 %v319, %v311
    %v400 = vpack.c.b16 %v328, %v320
    %v401 = vpack.c.b16 %v329, %v321
    %v402 = vpack.c.b16 %v330, %v322
    %v403 = vpack.c.b16 %v331, %v323
    %v404 = vpack.c.b16 %v332, %v324
    %v405 = vpack.c.b16 %v333, %v325
    %v406 = vpack.c.b16 %v334, %v326
    %v407 = vpack.c.b16 %v335, %v327
    %v408 = vpack.c.b16 %v344, %v336
    %v409 = vpack.c.b16 %v345, %v337
    %v410 = vpack.c.b16 %v346, %v338
    %v411 = vpack.c.b16 %v347, %v339
    %v412 = vpack.c.b16 %v348, %v340
    %v413 = vpack.c.b16 %v349, %v341
    %v414 = vpack.c.b16 %v350, %v342
    %v415 = vpack.c.b16 %v351, %v343
    %480 = vmatprep.subr.bf16.mxu0 %v353
    %481 = vmatpush1.bf16.msra.mxu0 %v352
    %482 = vmatprep.subr.bf16.mxu0 %v361
    %483 = vmatpush1.bf16.msra.mxu0 %v360
    %484 = vmatprep.subr.bf16.mxu0 %v369
    %485 = vmatpush1.bf16.msra.mxu0 %v368
    %486 = vmatprep.subr.bf16.mxu0 %v377
    %487 = vmatpush1.bf16.msra.mxu0 %v376
    %488 = vmatprep.subr.bf16.mxu0 %v385
    %489 = vmatpush1.bf16.msra.mxu0 %v384
    %490 = vmatprep.subr.bf16.mxu0 %v393
    %491 = vmatpush1.bf16.msra.mxu0 %v392
    %492 = vmatprep.subr.bf16.mxu0 %v401
    %493 = vmatpush1.bf16.msra.mxu0 %v400
    %494 = vmatprep.subr.bf16.mxu0 %v409
    %495 = vmatpush1.bf16.msra.mxu0 %v408
    %496 = vmatprep.subr.bf16.mxu0 0
    %497 = vmatpush1.bf16.msra.mxu0 0
    %498 = vmatprep.subr.bf16.mxu0 0
    %499 = vmatpush1.bf16.msra.mxu0 0
    %500 = vmatprep.subr.bf16.mxu0 0
    %501 = vmatpush1.bf16.msra.mxu0 0
    %502 = vmatprep.subr.bf16.mxu0 0
    %503 = vmatpush1.bf16.msra.mxu0 0
    %504 = vmatprep.subr.bf16.mxu0 0
    %505 = vmatpush1.bf16.msra.mxu0 0
    %506 = vmatprep.subr.bf16.mxu0 0
    %507 = vmatpush1.bf16.msra.mxu0 0
    %508 = vmatprep.subr.bf16.mxu0 0
    %509 = vmatpush1.bf16.msra.mxu0 0
    %510 = vmatprep.subr.bf16.mxu0 0
    %511 = vmatpush1.bf16.msra.mxu0 0
    %512 = vmatprep.mubr.bf16.mxu0 0
    %513 = vmatmul.mubr.bf16.gmra.mrb[0].mxu0 %v53
    %v514 = vpop.f32.mrb[0].mxu0
    %v515 = vadd.f32 %v123, %v514
    %v516 = vpop.f32.mrb[0].mxu0
    %v517 = vadd.f32 %v127, %v516
    %v518 = vpop.f32.mrb[0].mxu0
    %v519 = vpop.f32.mrb[0].mxu0
    %520 = vdwg.mxu0
    %521 = vmatprep.subr.bf16.mxu0 %v355
    %522 = vmatpush1.bf16.msra.mxu0 %v354
    %523 = vmatprep.subr.bf16.mxu0 %v363
    %524 = vmatpush1.bf16.msra.mxu0 %v362
    %525 = vmatprep.subr.bf16.mxu0 %v371
    %526 = vmatpush1.bf16.msra.mxu0 %v370
    %527 = vmatprep.subr.bf16.mxu0 %v379
    %528 = vmatpush1.bf16.msra.mxu0 %v378
    %529 = vmatprep.subr.bf16.mxu0 %v387
    %530 = vmatpush1.bf16.msra.mxu0 %v386
    %531 = vmatprep.subr.bf16.mxu0 %v395
    %532 = vmatpush1.bf16.msra.mxu0 %v394
    %533 = vmatprep.subr.bf16.mxu0 %v403
    %534 = vmatpush1.bf16.msra.mxu0 %v402
    %535 = vmatprep.subr.bf16.mxu0 %v411
    %536 = vmatpush1.bf16.msra.mxu0 %v410
    %537 = vmatprep.subr.bf16.mxu0 0
    %538 = vmatpush1.bf16.msra.mxu0 0
    %539 = vmatprep.subr.bf16.mxu0 0
    %540 = vmatpush1.bf16.msra.mxu0 0
    %541 = vmatprep.subr.bf16.mxu0 0
    %542 = vmatpush1.bf16.msra.mxu0 0
    %543 = vmatprep.subr.bf16.mxu0 0
    %544 = vmatpush1.bf16.msra.mxu0 0
    %545 = vmatprep.subr.bf16.mxu0 0
    %546 = vmatpush1.bf16.msra.mxu0 0
    %547 = vmatprep.subr.bf16.mxu0 0
    %548 = vmatpush1.bf16.msra.mxu0 0
    %549 = vmatprep.subr.bf16.mxu0 0
    %550 = vmatpush1.bf16.msra.mxu0 0
    %551 = vmatprep.subr.bf16.mxu0 0
    %552 = vmatpush1.bf16.msra.mxu0 0
    %553 = vmatprep.mubr.bf16.mxu0 0
    %554 = vmatmul.mubr.bf16.gmra.mrb[0].mxu0 %v53
    %v555 = vpop.f32.mrb[0].mxu0
    %v556 = vadd.f32 %v131, %v555
    %v557 = vpop.f32.mrb[0].mxu0
    %v558 = vadd.f32 %v135, %v557
    %v559 = vpop.f32.mrb[0].mxu0
    %v560 = vpop.f32.mrb[0].mxu0
    %561 = vdwg.mxu0
    %562 = vmatprep.subr.bf16.mxu0 %v357
    %563 = vmatpush1.bf16.msra.mxu0 %v356
    %564 = vmatprep.subr.bf16.mxu0 %v365
    %565 = vmatpush1.bf16.msra.mxu0 %v364
    %566 = vmatprep.subr.bf16.mxu0 %v373
    %567 = vmatpush1.bf16.msra.mxu0 %v372
    %568 = vmatprep.subr.bf16.mxu0 %v381
    %569 = vmatpush1.bf16.msra.mxu0 %v380
    %570 = vmatprep.subr.bf16.mxu0 %v389
    %571 = vmatpush1.bf16.msra.mxu0 %v388
    %572 = vmatprep.subr.bf16.mxu0 %v397
    %573 = vmatpush1.bf16.msra.mxu0 %v396
    %574 = vmatprep.subr.bf16.mxu0 %v405
    %575 = vmatpush1.bf16.msra.mxu0 %v404
    %576 = vmatprep.subr.bf16.mxu0 %v413
    %577 = vmatpush1.bf16.msra.mxu0 %v412
    %578 = vmatprep.subr.bf16.mxu0 0
    %579 = vmatpush1.bf16.msra.mxu0 0
    %580 = vmatprep.subr.bf16.mxu0 0
    %581 = vmatpush1.bf16.msra.mxu0 0
    %582 = vmatprep.subr.bf16.mxu0 0
    %583 = vmatpush1.bf16.msra.mxu0 0
    %584 = vmatprep.subr.bf16.mxu0 0
    %585 = vmatpush1.bf16.msra.mxu0 0
    %586 = vmatprep.subr.bf16.mxu0 0
    %587 = vmatpush1.bf16.msra.mxu0 0
    %588 = vmatprep.subr.bf16.mxu0 0
    %589 = vmatpush1.bf16.msra.mxu0 0
    %590 = vmatprep.subr.bf16.mxu0 0
    %591 = vmatpush1.bf16.msra.mxu0 0
    %592 = vmatprep.subr.bf16.mxu0 0
    %593 = vmatpush1.bf16.msra.mxu0 0
    %594 = vmatprep.mubr.bf16.mxu0 0
    %595 = vmatmul.mubr.bf16.gmra.mrb[0].mxu0 %v53
    %v596 = vpop.f32.mrb[0].mxu0
    %v597 = vadd.f32 %v139, %v596
    %v598 = vpop.f32.mrb[0].mxu0
    %v599 = vadd.f32 %v143, %v598
    %v600 = vpop.f32.mrb[0].mxu0
    %v601 = vpop.f32.mrb[0].mxu0
    %602 = vdwg.mxu0
    %603 = vmatprep.subr.bf16.mxu0 %v359
    %604 = vmatpush1.bf16.msra.mxu0 %v358
    %605 = vmatprep.subr.bf16.mxu0 %v367
    %606 = vmatpush1.bf16.msra.mxu0 %v366
    %607 = vmatprep.subr.bf16.mxu0 %v375
    %608 = vmatpush1.bf16.msra.mxu0 %v374
    %609 = vmatprep.subr.bf16.mxu0 %v383
    %610 = vmatpush1.bf16.msra.mxu0 %v382
    %611 = vmatprep.subr.bf16.mxu0 %v391
    %612 = vmatpush1.bf16.msra.mxu0 %v390
    %613 = vmatprep.subr.bf16.mxu0 %v399
    %614 = vmatpush1.bf16.msra.mxu0 %v398
    %615 = vmatprep.subr.bf16.mxu0 %v407
    %616 = vmatpush1.bf16.msra.mxu0 %v406
    %617 = vmatprep.subr.bf16.mxu0 %v415
    %618 = vmatpush1.bf16.msra.mxu0 %v414
    %619 = vmatprep.subr.bf16.mxu0 0
    %620 = vmatpush1.bf16.msra.mxu0 0
    %621 = vmatprep.subr.bf16.mxu0 0
    %622 = vmatpush1.bf16.msra.mxu0 0
    %623 = vmatprep.subr.bf16.mxu0 0
    %624 = vmatpush1.bf16.msra.mxu0 0
    %625 = vmatprep.subr.bf16.mxu0 0
    %626 = vmatpush1.bf16.msra.mxu0 0
    %627 = vmatprep.subr.bf16.mxu0 0
    %628 = vmatpush1.bf16.msra.mxu0 0
    %629 = vmatprep.subr.bf16.mxu0 0
    %630 = vmatpush1.bf16.msra.mxu0 0
    %631 = vmatprep.subr.bf16.mxu0 0
    %632 = vmatpush1.bf16.msra.mxu0 0
    %633 = vmatprep.subr.bf16.mxu0 0
    %634 = vmatpush1.bf16.msra.mxu0 0
    %635 = vmatprep.mubr.bf16.mxu0 0
    %636 = vmatmul.mubr.bf16.gmra.mrb[0].mxu0 %v53
    %v637 = vpop.f32.mrb[0].mxu0
    %v638 = vadd.f32 %v147, %v637
    %v639 = vpop.f32.mrb[0].mxu0
    %v640 = vadd.f32 %v151, %v639
    %v641 = vpop.f32.mrb[0].mxu0
    %v642 = vpop.f32.mrb[0].mxu0
    %643 = vdwg.mxu0
    %v644 = vmul.f32 %v515, 0.01
    %v645 = vmul.f32 %v517, 0.01
    %v646 = vmul.f32 %v556, 0.01
    %v647 = vmul.f32 %v558, 0.01
    %v648 = vmul.f32 %v597, 0.01
    %v649 = vmul.f32 %v599, 0.01
    %v650 = vmul.f32 %v638, 0.01
    %v651 = vmul.f32 %v640, 0.01
    %v652 = vmax.f32 %v515, %v644
    %v653 = vmax.f32 %v517, %v645
    %v654 = vmax.f32 %v556, %v646
    %v655 = vmax.f32 %v558, %v647
    %v656 = vmax.f32 %v597, %v648
    %v657 = vmax.f32 %v599, %v649
    %v658 = vmax.f32 %v638, %v650
    %v659 = vmax.f32 %v640, %v651
    %v660 = vpack.c.bf16 %v652, %v652
    %v661 = vpack.c.bf16 %v653, %v653
    %v662 = vpack.c.bf16 %v654, %v654
    %v663 = vpack.c.bf16 %v655, %v655
    %v664 = vpack.c.bf16 %v656, %v656
    %v665 = vpack.c.bf16 %v657, %v657
    %v666 = vpack.c.bf16 %v658, %v658
    %v667 = vpack.c.bf16 %v659, %v659
    %v668 = vld [vmem:[%s4] sm:$0xff]
    %v669 = vld [vmem:[%s4 + $0x8] sm:$0xf]
    %v670 = vld [vmem:[%s4 + $0xc] sm:$0xff]
    %v671 = vld [vmem:[%s4 + $0x14] sm:$0xf]
    %v672 = vld [vmem:[%s4 + $0x18] sm:$0xff]
    %v673 = vld [vmem:[%s4 + $0x20] sm:$0xf]
    %v674 = vld [vmem:[%s4 + $0x24] sm:$0xff]
    %v675 = vld [vmem:[%s4 + $0x2c] sm:$0xf]
    %v676 = vld [vmem:[%s4 + $0x30] sm:$0xff]
    %v677 = vld [vmem:[%s4 + $0x38] sm:$0xf]
    %v678 = vld [vmem:[%s4 + $0x3c] sm:$0xff]
    %v679 = vld [vmem:[%s4 + $0x44] sm:$0xf]
    %v680 = vld [vmem:[%s4 + $0x48] sm:$0xff]
    %v681 = vld [vmem:[%s4 + $0x50] sm:$0xf]
    %v682 = vld [vmem:[%s4 + $0x54] sm:$0xff]
    %v683 = vld [vmem:[%s4 + $0x5c] sm:$0xf]
    %v684 = vld [vmem:[%s4 + $0x60] sm:$0xff]
    %v685 = vld [vmem:[%s4 + $0x68] sm:$0xf]
    %v686 = vld [vmem:[%s4 + $0x6c] sm:$0xff]
    %v687 = vld [vmem:[%s4 + $0x74] sm:$0xf]
    %v688 = vld [vmem:[%s4 + $0x78] sm:$0xff]
    %v689 = vld [vmem:[%s4 + $0x80] sm:$0xf]
    %v690 = vld [vmem:[%s4 + $0x84] sm:$0xff]
    %v691 = vld [vmem:[%s4 + $0x8c] sm:$0xf]
    %v692 = vld [vmem:[%s4 + $0x90] sm:$0xff]
    %v693 = vld [vmem:[%s4 + $0x98] sm:$0xf]
    %v694 = vld [vmem:[%s4 + $0x9c] sm:$0xff]
    %v695 = vld [vmem:[%s4 + $0xa4] sm:$0xf]
    %v696 = vld [vmem:[%s4 + $0xa8] sm:$0xff]
    %v697 = vld [vmem:[%s4 + $0xb0] sm:$0xf]
    %v698 = vld [vmem:[%s4 + $0xb4] sm:$0xff]
    %v699 = vld [vmem:[%s4 + $0xbc] sm:$0xf]
    %v700 = vld [vmem:[%s4 + $0xc0] sm:$0xff]
    %v701 = vld [vmem:[%s4 + $0xc8] sm:$0xf]
    %v702 = vld [vmem:[%s4 + $0xcc] sm:$0xff]
    %v703 = vld [vmem:[%s4 + $0xd4] sm:$0xf]
    %v704 = vld [vmem:[%s4 + $0xd8] sm:$0xff]
    %v705 = vld [vmem:[%s4 + $0xe0] sm:$0xf]
    %v706 = vld [vmem:[%s4 + $0xe4] sm:$0xff]
    %v707 = vld [vmem:[%s4 + $0xec] sm:$0xf]
    %v708 = vld [vmem:[%s4 + $0xf0] sm:$0xff]
    %v709 = vld [vmem:[%s4 + $0xf8] sm:$0xf]
    %v710 = vld [vmem:[%s4 + $0xfc] sm:$0xff]
    %v711 = vld [vmem:[%s4 + $0x104] sm:$0xf]
    %v712 = vld [vmem:[%s4 + $0x108] sm:$0xff]
    %v713 = vld [vmem:[%s4 + $0x110] sm:$0xf]
    %v714 = vld [vmem:[%s4 + $0x114] sm:$0xff]
    %v715 = vld [vmem:[%s4 + $0x11c] sm:$0xf]
    %v716 = vld [vmem:[%s4 + $0x120] sm:$0xff]
    %v717 = vld [vmem:[%s4 + $0x128] sm:$0xf]
    %v718 = vld [vmem:[%s4 + $0x12c] sm:$0xff]
    %v719 = vld [vmem:[%s4 + $0x134] sm:$0xf]
    %v720 = vld [vmem:[%s4 + $0x138] sm:$0xff]
    %v721 = vld [vmem:[%s4 + $0x140] sm:$0xf]
    %v722 = vld [vmem:[%s4 + $0x144] sm:$0xff]
    %v723 = vld [vmem:[%s4 + $0x14c] sm:$0xf]
    %v724 = vld [vmem:[%s4 + $0x150] sm:$0xff]
    %v725 = vld [vmem:[%s4 + $0x158] sm:$0xf]
    %v726 = vld [vmem:[%s4 + $0x15c] sm:$0xff]
    %v727 = vld [vmem:[%s4 + $0x164] sm:$0xf]
    %v728 = vld [vmem:[%s4 + $0x168] sm:$0xff]
    %v729 = vld [vmem:[%s4 + $0x170] sm:$0xf]
    %v730 = vld [vmem:[%s4 + $0x174] sm:$0xff]
    %v731 = vld [vmem:[%s4 + $0x17c] sm:$0xf]
    %v732 = vld [vmem:[%s4 + $0x180] sm:$0xff]
    %v733 = vld [vmem:[%s4 + $0x188] sm:$0xf]
    %v734 = vld [vmem:[%s4 + $0x18c] sm:$0xff]
    %v735 = vld [vmem:[%s4 + $0x194] sm:$0xf]
    %v736 = vld [vmem:[%s4 + $0x198] sm:$0xff]
    %v737 = vld [vmem:[%s4 + $0x1a0] sm:$0xf]
    %v738 = vld [vmem:[%s4 + $0x1a4] sm:$0xff]
    %v739 = vld [vmem:[%s4 + $0x1ac] sm:$0xf]
    %v740 = vld [vmem:[%s4 + $0x1b0] sm:$0xff]
    %v741 = vld [vmem:[%s4 + $0x1b8] sm:$0xf]
    %v742 = vld [vmem:[%s4 + $0x1bc] sm:$0xff]
    %v743 = vld [vmem:[%s4 + $0x1c4] sm:$0xf]
    %v744 = vld [vmem:[%s4 + $0x1c8] sm:$0xff]
    %v745 = vld [vmem:[%s4 + $0x1d0] sm:$0xf]
    %v746 = vld [vmem:[%s4 + $0x1d4] sm:$0xff]
    %v747 = vld [vmem:[%s4 + $0x1dc] sm:$0xf]
    %v748 = vld [vmem:[%s4 + $0x1e0] sm:$0xff]
    %v749 = vld [vmem:[%s4 + $0x1e8] sm:$0xf]
    %v750 = vld [vmem:[%s4 + $0x1ec] sm:$0xff]
    %v751 = vld [vmem:[%s4 + $0x1f4] sm:$0xf]
    %v752 = vld [vmem:[%s4 + $0x1f8] sm:$0xff]
    %v753 = vld [vmem:[%s4 + $0x200] sm:$0xf]
    %v754 = vld [vmem:[%s4 + $0x204] sm:$0xff]
    %v755 = vld [vmem:[%s4 + $0x20c] sm:$0xf]
    %v756 = vld [vmem:[%s4 + $0x210] sm:$0xff]
    %v757 = vld [vmem:[%s4 + $0x218] sm:$0xf]
    %v758 = vld [vmem:[%s4 + $0x21c] sm:$0xff]
    %v759 = vld [vmem:[%s4 + $0x224] sm:$0xf]
    %v760 = vld [vmem:[%s4 + $0x228] sm:$0xff]
    %v761 = vld [vmem:[%s4 + $0x230] sm:$0xf]
    %v762 = vld [vmem:[%s4 + $0x234] sm:$0xff]
    %v763 = vld [vmem:[%s4 + $0x23c] sm:$0xf]
    %v764 = vld [vmem:[%s4 + $0x240] sm:$0xff]
    %v765 = vld [vmem:[%s4 + $0x248] sm:$0xf]
    %v766 = vld [vmem:[%s4 + $0x24c] sm:$0xff]
    %v767 = vld [vmem:[%s4 + $0x254] sm:$0xf]
    %v768 = vld [vmem:[%s4 + $0x258] sm:$0xff]
    %v769 = vld [vmem:[%s4 + $0x260] sm:$0xf]
    %v770 = vld [vmem:[%s4 + $0x264] sm:$0xff]
    %v771 = vld [vmem:[%s4 + $0x26c] sm:$0xf]
    %v772 = vld [vmem:[%s4 + $0x270] sm:$0xff]
    %v773 = vld [vmem:[%s4 + $0x278] sm:$0xf]
    %v774 = vld [vmem:[%s4 + $0x27c] sm:$0xff]
    %v775 = vld [vmem:[%s4 + $0x284] sm:$0xf]
    %v776 = vld [vmem:[%s4 + $0x288] sm:$0xff]
    %v777 = vld [vmem:[%s4 + $0x290] sm:$0xf]
    %v778 = vld [vmem:[%s4 + $0x294] sm:$0xff]
    %v779 = vld [vmem:[%s4 + $0x29c] sm:$0xf]
    %v780 = vld [vmem:[%s4 + $0x2a0] sm:$0xff]
    %v781 = vld [vmem:[%s4 + $0x2a8] sm:$0xf]
    %v782 = vld [vmem:[%s4 + $0x2ac] sm:$0xff]
    %v783 = vld [vmem:[%s4 + $0x2b4] sm:$0xf]
    %v784 = vld [vmem:[%s4 + $0x2b8] sm:$0xff]
    %v785 = vld [vmem:[%s4 + $0x2c0] sm:$0xf]
    %v786 = vld [vmem:[%s4 + $0x2c4] sm:$0xff]
    %v787 = vld [vmem:[%s4 + $0x2cc] sm:$0xf]
    %v788 = vld [vmem:[%s4 + $0x2d0] sm:$0xff]
    %v789 = vld [vmem:[%s4 + $0x2d8] sm:$0xf]
    %v790 = vld [vmem:[%s4 + $0x2dc] sm:$0xff]
    %v791 = vld [vmem:[%s4 + $0x2e4] sm:$0xf]
    %v792 = vld [vmem:[%s4 + $0x2e8] sm:$0xff]
    %v793 = vld [vmem:[%s4 + $0x2f0] sm:$0xf]
    %v794 = vld [vmem:[%s4 + $0x2f4] sm:$0xff]
    %v795 = vld [vmem:[%s4 + $0x2fc] sm:$0xf]
    %v796 = vld [vmem:[%s4 + $0x300] sm:$0xff]
    %v797 = vld [vmem:[%s4 + $0x308] sm:$0xf]
    %v798 = vld [vmem:[%s4 + $0x30c] sm:$0xff]
    %v799 = vld [vmem:[%s4 + $0x314] sm:$0xf]
    %v800 = vld [vmem:[%s4 + $0x318] sm:$0xff]
    %v801 = vld [vmem:[%s4 + $0x320] sm:$0xf]
    %v802 = vld [vmem:[%s4 + $0x324] sm:$0xff]
    %v803 = vld [vmem:[%s4 + $0x32c] sm:$0xf]
    %v804 = vld [vmem:[%s4 + $0x330] sm:$0xff]
    %v805 = vld [vmem:[%s4 + $0x338] sm:$0xf]
    %v806 = vld [vmem:[%s4 + $0x33c] sm:$0xff]
    %v807 = vld [vmem:[%s4 + $0x344] sm:$0xf]
    %v808 = vld [vmem:[%s4 + $0x348] sm:$0xff]
    %v809 = vld [vmem:[%s4 + $0x350] sm:$0xf]
    %v810 = vld [vmem:[%s4 + $0x354] sm:$0xff]
    %v811 = vld [vmem:[%s4 + $0x35c] sm:$0xf]
    %v812 = vld [vmem:[%s4 + $0x360] sm:$0xff]
    %v813 = vld [vmem:[%s4 + $0x368] sm:$0xf]
    %v814 = vld [vmem:[%s4 + $0x36c] sm:$0xff]
    %v815 = vld [vmem:[%s4 + $0x374] sm:$0xf]
    %v816 = vld [vmem:[%s4 + $0x378] sm:$0xff]
    %v817 = vld [vmem:[%s4 + $0x380] sm:$0xf]
    %v818 = vld [vmem:[%s4 + $0x384] sm:$0xff]
    %v819 = vld [vmem:[%s4 + $0x38c] sm:$0xf]
    %v820 = vld [vmem:[%s4 + $0x390] sm:$0xff]
    %v821 = vld [vmem:[%s4 + $0x398] sm:$0xf]
    %v822 = vld [vmem:[%s4 + $0x39c] sm:$0xff]
    %v823 = vld [vmem:[%s4 + $0x3a4] sm:$0xf]
    %v824 = vld [vmem:[%s4 + $0x3a8] sm:$0xff]
    %v825 = vld [vmem:[%s4 + $0x3b0] sm:$0xf]
    %v826 = vld [vmem:[%s4 + $0x3b4] sm:$0xff]
    %v827 = vld [vmem:[%s4 + $0x3bc] sm:$0xf]
    %v828 = vld [vmem:[%s4 + $0x3c0] sm:$0xff]
    %v829 = vld [vmem:[%s4 + $0x3c8] sm:$0xf]
    %v830 = vld [vmem:[%s4 + $0x3cc] sm:$0xff]
    %v831 = vld [vmem:[%s4 + $0x3d4] sm:$0xf]
    %v832 = vld [vmem:[%s4 + $0x3d8] sm:$0xff]
    %v833 = vld [vmem:[%s4 + $0x3e0] sm:$0xf]
    %v834 = vld [vmem:[%s4 + $0x3e4] sm:$0xff]
    %v835 = vld [vmem:[%s4 + $0x3ec] sm:$0xf]
    %v836 = vld [vmem:[%s4 + $0x3f0] sm:$0xff]
    %v837 = vld [vmem:[%s4 + $0x3f8] sm:$0xf]
    %v838 = vld [vmem:[%s4 + $0x3fc] sm:$0xff]
    %v839 = vld [vmem:[%s4 + $0x404] sm:$0xf]
    %v840 = vld [vmem:[%s4 + $0x408] sm:$0xff]
    %v841 = vld [vmem:[%s4 + $0x410] sm:$0xf]
    %v842 = vld [vmem:[%s4 + $0x414] sm:$0xff]
    %v843 = vld [vmem:[%s4 + $0x41c] sm:$0xf]
    %v844 = vld [vmem:[%s4 + $0x420] sm:$0xff]
    %v845 = vld [vmem:[%s4 + $0x428] sm:$0xf]
    %v846 = vld [vmem:[%s4 + $0x42c] sm:$0xff]
    %v847 = vld [vmem:[%s4 + $0x434] sm:$0xf]
    %v848 = vld [vmem:[%s4 + $0x438] sm:$0xff]
    %v849 = vld [vmem:[%s4 + $0x440] sm:$0xf]
    %v850 = vld [vmem:[%s4 + $0x444] sm:$0xff]
    %v851 = vld [vmem:[%s4 + $0x44c] sm:$0xf]
    %v852 = vld [vmem:[%s4 + $0x450] sm:$0xff]
    %v853 = vld [vmem:[%s4 + $0x458] sm:$0xf]
    %v854 = vld [vmem:[%s4 + $0x45c] sm:$0xff]
    %v855 = vld [vmem:[%s4 + $0x464] sm:$0xf]
    %v856 = vld [vmem:[%s4 + $0x468] sm:$0xff]
    %v857 = vld [vmem:[%s4 + $0x470] sm:$0xf]
    %v858 = vld [vmem:[%s4 + $0x474] sm:$0xff]
    %v859 = vld [vmem:[%s4 + $0x47c] sm:$0xf]
    %v860 = vld [vmem:[%s4 + $0x480] sm:$0xff]
    %v861 = vld [vmem:[%s4 + $0x488] sm:$0xf]
    %v862 = vld [vmem:[%s4 + $0x48c] sm:$0xff]
    %v863 = vld [vmem:[%s4 + $0x494] sm:$0xf]
    %v864 = vld [vmem:[%s4 + $0x498] sm:$0xff]
    %v865 = vld [vmem:[%s4 + $0x4a0] sm:$0xf]
    %v866 = vld [vmem:[%s4 + $0x4a4] sm:$0xff]
    %v867 = vld [vmem:[%s4 + $0x4ac] sm:$0xf]
    %v868 = vld [vmem:[%s4 + $0x4b0] sm:$0xff]
    %v869 = vld [vmem:[%s4 + $0x4b8] sm:$0xf]
    %v870 = vld [vmem:[%s4 + $0x4bc] sm:$0xff]
    %v871 = vld [vmem:[%s4 + $0x4c4] sm:$0xf]
    %v872 = vld [vmem:[%s4 + $0x4c8] sm:$0xff]
    %v873 = vld [vmem:[%s4 + $0x4d0] sm:$0xf]
    %v874 = vld [vmem:[%s4 + $0x4d4] sm:$0xff]
    %v875 = vld [vmem:[%s4 + $0x4dc] sm:$0xf]
    %v876 = vld [vmem:[%s4 + $0x4e0] sm:$0xff]
    %v877 = vld [vmem:[%s4 + $0x4e8] sm:$0xf]
    %v878 = vld [vmem:[%s4 + $0x4ec] sm:$0xff]
    %v879 = vld [vmem:[%s4 + $0x4f4] sm:$0xf]
    %v880 = vld [vmem:[%s4 + $0x4f8] sm:$0xff]
    %v881 = vld [vmem:[%s4 + $0x500] sm:$0xf]
    %v882 = vld [vmem:[%s4 + $0x504] sm:$0xff]
    %v883 = vld [vmem:[%s4 + $0x50c] sm:$0xf]
    %v884 = vld [vmem:[%s4 + $0x510] sm:$0xff]
    %v885 = vld [vmem:[%s4 + $0x518] sm:$0xf]
    %v886 = vld [vmem:[%s4 + $0x51c] sm:$0xff]
    %v887 = vld [vmem:[%s4 + $0x524] sm:$0xf]
    %v888 = vld [vmem:[%s4 + $0x528] sm:$0xff]
    %v889 = vld [vmem:[%s4 + $0x530] sm:$0xf]
    %v890 = vld [vmem:[%s4 + $0x534] sm:$0xff]
    %v891 = vld [vmem:[%s4 + $0x53c] sm:$0xf]
    %v892 = vld [vmem:[%s4 + $0x540] sm:$0xff]
    %v893 = vld [vmem:[%s4 + $0x548] sm:$0xf]
    %v894 = vld [vmem:[%s4 + $0x54c] sm:$0xff]
    %v895 = vld [vmem:[%s4 + $0x554] sm:$0xf]
    %v896 = vld [vmem:[%s4 + $0x558] sm:$0xff]
    %v897 = vld [vmem:[%s4 + $0x560] sm:$0xf]
    %v898 = vld [vmem:[%s4 + $0x564] sm:$0xff]
    %v899 = vld [vmem:[%s4 + $0x56c] sm:$0xf]
    %v900 = vld [vmem:[%s4 + $0x570] sm:$0xff]
    %v901 = vld [vmem:[%s4 + $0x578] sm:$0xf]
    %v902 = vld [vmem:[%s4 + $0x57c] sm:$0xff]
    %v903 = vld [vmem:[%s4 + $0x584] sm:$0xf]
    %v904 = vld [vmem:[%s4 + $0x588] sm:$0xff]
    %v905 = vld [vmem:[%s4 + $0x590] sm:$0xf]
    %v906 = vld [vmem:[%s4 + $0x594] sm:$0xff]
    %v907 = vld [vmem:[%s4 + $0x59c] sm:$0xf]
    %v908 = vld [vmem:[%s4 + $0x5a0] sm:$0xff]
    %v909 = vld [vmem:[%s4 + $0x5a8] sm:$0xf]
    %v910 = vld [vmem:[%s4 + $0x5ac] sm:$0xff]
    %v911 = vld [vmem:[%s4 + $0x5b4] sm:$0xf]
    %v912 = vld [vmem:[%s4 + $0x5b8] sm:$0xff]
    %v913 = vld [vmem:[%s4 + $0x5c0] sm:$0xf]
    %v914 = vld [vmem:[%s4 + $0x5c4] sm:$0xff]
    %v915 = vld [vmem:[%s4 + $0x5cc] sm:$0xf]
    %v916 = vld [vmem:[%s4 + $0x5d0] sm:$0xff]
    %v917 = vld [vmem:[%s4 + $0x5d8] sm:$0xf]
    %v918 = vld [vmem:[%s5] sm:$0x7]
    %v920 = vlaneseq
    %v921 = vshrl.u32 %v920, 7
    %v922 = vsub.s32 0, %v921
    %v923 = vrot.slane %v918, %v922
    %v924 = vlaneseq
    %v925 = vshrl.u32 %v924, 7
    %v926 = vsub.s32 1, %v925
    %v927 = vrot.slane %v918, %v926
    %v928 = vlaneseq
    %v929 = vshrl.u32 %v928, 7
    %v930 = vsub.s32 2, %v929
    %v931 = vrot.slane %v918, %v930
    %v1185 = vunpack.c.l.b16 %v668
    %v1186 = vunpack.c.h.b16 %v668
    %v1187 = vunpack.c.l.b16 %v669
    %v1188 = vunpack.c.l.b16 %v670
    %v1189 = vunpack.c.h.b16 %v670
    %v1190 = vunpack.c.l.b16 %v671
    %v1191 = vunpack.c.l.b16 %v672
    %v1192 = vunpack.c.h.b16 %v672
    %v1193 = vunpack.c.l.b16 %v673
    %v1194 = vunpack.c.l.b16 %v674
    %v1195 = vunpack.c.h.b16 %v674
    %v1196 = vunpack.c.l.b16 %v675
    %v1197 = vunpack.c.l.b16 %v676
    %v1198 = vunpack.c.h.b16 %v676
    %v1199 = vunpack.c.l.b16 %v677
    %v1200 = vunpack.c.l.b16 %v678
    %v1201 = vunpack.c.h.b16 %v678
    %v1202 = vunpack.c.l.b16 %v679
    %v1203 = vunpack.c.l.b16 %v680
    %v1204 = vunpack.c.h.b16 %v680
    %v1205 = vunpack.c.l.b16 %v681
    %v1206 = vunpack.c.l.b16 %v682
    %v1207 = vunpack.c.h.b16 %v682
    %v1208 = vunpack.c.l.b16 %v683
    %v1209 = vunpack.c.l.b16 %v684
    %v1210 = vunpack.c.h.b16 %v684
    %v1211 = vunpack.c.l.b16 %v685
    %v1212 = vunpack.c.l.b16 %v686
    %v1213 = vunpack.c.h.b16 %v686
    %v1214 = vunpack.c.l.b16 %v687
    %v1215 = vunpack.c.l.b16 %v688
    %v1216 = vunpack.c.h.b16 %v688
    %v1217 = vunpack.c.l.b16 %v689
    %v1218 = vunpack.c.l.b16 %v690
    %v1219 = vunpack.c.h.b16 %v690
    %v1220 = vunpack.c.l.b16 %v691
    %v1221 = vunpack.c.l.b16 %v692
    %v1222 = vunpack.c.h.b16 %v692
    %v1223 = vunpack.c.l.b16 %v693
    %v1224 = vunpack.c.l.b16 %v694
    %v1225 = vunpack.c.h.b16 %v694
    %v1226 = vunpack.c.l.b16 %v695
    %v1227 = vunpack.c.l.b16 %v696
    %v1228 = vunpack.c.h.b16 %v696
    %v1229 = vunpack.c.l.b16 %v697
    %v1230 = vunpack.c.l.b16 %v698
    %v1231 = vunpack.c.h.b16 %v698
    %v1232 = vunpack.c.l.b16 %v699
    %v1233 = vunpack.c.l.b16 %v700
    %v1234 = vunpack.c.h.b16 %v700
    %v1235 = vunpack.c.l.b16 %v701
    %v1236 = vunpack.c.l.b16 %v702
    %v1237 = vunpack.c.h.b16 %v702
    %v1238 = vunpack.c.l.b16 %v703
    %v1239 = vunpack.c.l.b16 %v704
    %v1240 = vunpack.c.h.b16 %v704
    %v1241 = vunpack.c.l.b16 %v705
    %v1242 = vunpack.c.l.b16 %v706
    %v1243 = vunpack.c.h.b16 %v706
    %v1244 = vunpack.c.l.b16 %v707
    %v1245 = vunpack.c.l.b16 %v708
    %v1246 = vunpack.c.h.b16 %v708
    %v1247 = vunpack.c.l.b16 %v709
    %v1248 = vunpack.c.l.b16 %v710
    %v1249 = vunpack.c.h.b16 %v710
    %v1250 = vunpack.c.l.b16 %v711
    %v1251 = vunpack.c.l.b16 %v712
    %v1252 = vunpack.c.h.b16 %v712
    %v1253 = vunpack.c.l.b16 %v713
    %v1254 = vunpack.c.l.b16 %v714
    %v1255 = vunpack.c.h.b16 %v714
    %v1256 = vunpack.c.l.b16 %v715
    %v1257 = vunpack.c.l.b16 %v716
    %v1258 = vunpack.c.h.b16 %v716
    %v1259 = vunpack.c.l.b16 %v717
    %v1260 = vunpack.c.l.b16 %v718
    %v1261 = vunpack.c.h.b16 %v718
    %v1262 = vunpack.c.l.b16 %v719
    %v1263 = vunpack.c.l.b16 %v720
    %v1264 = vunpack.c.h.b16 %v720
    %v1265 = vunpack.c.l.b16 %v721
    %v1266 = vunpack.c.l.b16 %v722
    %v1267 = vunpack.c.h.b16 %v722
    %v1268 = vunpack.c.l.b16 %v723
    %v1269 = vunpack.c.l.b16 %v724
    %v1270 = vunpack.c.h.b16 %v724
    %v1271 = vunpack.c.l.b16 %v725
    %v1272 = vunpack.c.l.b16 %v726
    %v1273 = vunpack.c.h.b16 %v726
    %v1274 = vunpack.c.l.b16 %v727
    %v1275 = vunpack.c.l.b16 %v728
    %v1276 = vunpack.c.h.b16 %v728
    %v1277 = vunpack.c.l.b16 %v729
    %v1278 = vunpack.c.l.b16 %v730
    %v1279 = vunpack.c.h.b16 %v730
    %v1280 = vunpack.c.l.b16 %v731
    %v1281 = vunpack.c.l.b16 %v732
    %v1282 = vunpack.c.h.b16 %v732
    %v1283 = vunpack.c.l.b16 %v733
    %v1284 = vunpack.c.l.b16 %v734
    %v1285 = vunpack.c.h.b16 %v734
    %v1286 = vunpack.c.l.b16 %v735
    %v1287 = vunpack.c.l.b16 %v736
    %v1288 = vunpack.c.h.b16 %v736
    %v1289 = vunpack.c.l.b16 %v737
    %v1290 = vunpack.c.l.b16 %v738
    %v1291 = vunpack.c.h.b16 %v738
    %v1292 = vunpack.c.l.b16 %v739
    %v1293 = vunpack.c.l.b16 %v740
    %v1294 = vunpack.c.h.b16 %v740
    %v1295 = vunpack.c.l.b16 %v741
    %v1296 = vunpack.c.l.b16 %v742
    %v1297 = vunpack.c.h.b16 %v742
    %v1298 = vunpack.c.l.b16 %v743
    %v1299 = vunpack.c.l.b16 %v744
    %v1300 = vunpack.c.h.b16 %v744
    %v1301 = vunpack.c.l.b16 %v745
    %v1302 = vunpack.c.l.b16 %v746
    %v1303 = vunpack.c.h.b16 %v746
    %v1304 = vunpack.c.l.b16 %v747
    %v1305 = vunpack.c.l.b16 %v748
    %v1306 = vunpack.c.h.b16 %v748
    %v1307 = vunpack.c.l.b16 %v749
    %v1308 = vunpack.c.l.b16 %v750
    %v1309 = vunpack.c.h.b16 %v750
    %v1310 = vunpack.c.l.b16 %v751
    %v1311 = vunpack.c.l.b16 %v752
    %v1312 = vunpack.c.h.b16 %v752
    %v1313 = vunpack.c.l.b16 %v753
    %v1314 = vunpack.c.l.b16 %v754
    %v1315 = vunpack.c.h.b16 %v754
    %v1316 = vunpack.c.l.b16 %v755
    %v1317 = vunpack.c.l.b16 %v756
    %v1318 = vunpack.c.h.b16 %v756
    %v1319 = vunpack.c.l.b16 %v757
    %v1320 = vunpack.c.l.b16 %v758
    %v1321 = vunpack.c.h.b16 %v758
    %v1322 = vunpack.c.l.b16 %v759
    %v1323 = vunpack.c.l.b16 %v760
    %v1324 = vunpack.c.h.b16 %v760
    %v1325 = vunpack.c.l.b16 %v761
    %v1326 = vunpack.c.l.b16 %v762
    %v1327 = vunpack.c.h.b16 %v762
    %v1328 = vunpack.c.l.b16 %v763
    %v1329 = vunpack.c.l.b16 %v764
    %v1330 = vunpack.c.h.b16 %v764
    %v1331 = vunpack.c.l.b16 %v765
    %v1332 = vunpack.c.l.b16 %v766
    %v1333 = vunpack.c.h.b16 %v766
    %v1334 = vunpack.c.l.b16 %v767
    %v1335 = vunpack.c.l.b16 %v768
    %v1336 = vunpack.c.h.b16 %v768
    %v1337 = vunpack.c.l.b16 %v769
    %v1338 = vunpack.c.l.b16 %v770
    %v1339 = vunpack.c.h.b16 %v770
    %v1340 = vunpack.c.l.b16 %v771
    %v1341 = vunpack.c.l.b16 %v772
    %v1342 = vunpack.c.h.b16 %v772
    %v1343 = vunpack.c.l.b16 %v773
    %v1344 = vunpack.c.l.b16 %v774
    %v1345 = vunpack.c.h.b16 %v774
    %v1346 = vunpack.c.l.b16 %v775
    %v1347 = vunpack.c.l.b16 %v776
    %v1348 = vunpack.c.h.b16 %v776
    %v1349 = vunpack.c.l.b16 %v777
    %v1350 = vunpack.c.l.b16 %v778
    %v1351 = vunpack.c.h.b16 %v778
    %v1352 = vunpack.c.l.b16 %v779
    %v1353 = vunpack.c.l.b16 %v780
    %v1354 = vunpack.c.h.b16 %v780
    %v1355 = vunpack.c.l.b16 %v781
    %v1356 = vunpack.c.l.b16 %v782
    %v1357 = vunpack.c.h.b16 %v782
    %v1358 = vunpack.c.l.b16 %v783
    %v1359 = vunpack.c.l.b16 %v784
    %v1360 = vunpack.c.h.b16 %v784
    %v1361 = vunpack.c.l.b16 %v785
    %v1362 = vunpack.c.l.b16 %v786
    %v1363 = vunpack.c.h.b16 %v786
    %v1364 = vunpack.c.l.b16 %v787
    %v1365 = vunpack.c.l.b16 %v788
    %v1366 = vunpack.c.h.b16 %v788
    %v1367 = vunpack.c.l.b16 %v789
    %v1368 = vunpack.c.l.b16 %v790
    %v1369 = vunpack.c.h.b16 %v790
    %v1370 = vunpack.c.l.b16 %v791
    %v1371 = vunpack.c.l.b16 %v792
    %v1372 = vunpack.c.h.b16 %v792
    %v1373 = vunpack.c.l.b16 %v793
    %v1374 = vunpack.c.l.b16 %v794
    %v1375 = vunpack.c.h.b16 %v794
    %v1376 = vunpack.c.l.b16 %v795
    %v1377 = vunpack.c.l.b16 %v796
    %v1378 = vunpack.c.h.b16 %v796
    %v1379 = vunpack.c.l.b16 %v797
    %v1380 = vunpack.c.l.b16 %v798
    %v1381 = vunpack.c.h.b16 %v798
    %v1382 = vunpack.c.l.b16 %v799
    %v1383 = vunpack.c.l.b16 %v800
    %v1384 = vunpack.c.h.b16 %v800
    %v1385 = vunpack.c.l.b16 %v801
    %v1386 = vunpack.c.l.b16 %v802
    %v1387 = vunpack.c.h.b16 %v802
    %v1388 = vunpack.c.l.b16 %v803
    %v1389 = vunpack.c.l.b16 %v804
    %v1390 = vunpack.c.h.b16 %v804
    %v1391 = vunpack.c.l.b16 %v805
    %v1392 = vunpack.c.l.b16 %v806
    %v1393 = vunpack.c.h.b16 %v806
    %v1394 = vunpack.c.l.b16 %v807
    %v1395 = vunpack.c.l.b16 %v808
    %v1396 = vunpack.c.h.b16 %v808
    %v1397 = vunpack.c.l.b16 %v809
    %v1398 = vunpack.c.l.b16 %v810
    %v1399 = vunpack.c.h.b16 %v810
    %v1400 = vunpack.c.l.b16 %v811
    %v1401 = vunpack.c.l.b16 %v812
    %v1402 = vunpack.c.h.b16 %v812
    %v1403 = vunpack.c.l.b16 %v813
    %v1404 = vunpack.c.l.b16 %v814
    %v1405 = vunpack.c.h.b16 %v814
    %v1406 = vunpack.c.l.b16 %v815
    %v1407 = vunpack.c.l.b16 %v816
    %v1408 = vunpack.c.h.b16 %v816
    %v1409 = vunpack.c.l.b16 %v817
    %v1410 = vunpack.c.l.b16 %v818
    %v1411 = vunpack.c.h.b16 %v818
    %v1412 = vunpack.c.l.b16 %v819
    %v1413 = vunpack.c.l.b16 %v820
    %v1414 = vunpack.c.h.b16 %v820
    %v1415 = vunpack.c.l.b16 %v821
    %v1416 = vunpack.c.l.b16 %v822
    %v1417 = vunpack.c.h.b16 %v822
    %v1418 = vunpack.c.l.b16 %v823
    %v1419 = vunpack.c.l.b16 %v824
    %v1420 = vunpack.c.h.b16 %v824
    %v1421 = vunpack.c.l.b16 %v825
    %v1422 = vunpack.c.l.b16 %v826
    %v1423 = vunpack.c.h.b16 %v826
    %v1424 = vunpack.c.l.b16 %v827
    %v1425 = vunpack.c.l.b16 %v828
    %v1426 = vunpack.c.h.b16 %v828
    %v1427 = vunpack.c.l.b16 %v829
    %v1428 = vunpack.c.l.b16 %v830
    %v1429 = vunpack.c.h.b16 %v830
    %v1430 = vunpack.c.l.b16 %v831
    %v1431 = vunpack.c.l.b16 %v832
    %v1432 = vunpack.c.h.b16 %v832
    %v1433 = vunpack.c.l.b16 %v833
    %v1434 = vunpack.c.l.b16 %v834
    %v1435 = vunpack.c.h.b16 %v834
    %v1436 = vunpack.c.l.b16 %v835
    %v1437 = vunpack.c.l.b16 %v836
    %v1438 = vunpack.c.h.b16 %v836
    %v1439 = vunpack.c.l.b16 %v837
    %v1440 = vunpack.c.l.b16 %v838
    %v1441 = vunpack.c.h.b16 %v838
    %v1442 = vunpack.c.l.b16 %v839
    %v1443 = vunpack.c.l.b16 %v840
    %v1444 = vunpack.c.h.b16 %v840
    %v1445 = vunpack.c.l.b16 %v841
    %v1446 = vunpack.c.l.b16 %v842
    %v1447 = vunpack.c.h.b16 %v842
    %v1448 = vunpack.c.l.b16 %v843
    %v1449 = vunpack.c.l.b16 %v844
    %v1450 = vunpack.c.h.b16 %v844
    %v1451 = vunpack.c.l.b16 %v845
    %v1452 = vunpack.c.l.b16 %v846
    %v1453 = vunpack.c.h.b16 %v846
    %v1454 = vunpack.c.l.b16 %v847
    %v1455 = vunpack.c.l.b16 %v848
    %v1456 = vunpack.c.h.b16 %v848
    %v1457 = vunpack.c.l.b16 %v849
    %v1458 = vunpack.c.l.b16 %v850
    %v1459 = vunpack.c.h.b16 %v850
    %v1460 = vunpack.c.l.b16 %v851
    %v1461 = vunpack.c.l.b16 %v852
    %v1462 = vunpack.c.h.b16 %v852
    %v1463 = vunpack.c.l.b16 %v853
    %v1464 = vunpack.c.l.b16 %v854
    %v1465 = vunpack.c.h.b16 %v854
    %v1466 = vunpack.c.l.b16 %v855
    %v1467 = vunpack.c.l.b16 %v856
    %v1468 = vunpack.c.h.b16 %v856
    %v1469 = vunpack.c.l.b16 %v857
    %v1470 = vunpack.c.l.b16 %v858
    %v1471 = vunpack.c.h.b16 %v858
    %v1472 = vunpack.c.l.b16 %v859
    %v1473 = vunpack.c.l.b16 %v860
    %v1474 = vunpack.c.h.b16 %v860
    %v1475 = vunpack.c.l.b16 %v861
    %v1476 = vunpack.c.l.b16 %v862
    %v1477 = vunpack.c.h.b16 %v862
    %v1478 = vunpack.c.l.b16 %v863
    %v1479 = vunpack.c.l.b16 %v864
    %v1480 = vunpack.c.h.b16 %v864
    %v1481 = vunpack.c.l.b16 %v865
    %v1482 = vunpack.c.l.b16 %v866
    %v1483 = vunpack.c.h.b16 %v866
    %v1484 = vunpack.c.l.b16 %v867
    %v1485 = vunpack.c.l.b16 %v868
    %v1486 = vunpack.c.h.b16 %v868
    %v1487 = vunpack.c.l.b16 %v869
    %v1488 = vunpack.c.l.b16 %v870
    %v1489 = vunpack.c.h.b16 %v870
    %v1490 = vunpack.c.l.b16 %v871
    %v1491 = vunpack.c.l.b16 %v872
    %v1492 = vunpack.c.h.b16 %v872
    %v1493 = vunpack.c.l.b16 %v873
    %v1494 = vunpack.c.l.b16 %v874
    %v1495 = vunpack.c.h.b16 %v874
    %v1496 = vunpack.c.l.b16 %v875
    %v1497 = vunpack.c.l.b16 %v876
    %v1498 = vunpack.c.h.b16 %v876
    %v1499 = vunpack.c.l.b16 %v877
    %v1500 = vunpack.c.l.b16 %v878
    %v1501 = vunpack.c.h.b16 %v878
    %v1502 = vunpack.c.l.b16 %v879
    %v1503 = vunpack.c.l.b16 %v880
    %v1504 = vunpack.c.h.b16 %v880
    %v1505 = vunpack.c.l.b16 %v881
    %v1506 = vunpack.c.l.b16 %v882
    %v1507 = vunpack.c.h.b16 %v882
    %v1508 = vunpack.c.l.b16 %v883
    %v1509 = vunpack.c.l.b16 %v884
    %v1510 = vunpack.c.h.b16 %v884
    %v1511 = vunpack.c.l.b16 %v885
    %v1512 = vunpack.c.l.b16 %v886
    %v1513 = vunpack.c.h.b16 %v886
    %v1514 = vunpack.c.l.b16 %v887
    %v1515 = vunpack.c.l.b16 %v888
    %v1516 = vunpack.c.h.b16 %v888
    %v1517 = vunpack.c.l.b16 %v889
    %v1518 = vunpack.c.l.b16 %v890
    %v1519 = vunpack.c.h.b16 %v890
    %v1520 = vunpack.c.l.b16 %v891
    %v1521 = vunpack.c.l.b16 %v892
    %v1522 = vunpack.c.h.b16 %v892
    %v1523 = vunpack.c.l.b16 %v893
    %v1524 = vunpack.c.l.b16 %v894
    %v1525 = vunpack.c.h.b16 %v894
    %v1526 = vunpack.c.l.b16 %v895
    %v1527 = vunpack.c.l.b16 %v896
    %v1528 = vunpack.c.h.b16 %v896
    %v1529 = vunpack.c.l.b16 %v897
    %v1530 = vunpack.c.l.b16 %v898
    %v1531 = vunpack.c.h.b16 %v898
    %v1532 = vunpack.c.l.b16 %v899
    %v1533 = vunpack.c.l.b16 %v900
    %v1534 = vunpack.c.h.b16 %v900
    %v1535 = vunpack.c.l.b16 %v901
    %v1536 = vunpack.c.l.b16 %v902
    %v1537 = vunpack.c.h.b16 %v902
    %v1538 = vunpack.c.l.b16 %v903
    %v1539 = vunpack.c.l.b16 %v904
    %v1540 = vunpack.c.h.b16 %v904
    %v1541 = vunpack.c.l.b16 %v905
    %v1542 = vunpack.c.l.b16 %v906
    %v1543 = vunpack.c.h.b16 %v906
    %v1544 = vunpack.c.l.b16 %v907
    %v1545 = vunpack.c.l.b16 %v908
    %v1546 = vunpack.c.h.b16 %v908
    %v1547 = vunpack.c.l.b16 %v909
    %v1548 = vunpack.c.l.b16 %v910
    %v1549 = vunpack.c.h.b16 %v910
    %v1550 = vunpack.c.l.b16 %v911
    %v1551 = vunpack.c.l.b16 %v912
    %v1552 = vunpack.c.h.b16 %v912
    %v1553 = vunpack.c.l.b16 %v913
    %v1554 = vunpack.c.l.b16 %v914
    %v1555 = vunpack.c.h.b16 %v914
    %v1556 = vunpack.c.l.b16 %v915
    %v1557 = vunpack.c.l.b16 %v916
    %v1558 = vunpack.c.h.b16 %v916
    %v1559 = vunpack.c.l.b16 %v917
    %v1560 = vpack.c.b16 %v1188, %v1185
    %v1561 = vpack.c.b16 %v1189, %v1186
    %v1562 = vpack.c.b16 %v1190, %v1187
    %v1563 = vpack.c.b16 %v1194, %v1191
    %v1564 = vpack.c.b16 %v1195, %v1192
    %v1565 = vpack.c.b16 %v1196, %v1193
    %v1566 = vpack.c.b16 %v1200, %v1197
    %v1567 = vpack.c.b16 %v1201, %v1198
    %v1568 = vpack.c.b16 %v1202, %v1199
    %v1569 = vpack.c.b16 %v1206, %v1203
    %v1570 = vpack.c.b16 %v1207, %v1204
    %v1571 = vpack.c.b16 %v1208, %v1205
    %v1572 = vpack.c.b16 %v1212, %v1209
    %v1573 = vpack.c.b16 %v1213, %v1210
    %v1574 = vpack.c.b16 %v1214, %v1211
    %v1575 = vpack.c.b16 %v1218, %v1215
    %v1576 = vpack.c.b16 %v1219, %v1216
    %v1577 = vpack.c.b16 %v1220, %v1217
    %v1578 = vpack.c.b16 %v1224, %v1221
    %v1579 = vpack.c.b16 %v1225, %v1222
    %v1580 = vpack.c.b16 %v1226, %v1223
    %v1581 = vpack.c.b16 %v1230, %v1227
    %v1582 = vpack.c.b16 %v1231, %v1228
    %v1583 = vpack.c.b16 %v1232, %v1229
    %v1584 = vpack.c.b16 %v1236, %v1233
    %v1585 = vpack.c.b16 %v1237, %v1234
    %v1586 = vpack.c.b16 %v1238, %v1235
    %v1587 = vpack.c.b16 %v1242, %v1239
    %v1588 = vpack.c.b16 %v1243, %v1240
    %v1589 = vpack.c.b16 %v1244, %v1241
    %v1590 = vpack.c.b16 %v1248, %v1245
    %v1591 = vpack.c.b16 %v1249, %v1246
    %v1592 = vpack.c.b16 %v1250, %v1247
    %v1593 = vpack.c.b16 %v1254, %v1251
    %v1594 = vpack.c.b16 %v1255, %v1252
    %v1595 = vpack.c.b16 %v1256, %v1253
    %v1596 = vpack.c.b16 %v1260, %v1257
    %v1597 = vpack.c.b16 %v1261, %v1258
    %v1598 = vpack.c.b16 %v1262, %v1259
    %v1599 = vpack.c.b16 %v1266, %v1263
    %v1600 = vpack.c.b16 %v1267, %v1264
    %v1601 = vpack.c.b16 %v1268, %v1265
    %v1602 = vpack.c.b16 %v1272, %v1269
    %v1603 = vpack.c.b16 %v1273, %v1270
    %v1604 = vpack.c.b16 %v1274, %v1271
    %v1605 = vpack.c.b16 %v1278, %v1275
    %v1606 = vpack.c.b16 %v1279, %v1276
    %v1607 = vpack.c.b16 %v1280, %v1277
    %v1608 = vpack.c.b16 %v1284, %v1281
    %v1609 = vpack.c.b16 %v1285, %v1282
    %v1610 = vpack.c.b16 %v1286, %v1283
    %v1611 = vpack.c.b16 %v1290, %v1287
    %v1612 = vpack.c.b16 %v1291, %v1288
    %v1613 = vpack.c.b16 %v1292, %v1289
    %v1614 = vpack.c.b16 %v1296, %v1293
    %v1615 = vpack.c.b16 %v1297, %v1294
    %v1616 = vpack.c.b16 %v1298, %v1295
    %v1617 = vpack.c.b16 %v1302, %v1299
    %v1618 = vpack.c.b16 %v1303, %v1300
    %v1619 = vpack.c.b16 %v1304, %v1301
    %v1620 = vpack.c.b16 %v1308, %v1305
    %v1621 = vpack.c.b16 %v1309, %v1306
    %v1622 = vpack.c.b16 %v1310, %v1307
    %v1623 = vpack.c.b16 %v1314, %v1311
    %v1624 = vpack.c.b16 %v1315, %v1312
    %v1625 = vpack.c.b16 %v1316, %v1313
    %v1626 = vpack.c.b16 %v1320, %v1317
    %v1627 = vpack.c.b16 %v1321, %v1318
    %v1628 = vpack.c.b16 %v1322, %v1319
    %v1629 = vpack.c.b16 %v1326, %v1323
    %v1630 = vpack.c.b16 %v1327, %v1324
    %v1631 = vpack.c.b16 %v1328, %v1325
    %v1632 = vpack.c.b16 %v1332, %v1329
    %v1633 = vpack.c.b16 %v1333, %v1330
    %v1634 = vpack.c.b16 %v1334, %v1331
    %v1635 = vpack.c.b16 %v1338, %v1335
    %v1636 = vpack.c.b16 %v1339, %v1336
    %v1637 = vpack.c.b16 %v1340, %v1337
    %v1638 = vpack.c.b16 %v1344, %v1341
    %v1639 = vpack.c.b16 %v1345, %v1342
    %v1640 = vpack.c.b16 %v1346, %v1343
    %v1641 = vpack.c.b16 %v1350, %v1347
    %v1642 = vpack.c.b16 %v1351, %v1348
    %v1643 = vpack.c.b16 %v1352, %v1349
    %v1644 = vpack.c.b16 %v1356, %v1353
    %v1645 = vpack.c.b16 %v1357, %v1354
    %v1646 = vpack.c.b16 %v1358, %v1355
    %v1647 = vpack.c.b16 %v1362, %v1359
    %v1648 = vpack.c.b16 %v1363, %v1360
    %v1649 = vpack.c.b16 %v1364, %v1361
    %v1650 = vpack.c.b16 %v1368, %v1365
    %v1651 = vpack.c.b16 %v1369, %v1366
    %v1652 = vpack.c.b16 %v1370, %v1367
    %v1653 = vpack.c.b16 %v1374, %v1371
    %v1654 = vpack.c.b16 %v1375, %v1372
    %v1655 = vpack.c.b16 %v1376, %v1373
    %v1656 = vpack.c.b16 %v1380, %v1377
    %v1657 = vpack.c.b16 %v1381, %v1378
    %v1658 = vpack.c.b16 %v1382, %v1379
    %v1659 = vpack.c.b16 %v1386, %v1383
    %v1660 = vpack.c.b16 %v1387, %v1384
    %v1661 = vpack.c.b16 %v1388, %v1385
    %v1662 = vpack.c.b16 %v1392, %v1389
    %v1663 = vpack.c.b16 %v1393, %v1390
    %v1664 = vpack.c.b16 %v1394, %v1391
    %v1665 = vpack.c.b16 %v1398, %v1395
    %v1666 = vpack.c.b16 %v1399, %v1396
    %v1667 = vpack.c.b16 %v1400, %v1397
    %v1668 = vpack.c.b16 %v1404, %v1401
    %v1669 = vpack.c.b16 %v1405, %v1402
    %v1670 = vpack.c.b16 %v1406, %v1403
    %v1671 = vpack.c.b16 %v1410, %v1407
    %v1672 = vpack.c.b16 %v1411, %v1408
    %v1673 = vpack.c.b16 %v1412, %v1409
    %v1674 = vpack.c.b16 %v1416, %v1413
    %v1675 = vpack.c.b16 %v1417, %v1414
    %v1676 = vpack.c.b16 %v1418, %v1415
    %v1677 = vpack.c.b16 %v1422, %v1419
    %v1678 = vpack.c.b16 %v1423, %v1420
    %v1679 = vpack.c.b16 %v1424, %v1421
    %v1680 = vpack.c.b16 %v1428, %v1425
    %v1681 = vpack.c.b16 %v1429, %v1426
    %v1682 = vpack.c.b16 %v1430, %v1427
    %v1683 = vpack.c.b16 %v1434, %v1431
    %v1684 = vpack.c.b16 %v1435, %v1432
    %v1685 = vpack.c.b16 %v1436, %v1433
    %v1686 = vpack.c.b16 %v1440, %v1437
    %v1687 = vpack.c.b16 %v1441, %v1438
    %v1688 = vpack.c.b16 %v1442, %v1439
    %v1689 = vpack.c.b16 %v1446, %v1443
    %v1690 = vpack.c.b16 %v1447, %v1444
    %v1691 = vpack.c.b16 %v1448, %v1445
    %v1692 = vpack.c.b16 %v1452, %v1449
    %v1693 = vpack.c.b16 %v1453, %v1450
    %v1694 = vpack.c.b16 %v1454, %v1451
    %v1695 = vpack.c.b16 %v1458, %v1455
    %v1696 = vpack.c.b16 %v1459, %v1456
    %v1697 = vpack.c.b16 %v1460, %v1457
    %v1698 = vpack.c.b16 %v1464, %v1461
    %v1699 = vpack.c.b16 %v1465, %v1462
    %v1700 = vpack.c.b16 %v1466, %v1463
    %v1701 = vpack.c.b16 %v1470, %v1467
    %v1702 = vpack.c.b16 %v1471, %v1468
    %v1703 = vpack.c.b16 %v1472, %v1469
    %v1704 = vpack.c.b16 %v1476, %v1473
    %v1705 = vpack.c.b16 %v1477, %v1474
    %v1706 = vpack.c.b16 %v1478, %v1475
    %v1707 = vpack.c.b16 %v1482, %v1479
    %v1708 = vpack.c.b16 %v1483, %v1480
    %v1709 = vpack.c.b16 %v1484, %v1481
    %v1710 = vpack.c.b16 %v1488, %v1485
    %v1711 = vpack.c.b16 %v1489, %v1486
    %v1712 = vpack.c.b16 %v1490, %v1487
    %v1713 = vpack.c.b16 %v1494, %v1491
    %v1714 = vpack.c.b16 %v1495, %v1492
    %v1715 = vpack.c.b16 %v1496, %v1493
    %v1716 = vpack.c.b16 %v1500, %v1497
    %v1717 = vpack.c.b16 %v1501, %v1498
    %v1718 = vpack.c.b16 %v1502, %v1499
    %v1719 = vpack.c.b16 %v1506, %v1503
    %v1720 = vpack.c.b16 %v1507, %v1504
    %v1721 = vpack.c.b16 %v1508, %v1505
    %v1722 = vpack.c.b16 %v1512, %v1509
    %v1723 = vpack.c.b16 %v1513, %v1510
    %v1724 = vpack.c.b16 %v1514, %v1511
    %v1725 = vpack.c.b16 %v1518, %v1515
    %v1726 = vpack.c.b16 %v1519, %v1516
    %v1727 = vpack.c.b16 %v1520, %v1517
    %v1728 = vpack.c.b16 %v1524, %v1521
    %v1729 = vpack.c.b16 %v1525, %v1522
    %v1730 = vpack.c.b16 %v1526, %v1523
    %v1731 = vpack.c.b16 %v1530, %v1527
    %v1732 = vpack.c.b16 %v1531, %v1528
    %v1733 = vpack.c.b16 %v1532, %v1529
    %v1734 = vpack.c.b16 %v1536, %v1533
    %v1735 = vpack.c.b16 %v1537, %v1534
    %v1736 = vpack.c.b16 %v1538, %v1535
    %v1737 = vpack.c.b16 %v1542, %v1539
    %v1738 = vpack.c.b16 %v1543, %v1540
    %v1739 = vpack.c.b16 %v1544, %v1541
    %v1740 = vpack.c.b16 %v1548, %v1545
    %v1741 = vpack.c.b16 %v1549, %v1546
    %v1742 = vpack.c.b16 %v1550, %v1547
    %v1743 = vpack.c.b16 %v1554, %v1551
    %v1744 = vpack.c.b16 %v1555, %v1552
    %v1745 = vpack.c.b16 %v1556, %v1553
    %v1746 = vpack.c.b16 %v1557, %v1557
    %v1747 = vpack.c.b16 %v1558, %v1558
    %v1748 = vpack.c.b16 %v1559, %v1559
    %vm1935 = vcmask 850944
    %v1937 = vsel %vm1935, %v667, 0
    %vm1939 = vcmask 1043456
    %v1941 = vsel %vm1939, %v1746, 0
    %v1944 = vsel %vm1939, %v1747, 0
    %v1947 = vsel %vm1939, %v1748, 0
    %1949 = vmatprep.subr.bf16.mxu0 %v1561
    %1950 = vmatpush1.bf16.msra.mxu0 %v1560
    %1951 = vmatprep.subr.bf16.mxu0 %v1564
    %1952 = vmatpush1.bf16.msra.mxu0 %v1563
    %1953 = vmatprep.subr.bf16.mxu0 %v1567
    %1954 = vmatpush1.bf16.msra.mxu0 %v1566
    %1955 = vmatprep.subr.bf16.mxu0 %v1570
    %1956 = vmatpush1.bf16.msra.mxu0 %v1569
    %1957 = vmatprep.subr.bf16.mxu0 %v1573
    %1958 = vmatpush1.bf16.msra.mxu0 %v1572
    %1959 = vmatprep.subr.bf16.mxu0 %v1576
    %1960 = vmatpush1.bf16.msra.mxu0 %v1575
    %1961 = vmatprep.subr.bf16.mxu0 %v1579
    %1962 = vmatpush1.bf16.msra.mxu0 %v1578
    %1963 = vmatprep.subr.bf16.mxu0 %v1582
    %1964 = vmatpush1.bf16.msra.mxu0 %v1581
    %1965 = vmatprep.subr.bf16.mxu0 %v1585
    %1966 = vmatpush1.bf16.msra.mxu0 %v1584
    %1967 = vmatprep.subr.bf16.mxu0 %v1588
    %1968 = vmatpush1.bf16.msra.mxu0 %v1587
    %1969 = vmatprep.subr.bf16.mxu0 %v1591
    %1970 = vmatpush1.bf16.msra.mxu0 %v1590
    %1971 = vmatprep.subr.bf16.mxu0 %v1594
    %1972 = vmatpush1.bf16.msra.mxu0 %v1593
    %1973 = vmatprep.subr.bf16.mxu0 %v1597
    %1974 = vmatpush1.bf16.msra.mxu0 %v1596
    %1975 = vmatprep.subr.bf16.mxu0 %v1600
    %1976 = vmatpush1.bf16.msra.mxu0 %v1599
    %1977 = vmatprep.subr.bf16.mxu0 %v1603
    %1978 = vmatpush1.bf16.msra.mxu0 %v1602
    %1979 = vmatprep.subr.bf16.mxu0 %v1606
    %1980 = vmatpush1.bf16.msra.mxu0 %v1605
    %1981 = vmatprep.mubr.bf16.mxu0 %v661
    %1982 = vmatmul.mubr.bf16.gmra.mrb[0].mxu0 %v660
    %v1983 = vpop.f32.mrb[0].mxu0
    %v1984 = vadd.f32 %v923, %v1983
    %v1985 = vpop.f32.mrb[0].mxu0
    %v1986 = vadd.f32 %v927, %v1985
    %v1987 = vpop.f32.mrb[0].mxu0
    %v1988 = vpop.f32.mrb[0].mxu0
    %1989 = vdwg.mxu0
    %1990 = vmatprep.subr.bf16.mxu0 %v1609
    %1991 = vmatpush1.bf16.msra.mxu0 %v1608
    %1992 = vmatprep.subr.bf16.mxu0 %v1612
    %1993 = vmatpush1.bf16.msra.mxu0 %v1611
    %1994 = vmatprep.subr.bf16.mxu0 %v1615
    %1995 = vmatpush1.bf16.msra.mxu0 %v1614
    %1996 = vmatprep.subr.bf16.mxu0 %v1618
    %1997 = vmatpush1.bf16.msra.mxu0 %v1617
    %1998 = vmatprep.subr.bf16.mxu0 %v1621
    %1999 = vmatpush1.bf16.msra.mxu0 %v1620
    %2000 = vmatprep.subr.bf16.mxu0 %v1624
    %2001 = vmatpush1.bf16.msra.mxu0 %v1623
    %2002 = vmatprep.subr.bf16.mxu0 %v1627
    %2003 = vmatpush1.bf16.msra.mxu0 %v1626
    %2004 = vmatprep.subr.bf16.mxu0 %v1630
    %2005 = vmatpush1.bf16.msra.mxu0 %v1629
    %2006 = vmatprep.subr.bf16.mxu0 %v1633
    %2007 = vmatpush1.bf16.msra.mxu0 %v1632
    %2008 = vmatprep.subr.bf16.mxu0 %v1636
    %2009 = vmatpush1.bf16.msra.mxu0 %v1635
    %2010 = vmatprep.subr.bf16.mxu0 %v1639
    %2011 = vmatpush1.bf16.msra.mxu0 %v1638
    %2012 = vmatprep.subr.bf16.mxu0 %v1642
    %2013 = vmatpush1.bf16.msra.mxu0 %v1641
    %2014 = vmatprep.subr.bf16.mxu0 %v1645
    %2015 = vmatpush1.bf16.msra.mxu0 %v1644
    %2016 = vmatprep.subr.bf16.mxu0 %v1648
    %2017 = vmatpush1.bf16.msra.mxu0 %v1647
    %2018 = vmatprep.subr.bf16.mxu0 %v1651
    %2019 = vmatpush1.bf16.msra.mxu0 %v1650
    %2020 = vmatprep.subr.bf16.mxu0 %v1654
    %2021 = vmatpush1.bf16.msra.mxu0 %v1653
    %2022 = vmatprep.mubr.bf16.mxu0 %v663
    %2023 = vmatmul.mubr.bf16.gmra.mrb[0].mxu0 %v662
    %v2024 = vpop.f32.mrb[0].mxu0
    %v2025 = vadd.f32 %v1984, %v2024
    %v2026 = vpop.f32.mrb[0].mxu0
    %v2027 = vadd.f32 %v1986, %v2026
    %v2028 = vpop.f32.mrb[0].mxu0
    %v2029 = vpop.f32.mrb[0].mxu0
    %2030 = vdwg.mxu0
    %2031 = vmatprep.subr.bf16.mxu0 %v1657
    %2032 = vmatpush1.bf16.msra.mxu0 %v1656
    %2033 = vmatprep.subr.bf16.mxu0 %v1660
    %2034 = vmatpush1.bf16.msra.mxu0 %v1659
    %2035 = vmatprep.subr.bf16.mxu0 %v1663
    %2036 = vmatpush1.bf16.msra.mxu0 %v1662
    %2037 = vmatprep.subr.bf16.mxu0 %v1666
    %2038 = vmatpush1.bf16.msra.mxu0 %v1665
    %2039 = vmatprep.subr.bf16.mxu0 %v1669
    %2040 = vmatpush1.bf16.msra.mxu0 %v1668
    %2041 = vmatprep.subr.bf16.mxu0 %v1672
    %2042 = vmatpush1.bf16.msra.mxu0 %v1671
    %2043 = vmatprep.subr.bf16.mxu0 %v1675
    %2044 = vmatpush1.bf16.msra.mxu0 %v1674
    %2045 = vmatprep.subr.bf16.mxu0 %v1678
    %2046 = vmatpush1.bf16.msra.mxu0 %v1677
    %2047 = vmatprep.subr.bf16.mxu0 %v1681
    %2048 = vmatpush1.bf16.msra.mxu0 %v1680
    %2049 = vmatprep.subr.bf16.mxu0 %v1684
    %2050 = vmatpush1.bf16.msra.mxu0 %v1683
    %2051 = vmatprep.subr.bf16.mxu0 %v1687
    %2052 = vmatpush1.bf16.msra.mxu0 %v1686
    %2053 = vmatprep.subr.bf16.mxu0 %v1690
    %2054 = vmatpush1.bf16.msra.mxu0 %v1689
    %2055 = vmatprep.subr.bf16.mxu0 %v1693
    %2056 = vmatpush1.bf16.msra.mxu0 %v1692
    %2057 = vmatprep.subr.bf16.mxu0 %v1696
    %2058 = vmatpush1.bf16.msra.mxu0 %v1695
    %2059 = vmatprep.subr.bf16.mxu0 %v1699
    %2060 = vmatpush1.bf16.msra.mxu0 %v1698
    %2061 = vmatprep.subr.bf16.mxu0 %v1702
    %2062 = vmatpush1.bf16.msra.mxu0 %v1701
    %2063 = vmatprep.mubr.bf16.mxu0 %v665
    %2064 = vmatmul.mubr.bf16.gmra.mrb[0].mxu0 %v664
    %v2065 = vpop.f32.mrb[0].mxu0
    %v2066 = vadd.f32 %v2025, %v2065
    %v2067 = vpop.f32.mrb[0].mxu0
    %v2068 = vadd.f32 %v2027, %v2067
    %v2069 = vpop.f32.mrb[0].mxu0
    %v2070 = vpop.f32.mrb[0].mxu0
    %2071 = vdwg.mxu0
    %2072 = vmatprep.subr.bf16.mxu0 %v1705
    %2073 = vmatpush1.bf16.msra.mxu0 %v1704
    %2074 = vmatprep.subr.bf16.mxu0 %v1708
    %2075 = vmatpush1.bf16.msra.mxu0 %v1707
    %2076 = vmatprep.subr.bf16.mxu0 %v1711
    %2077 = vmatpush1.bf16.msra.mxu0 %v1710
    %2078 = vmatprep.subr.bf16.mxu0 %v1714
    %2079 = vmatpush1.bf16.msra.mxu0 %v1713
    %2080 = vmatprep.subr.bf16.mxu0 %v1717
    %2081 = vmatpush1.bf16.msra.mxu0 %v1716
    %2082 = vmatprep.subr.bf16.mxu0 %v1720
    %2083 = vmatpush1.bf16.msra.mxu0 %v1719
    %2084 = vmatprep.subr.bf16.mxu0 %v1723
    %2085 = vmatpush1.bf16.msra.mxu0 %v1722
    %2086 = vmatprep.subr.bf16.mxu0 %v1726
    %2087 = vmatpush1.bf16.msra.mxu0 %v1725
    %2088 = vmatprep.subr.bf16.mxu0 %v1729
    %2089 = vmatpush1.bf16.msra.mxu0 %v1728
    %2090 = vmatprep.subr.bf16.mxu0 %v1732
    %2091 = vmatpush1.bf16.msra.mxu0 %v1731
    %2092 = vmatprep.subr.bf16.mxu0 %v1735
    %2093 = vmatpush1.bf16.msra.mxu0 %v1734
    %2094 = vmatprep.subr.bf16.mxu0 %v1738
    %2095 = vmatpush1.bf16.msra.mxu0 %v1737
    %2096 = vmatprep.subr.bf16.mxu0 %v1741
    %2097 = vmatpush1.bf16.msra.mxu0 %v1740
    %2098 = vmatprep.subr.bf16.mxu0 %v1744
    %2099 = vmatpush1.bf16.msra.mxu0 %v1743
    %2100 = vmatprep.subr.bf16.mxu0 %v1944
    %2101 = vmatpush1.bf16.msra.mxu0 %v1941
    %2102 = vmatprep.subr.bf16.mxu0 0
    %2103 = vmatpush1.bf16.msra.mxu0 0
    %2104 = vmatprep.mubr.bf16.mxu0 %v1937
    %2105 = vmatmul.mubr.bf16.gmra.mrb[0].mxu0 %v666
    %v2106 = vpop.f32.mrb[0].mxu0
    %v2107 = vadd.f32 %v2066, %v2106
    %v2108 = vpop.f32.mrb[0].mxu0
    %v2109 = vadd.f32 %v2068, %v2108
    %v2110 = vpop.f32.mrb[0].mxu0
    %v2111 = vpop.f32.mrb[0].mxu0
    %2112 = vdwg.mxu0
    %2113 = vmatprep.subr.bf16.mxu0 0
    %2114 = vmatpush1.bf16.msra.mxu0 %v1562
    %2115 = vmatprep.subr.bf16.mxu0 0
    %2116 = vmatpush1.bf16.msra.mxu0 %v1565
    %2117 = vmatprep.subr.bf16.mxu0 0
    %2118 = vmatpush1.bf16.msra.mxu0 %v1568
    %2119 = vmatprep.subr.bf16.mxu0 0
    %2120 = vmatpush1.bf16.msra.mxu0 %v1571
    %2121 = vmatprep.subr.bf16.mxu0 0
    %2122 = vmatpush1.bf16.msra.mxu0 %v1574
    %2123 = vmatprep.subr.bf16.mxu0 0
    %2124 = vmatpush1.bf16.msra.mxu0 %v1577
    %2125 = vmatprep.subr.bf16.mxu0 0
    %2126 = vmatpush1.bf16.msra.mxu0 %v1580
    %2127 = vmatprep.subr.bf16.mxu0 0
    %2128 = vmatpush1.bf16.msra.mxu0 %v1583
    %2129 = vmatprep.subr.bf16.mxu0 0
    %2130 = vmatpush1.bf16.msra.mxu0 %v1586
    %2131 = vmatprep.subr.bf16.mxu0 0
    %2132 = vmatpush1.bf16.msra.mxu0 %v1589
    %2133 = vmatprep.subr.bf16.mxu0 0
    %2134 = vmatpush1.bf16.msra.mxu0 %v1592
    %2135 = vmatprep.subr.bf16.mxu0 0
    %2136 = vmatpush1.bf16.msra.mxu0 %v1595
    %2137 = vmatprep.subr.bf16.mxu0 0
    %2138 = vmatpush1.bf16.msra.mxu0 %v1598
    %2139 = vmatprep.subr.bf16.mxu0 0
    %2140 = vmatpush1.bf16.msra.mxu0 %v1601
    %2141 = vmatprep.subr.bf16.mxu0 0
    %2142 = vmatpush1.bf16.msra.mxu0 %v1604
    %2143 = vmatprep.subr.bf16.mxu0 0
    %2144 = vmatpush1.bf16.msra.mxu0 %v1607
    %2145 = vmatprep.mubr.bf16.mxu0 %v661
    %2146 = vmatmul.mubr.bf16.gmra.mrb[0].mxu0 %v660
    %v2147 = vpop.f32.mrb[0].mxu0
    %v2148 = vadd.f32 %v931, %v2147
    %v2149 = vpop.f32.mrb[0].mxu0
    %v2150 = vpop.f32.mrb[0].mxu0
    %v2151 = vpop.f32.mrb[0].mxu0
    %2152 = vdwg.mxu0
    %2153 = vmatprep.subr.bf16.mxu0 0
    %2154 = vmatpush1.bf16.msra.mxu0 %v1610
    %2155 = vmatprep.subr.bf16.mxu0 0
    %2156 = vmatpush1.bf16.msra.mxu0 %v1613
    %2157 = vmatprep.subr.bf16.mxu0 0
    %2158 = vmatpush1.bf16.msra.mxu0 %v1616
    %2159 = vmatprep.subr.bf16.mxu0 0
    %2160 = vmatpush1.bf16.msra.mxu0 %v1619
    %2161 = vmatprep.subr.bf16.mxu0 0
    %2162 = vmatpush1.bf16.msra.mxu0 %v1622
    %2163 = vmatprep.subr.bf16.mxu0 0
    %2164 = vmatpush1.bf16.msra.mxu0 %v1625
    %2165 = vmatprep.subr.bf16.mxu0 0
    %2166 = vmatpush1.bf16.msra.mxu0 %v1628
    %2167 = vmatprep.subr.bf16.mxu0 0
    %2168 = vmatpush1.bf16.msra.mxu0 %v1631
    %2169 = vmatprep.subr.bf16.mxu0 0
    %2170 = vmatpush1.bf16.msra.mxu0 %v1634
    %2171 = vmatprep.subr.bf16.mxu0 0
    %2172 = vmatpush1.bf16.msra.mxu0 %v1637
    %2173 = vmatprep.subr.bf16.mxu0 0
    %2174 = vmatpush1.bf16.msra.mxu0 %v1640
    %2175 = vmatprep.subr.bf16.mxu0 0
    %2176 = vmatpush1.bf16.msra.mxu0 %v1643
    %2177 = vmatprep.subr.bf16.mxu0 0
    %2178 = vmatpush1.bf16.msra.mxu0 %v1646
    %2179 = vmatprep.subr.bf16.mxu0 0
    %2180 = vmatpush1.bf16.msra.mxu0 %v1649
    %2181 = vmatprep.subr.bf16.mxu0 0
    %2182 = vmatpush1.bf16.msra.mxu0 %v1652
    %2183 = vmatprep.subr.bf16.mxu0 0
    %2184 = vmatpush1.bf16.msra.mxu0 %v1655
    %2185 = vmatprep.mubr.bf16.mxu0 %v663
    %2186 = vmatmul.mubr.bf16.gmra.mrb[0].mxu0 %v662
    %v2187 = vpop.f32.mrb[0].mxu0
    %v2188 = vadd.f32 %v2148, %v2187
    %v2189 = vpop.f32.mrb[0].mxu0
    %v2190 = vpop.f32.mrb[0].mxu0
    %v2191 = vpop.f32.mrb[0].mxu0
    %2192 = vdwg.mxu0
    %2193 = vmatprep.subr.bf16.mxu0 0
    %2194 = vmatpush1.bf16.msra.mxu0 %v1658
    %2195 = vmatprep.subr.bf16.mxu0 0
    %2196 = vmatpush1.bf16.msra.mxu0 %v1661
    %2197 = vmatprep.subr.bf16.mxu0 0
    %2198 = vmatpush1.bf16.msra.mxu0 %v1664
    %2199 = vmatprep.subr.bf16.mxu0 0
    %2200 = vmatpush1.bf16.msra.mxu0 %v1667
    %2201 = vmatprep.subr.bf16.mxu0 0
    %2202 = vmatpush1.bf16.msra.mxu0 %v1670
    %2203 = vmatprep.subr.bf16.mxu0 0
    %2204 = vmatpush1.bf16.msra.mxu0 %v1673
    %2205 = vmatprep.subr.bf16.mxu0 0
    %2206 = vmatpush1.bf16.msra.mxu0 %v1676
    %2207 = vmatprep.subr.bf16.mxu0 0
    %2208 = vmatpush1.bf16.msra.mxu0 %v1679
    %2209 = vmatprep.subr.bf16.mxu0 0
    %2210 = vmatpush1.bf16.msra.mxu0 %v1682
    %2211 = vmatprep.subr.bf16.mxu0 0
    %2212 = vmatpush1.bf16.msra.mxu0 %v1685
    %2213 = vmatprep.subr.bf16.mxu0 0
    %2214 = vmatpush1.bf16.msra.mxu0 %v1688
    %2215 = vmatprep.subr.bf16.mxu0 0
    %2216 = vmatpush1.bf16.msra.mxu0 %v1691
    %2217 = vmatprep.subr.bf16.mxu0 0
    %2218 = vmatpush1.bf16.msra.mxu0 %v1694
    %2219 = vmatprep.subr.bf16.mxu0 0
    %2220 = vmatpush1.bf16.msra.mxu0 %v1697
    %2221 = vmatprep.subr.bf16.mxu0 0
    %2222 = vmatpush1.bf16.msra.mxu0 %v1700
    %2223 = vmatprep.subr.bf16.mxu0 0
    %2224 = vmatpush1.bf16.msra.mxu0 %v1703
    %2225 = vmatprep.mubr.bf16.mxu0 %v665
    %2226 = vmatmul.mubr.bf16.gmra.mrb[0].mxu0 %v664
    %v2227 = vpop.f32.mrb[0].mxu0
    %v2228 = vadd.f32 %v2188, %v2227
    %v2229 = vpop.f32.mrb[0].mxu0
    %v2230 = vpop.f32.mrb[0].mxu0
    %v2231 = vpop.f32.mrb[0].mxu0
    %2232 = vdwg.mxu0
    %2233 = vmatprep.subr.bf16.mxu0 0
    %2234 = vmatpush1.bf16.msra.mxu0 %v1706
    %2235 = vmatprep.subr.bf16.mxu0 0
    %2236 = vmatpush1.bf16.msra.mxu0 %v1709
    %2237 = vmatprep.subr.bf16.mxu0 0
    %2238 = vmatpush1.bf16.msra.mxu0 %v1712
    %2239 = vmatprep.subr.bf16.mxu0 0
    %2240 = vmatpush1.bf16.msra.mxu0 %v1715
    %2241 = vmatprep.subr.bf16.mxu0 0
    %2242 = vmatpush1.bf16.msra.mxu0 %v1718
    %2243 = vmatprep.subr.bf16.mxu0 0
    %2244 = vmatpush1.bf16.msra.mxu0 %v1721
    %2245 = vmatprep.subr.bf16.mxu0 0
    %2246 = vmatpush1.bf16.msra.mxu0 %v1724
    %2247 = vmatprep.subr.bf16.mxu0 0
    %2248 = vmatpush1.bf16.msra.mxu0 %v1727
    %2249 = vmatprep.subr.bf16.mxu0 0
    %2250 = vmatpush1.bf16.msra.mxu0 %v1730
    %2251 = vmatprep.subr.bf16.mxu0 0
    %2252 = vmatpush1.bf16.msra.mxu0 %v1733
    %2253 = vmatprep.subr.bf16.mxu0 0
    %2254 = vmatpush1.bf16.msra.mxu0 %v1736
    %2255 = vmatprep.subr.bf16.mxu0 0
    %2256 = vmatpush1.bf16.msra.mxu0 %v1739
    %2257 = vmatprep.subr.bf16.mxu0 0
    %2258 = vmatpush1.bf16.msra.mxu0 %v1742
    %2259 = vmatprep.subr.bf16.mxu0 0
    %2260 = vmatpush1.bf16.msra.mxu0 %v1745
    %2261 = vmatprep.subr.bf16.mxu0 0
    %2262 = vmatpush1.bf16.msra.mxu0 %v1947
    %2263 = vmatprep.subr.bf16.mxu0 0
    %2264 = vmatpush1.bf16.msra.mxu0 0
    %2265 = vmatprep.mubr.bf16.mxu0 %v1937
    %2266 = vmatmul.mubr.bf16.gmra.mrb[0].mxu0 %v666
    %v2267 = vpop.f32.mrb[0].mxu0
    %v2268 = vadd.f32 %v2228, %v2267
    %v2269 = vpop.f32.mrb[0].mxu0
    %v2270 = vpop.f32.mrb[0].mxu0
    %v2271 = vpop.f32.mrb[0].mxu0
    %2272 = vdwg.mxu0
    %v2273 = vmul.f32 %v2107, 0.01
    %v2274 = vmul.f32 %v2109, 0.01
    %v2275 = vmul.f32 %v2268, 0.01
    %v2276 = vmax.f32 %v2107, %v2273
    %v2277 = vmax.f32 %v2109, %v2274
    %v2278 = vmax.f32 %v2268, %v2275
    %v2279 = vpack.c.bf16 %v2276, %v2276
    %v2280 = vpack.c.bf16 %v2277, %v2277
    %v2281 = vpack.c.bf16 %v2278, %v2278
    %v2282 = vld [vmem:[%s6] sm:$0xff]
    %v2283 = vld [vmem:[%s6 + $0x8] sm:$0xff]
    %v2284 = vld [vmem:[%s6 + $0x10] sm:$0xff]
    %v2285 = vld [vmem:[%s6 + $0x18] sm:$0xff]
    %v2286 = vld [vmem:[%s6 + $0x20] sm:$0xff]
    %v2287 = vld [vmem:[%s6 + $0x28] sm:$0xff]
    %v2288 = vld [vmem:[%s6 + $0x30] sm:$0xff]
    %v2289 = vld [vmem:[%s6 + $0x38] sm:$0xff]
    %v2290 = vld [vmem:[%s6 + $0x40] sm:$0xff]
    %v2291 = vld [vmem:[%s6 + $0x48] sm:$0xff]
    %v2292 = vld [vmem:[%s6 + $0x50] sm:$0xff]
    %v2293 = vld [vmem:[%s6 + $0x58] sm:$0xff]
    %v2294 = vld [vmem:[%s6 + $0x60] sm:$0xff]
    %v2295 = vld [vmem:[%s6 + $0x68] sm:$0xff]
    %v2296 = vld [vmem:[%s6 + $0x70] sm:$0xff]
    %v2297 = vld [vmem:[%s6 + $0x78] sm:$0xff]
    %v2298 = vld [vmem:[%s6 + $0x80] sm:$0xff]
    %v2299 = vld [vmem:[%s6 + $0x88] sm:$0xff]
    %v2300 = vld [vmem:[%s6 + $0x90] sm:$0xff]
    %v2301 = vld [vmem:[%s6 + $0x98] sm:$0xff]
    %v2302 = vld [vmem:[%s6 + $0xa0] sm:$0xff]
    %v2303 = vld [vmem:[%s6 + $0xa8] sm:$0xff]
    %v2304 = vld [vmem:[%s6 + $0xb0] sm:$0xff]
    %v2305 = vld [vmem:[%s6 + $0xb8] sm:$0xff]
    %v2306 = vld [vmem:[%s6 + $0xc0] sm:$0xff]
    %v2307 = vld [vmem:[%s6 + $0xc8] sm:$0xff]
    %v2308 = vld [vmem:[%s6 + $0xd0] sm:$0xff]
    %v2309 = vld [vmem:[%s6 + $0xd8] sm:$0xff]
    %v2310 = vld [vmem:[%s6 + $0xe0] sm:$0xff]
    %v2311 = vld [vmem:[%s6 + $0xe8] sm:$0xff]
    %v2312 = vld [vmem:[%s6 + $0xf0] sm:$0xff]
    %v2313 = vld [vmem:[%s6 + $0xf8] sm:$0xff]
    %v2314 = vld [vmem:[%s6 + $0x100] sm:$0xff]
    %v2315 = vld [vmem:[%s6 + $0x108] sm:$0xff]
    %v2316 = vld [vmem:[%s6 + $0x110] sm:$0xff]
    %v2317 = vld [vmem:[%s6 + $0x118] sm:$0xff]
    %v2318 = vld [vmem:[%s6 + $0x120] sm:$0xff]
    %v2319 = vld [vmem:[%s6 + $0x128] sm:$0x33]
    %v2320 = vld [vmem:[%s7] sm:$0x3]
    %v2322 = vlaneseq
    %v2323 = vshrl.u32 %v2322, 7
    %v2324 = vsub.s32 0, %v2323
    %v2325 = vrot.slane %v2320, %v2324
    %v2326 = vlaneseq
    %v2327 = vshrl.u32 %v2326, 7
    %v2328 = vsub.s32 1, %v2327
    %v2329 = vrot.slane %v2320, %v2328
    %v2370 = vunpack.c.l.b16 %v2282
    %v2371 = vunpack.c.h.b16 %v2282
    %v2372 = vunpack.c.l.b16 %v2283
    %v2373 = vunpack.c.h.b16 %v2283
    %v2374 = vunpack.c.l.b16 %v2284
    %v2375 = vunpack.c.h.b16 %v2284
    %v2376 = vunpack.c.l.b16 %v2285
    %v2377 = vunpack.c.h.b16 %v2285
    %v2378 = vunpack.c.l.b16 %v2286
    %v2379 = vunpack.c.h.b16 %v2286
    %v2380 = vunpack.c.l.b16 %v2287
    %v2381 = vunpack.c.h.b16 %v2287
    %v2382 = vunpack.c.l.b16 %v2288
    %v2383 = vunpack.c.h.b16 %v2288
    %v2384 = vunpack.c.l.b16 %v2289
    %v2385 = vunpack.c.h.b16 %v2289
    %v2386 = vunpack.c.l.b16 %v2290
    %v2387 = vunpack.c.h.b16 %v2290
    %v2388 = vunpack.c.l.b16 %v2291
    %v2389 = vunpack.c.h.b16 %v2291
    %v2390 = vunpack.c.l.b16 %v2292
    %v2391 = vunpack.c.h.b16 %v2292
    %v2392 = vunpack.c.l.b16 %v2293
    %v2393 = vunpack.c.h.b16 %v2293
    %v2394 = vunpack.c.l.b16 %v2294
    %v2395 = vunpack.c.h.b16 %v2294
    %v2396 = vunpack.c.l.b16 %v2295
    %v2397 = vunpack.c.h.b16 %v2295
    %v2398 = vunpack.c.l.b16 %v2296
    %v2399 = vunpack.c.h.b16 %v2296
    %v2400 = vunpack.c.l.b16 %v2297
    %v2401 = vunpack.c.h.b16 %v2297
    %v2402 = vunpack.c.l.b16 %v2298
    %v2403 = vunpack.c.h.b16 %v2298
    %v2404 = vunpack.c.l.b16 %v2299
    %v2405 = vunpack.c.h.b16 %v2299
    %v2406 = vunpack.c.l.b16 %v2300
    %v2407 = vunpack.c.h.b16 %v2300
    %v2408 = vunpack.c.l.b16 %v2301
    %v2409 = vunpack.c.h.b16 %v2301
    %v2410 = vunpack.c.l.b16 %v2302
    %v2411 = vunpack.c.h.b16 %v2302
    %v2412 = vunpack.c.l.b16 %v2303
    %v2413 = vunpack.c.h.b16 %v2303
    %v2414 = vunpack.c.l.b16 %v2304
    %v2415 = vunpack.c.h.b16 %v2304
    %v2416 = vunpack.c.l.b16 %v2305
    %v2417 = vunpack.c.h.b16 %v2305
    %v2418 = vunpack.c.l.b16 %v2306
    %v2419 = vunpack.c.h.b16 %v2306
    %v2420 = vunpack.c.l.b16 %v2307
    %v2421 = vunpack.c.h.b16 %v2307
    %v2422 = vunpack.c.l.b16 %v2308
    %v2423 = vunpack.c.h.b16 %v2308
    %v2424 = vunpack.c.l.b16 %v2309
    %v2425 = vunpack.c.h.b16 %v2309
    %v2426 = vunpack.c.l.b16 %v2310
    %v2427 = vunpack.c.h.b16 %v2310
    %v2428 = vunpack.c.l.b16 %v2311
    %v2429 = vunpack.c.h.b16 %v2311
    %v2430 = vunpack.c.l.b16 %v2312
    %v2431 = vunpack.c.h.b16 %v2312
    %v2432 = vunpack.c.l.b16 %v2313
    %v2433 = vunpack.c.h.b16 %v2313
    %v2434 = vunpack.c.l.b16 %v2314
    %v2435 = vunpack.c.h.b16 %v2314
    %v2436 = vunpack.c.l.b16 %v2315
    %v2437 = vunpack.c.h.b16 %v2315
    %v2438 = vunpack.c.l.b16 %v2316
    %v2439 = vunpack.c.h.b16 %v2316
    %v2440 = vunpack.c.l.b16 %v2317
    %v2441 = vunpack.c.h.b16 %v2317
    %v2442 = vunpack.c.l.b16 %v2318
    %v2443 = vunpack.c.h.b16 %v2318
    %v2444 = vunpack.c.l.b16 %v2319
    %v2445 = vunpack.c.h.b16 %v2319
    %v2446 = vpack.c.b16 %v2372, %v2370
    %v2447 = vpack.c.b16 %v2373, %v2371
    %v2448 = vpack.c.b16 %v2376, %v2374
    %v2449 = vpack.c.b16 %v2377, %v2375
    %v2450 = vpack.c.b16 %v2380, %v2378
    %v2451 = vpack.c.b16 %v2381, %v2379
    %v2452 = vpack.c.b16 %v2384, %v2382
    %v2453 = vpack.c.b16 %v2385, %v2383
    %v2454 = vpack.c.b16 %v2388, %v2386
    %v2455 = vpack.c.b16 %v2389, %v2387
    %v2456 = vpack.c.b16 %v2392, %v2390
    %v2457 = vpack.c.b16 %v2393, %v2391
    %v2458 = vpack.c.b16 %v2396, %v2394
    %v2459 = vpack.c.b16 %v2397, %v2395
    %v2460 = vpack.c.b16 %v2400, %v2398
    %v2461 = vpack.c.b16 %v2401, %v2399
    %v2462 = vpack.c.b16 %v2404, %v2402
    %v2463 = vpack.c.b16 %v2405, %v2403
    %v2464 = vpack.c.b16 %v2408, %v2406
    %v2465 = vpack.c.b16 %v2409, %v2407
    %v2466 = vpack.c.b16 %v2412, %v2410
    %v2467 = vpack.c.b16 %v2413, %v2411
    %v2468 = vpack.c.b16 %v2416, %v2414
    %v2469 = vpack.c.b16 %v2417, %v2415
    %v2470 = vpack.c.b16 %v2420, %v2418
    %v2471 = vpack.c.b16 %v2421, %v2419
    %v2472 = vpack.c.b16 %v2424, %v2422
    %v2473 = vpack.c.b16 %v2425, %v2423
    %v2474 = vpack.c.b16 %v2428, %v2426
    %v2475 = vpack.c.b16 %v2429, %v2427
    %v2476 = vpack.c.b16 %v2432, %v2430
    %v2477 = vpack.c.b16 %v2433, %v2431
    %v2478 = vpack.c.b16 %v2436, %v2434
    %v2479 = vpack.c.b16 %v2437, %v2435
    %v2480 = vpack.c.b16 %v2440, %v2438
    %v2481 = vpack.c.b16 %v2441, %v2439
    %v2482 = vpack.c.b16 %v2444, %v2442
    %v2483 = vpack.c.b16 %v2445, %v2443
    %vm2520 = vcmask 359424
    %v2522 = vsel %vm2520, %v2281, 0
    %vm2524 = vcmask 1045504
    %v2526 = vsel %vm2524, %v2482, 0
    %v2529 = vsel %vm2524, %v2483, 0
    %2531 = vmatprep.subr.bf16.mxu0 %v2447
    %2532 = vmatpush1.bf16.msra.mxu0 %v2446
    %2533 = vmatprep.subr.bf16.mxu0 %v2449
    %2534 = vmatpush1.bf16.msra.mxu0 %v2448
    %2535 = vmatprep.subr.bf16.mxu0 %v2451
    %2536 = vmatpush1.bf16.msra.mxu0 %v2450
    %2537 = vmatprep.subr.bf16.mxu0 %v2453
    %2538 = vmatpush1.bf16.msra.mxu0 %v2452
    %2539 = vmatprep.subr.bf16.mxu0 %v2455
    %2540 = vmatpush1.bf16.msra.mxu0 %v2454
    %2541 = vmatprep.subr.bf16.mxu0 %v2457
    %2542 = vmatpush1.bf16.msra.mxu0 %v2456
    %2543 = vmatprep.subr.bf16.mxu0 %v2459
    %2544 = vmatpush1.bf16.msra.mxu0 %v2458
    %2545 = vmatprep.subr.bf16.mxu0 %v2461
    %2546 = vmatpush1.bf16.msra.mxu0 %v2460
    %2547 = vmatprep.subr.bf16.mxu0 %v2463
    %2548 = vmatpush1.bf16.msra.mxu0 %v2462
    %2549 = vmatprep.subr.bf16.mxu0 %v2465
    %2550 = vmatpush1.bf16.msra.mxu0 %v2464
    %2551 = vmatprep.subr.bf16.mxu0 %v2467
    %2552 = vmatpush1.bf16.msra.mxu0 %v2466
    %2553 = vmatprep.subr.bf16.mxu0 %v2469
    %2554 = vmatpush1.bf16.msra.mxu0 %v2468
    %2555 = vmatprep.subr.bf16.mxu0 %v2471
    %2556 = vmatpush1.bf16.msra.mxu0 %v2470
    %2557 = vmatprep.subr.bf16.mxu0 %v2473
    %2558 = vmatpush1.bf16.msra.mxu0 %v2472
    %2559 = vmatprep.subr.bf16.mxu0 %v2475
    %2560 = vmatpush1.bf16.msra.mxu0 %v2474
    %2561 = vmatprep.subr.bf16.mxu0 %v2477
    %2562 = vmatpush1.bf16.msra.mxu0 %v2476
    %2563 = vmatprep.mubr.bf16.mxu0 %v2280
    %2564 = vmatmul.mubr.bf16.gmra.mrb[0].mxu0 %v2279
    %v2565 = vpop.f32.mrb[0].mxu0
    %v2566 = vadd.f32 %v2325, %v2565
    %v2567 = vpop.f32.mrb[0].mxu0
    %v2568 = vadd.f32 %v2329, %v2567
    %v2569 = vpop.f32.mrb[0].mxu0
    %v2570 = vpop.f32.mrb[0].mxu0
    %2571 = vdwg.mxu0
    %2572 = vmatprep.subr.bf16.mxu0 %v2479
    %2573 = vmatpush1.bf16.msra.mxu0 %v2478
    %2574 = vmatprep.subr.bf16.mxu0 %v2481
    %2575 = vmatpush1.bf16.msra.mxu0 %v2480
    %2576 = vmatprep.subr.bf16.mxu0 %v2529
    %2577 = vmatpush1.bf16.msra.mxu0 %v2526
    %2578 = vmatprep.subr.bf16.mxu0 0
    %2579 = vmatpush1.bf16.msra.mxu0 0
    %2580 = vmatprep.subr.bf16.mxu0 0
    %2581 = vmatpush1.bf16.msra.mxu0 0
    %2582 = vmatprep.subr.bf16.mxu0 0
    %2583 = vmatpush1.bf16.msra.mxu0 0
    %2584 = vmatprep.subr.bf16.mxu0 0
    %2585 = vmatpush1.bf16.msra.mxu0 0
    %2586 = vmatprep.subr.bf16.mxu0 0
    %2587 = vmatpush1.bf16.msra.mxu0 0
    %2588 = vmatprep.subr.bf16.mxu0 0
    %2589 = vmatpush1.bf16.msra.mxu0 0
    %2590 = vmatprep.subr.bf16.mxu0 0
    %2591 = vmatpush1.bf16.msra.mxu0 0
    %2592 = vmatprep.subr.bf16.mxu0 0
    %2593 = vmatpush1.bf16.msra.mxu0 0
    %2594 = vmatprep.subr.bf16.mxu0 0
    %2595 = vmatpush1.bf16.msra.mxu0 0
    %2596 = vmatprep.subr.bf16.mxu0 0
    %2597 = vmatpush1.bf16.msra.mxu0 0
    %2598 = vmatprep.subr.bf16.mxu0 0
    %2599 = vmatpush1.bf16.msra.mxu0 0
    %2600 = vmatprep.subr.bf16.mxu0 0
    %2601 = vmatpush1.bf16.msra.mxu0 0
    %2602 = vmatprep.subr.bf16.mxu0 0
    %2603 = vmatpush1.bf16.msra.mxu0 0
    %2604 = vmatprep.mubr.bf16.mxu0 0
    %2605 = vmatmul.mubr.bf16.gmra.mrb[0].mxu0 %v2522
    %v2606 = vpop.f32.mrb[0].mxu0
    %v2607 = vadd.f32 %v2566, %v2606
    %v2608 = vpop.f32.mrb[0].mxu0
    %v2609 = vadd.f32 %v2568, %v2608
    %v2610 = vpop.f32.mrb[0].mxu0
    %v2611 = vpop.f32.mrb[0].mxu0
    %2612 = vdwg.mxu0
    %v2613 = vld [vmem:[%s1] sm:$0xff]
    %v2614 = vmul.f32 %v2609, 0.5
    %v2615 = vmul.f32 %v2614, 1.442695
    %v2616 = vpow.pop %v2615
    %v2617 = vmul.f32 %v2613, %v2616
    %v2618 = vadd.f32 %v2607, %v2617
    %v2619 = vpack.c.bf16 %v2618, %v2618
    %v2620 = vld [vmem:[%s8] sm:$0xff]
    %v2621 = vld [vmem:[%s8 + $0x8] sm:$0xf]
    %v2622 = vld [vmem:[%s8 + $0xc] sm:$0xff]
    %v2623 = vld [vmem:[%s8 + $0x14] sm:$0xf]
    %v2624 = vld [vmem:[%s8 + $0x18] sm:$0xff]
    %v2625 = vld [vmem:[%s8 + $0x20] sm:$0xf]
    %v2626 = vld [vmem:[%s8 + $0x24] sm:$0xff]
    %v2627 = vld [vmem:[%s8 + $0x2c] sm:$0xf]
    %v2628 = vld [vmem:[%s8 + $0x30] sm:$0xff]
    %v2629 = vld [vmem:[%s8 + $0x38] sm:$0xf]
    %v2630 = vld [vmem:[%s8 + $0x3c] sm:$0xff]
    %v2631 = vld [vmem:[%s8 + $0x44] sm:$0xf]
    %v2632 = vld [vmem:[%s8 + $0x48] sm:$0xff]
    %v2633 = vld [vmem:[%s8 + $0x50] sm:$0xf]
    %v2634 = vld [vmem:[%s8 + $0x54] sm:$0xff]
    %v2635 = vld [vmem:[%s8 + $0x5c] sm:$0xf]
    %v2636 = vld [vmem:[%s8 + $0x60] sm:$0xff]
    %v2637 = vld [vmem:[%s8 + $0x68] sm:$0xf]
    %v2638 = vld [vmem:[%s8 + $0x6c] sm:$0xff]
    %v2639 = vld [vmem:[%s8 + $0x74] sm:$0xf]
    %v2640 = vld [vmem:[%s8 + $0x78] sm:$0xff]
    %v2641 = vld [vmem:[%s8 + $0x80] sm:$0xf]
    %v2642 = vld [vmem:[%s8 + $0x84] sm:$0xff]
    %v2643 = vld [vmem:[%s8 + $0x8c] sm:$0xf]
    %v2644 = vld [vmem:[%s8 + $0x90] sm:$0xff]
    %v2645 = vld [vmem:[%s8 + $0x98] sm:$0xf]
    %v2646 = vld [vmem:[%s8 + $0x9c] sm:$0xff]
    %v2647 = vld [vmem:[%s8 + $0xa4] sm:$0xf]
    %v2648 = vld [vmem:[%s8 + $0xa8] sm:$0xff]
    %v2649 = vld [vmem:[%s8 + $0xb0] sm:$0xf]
    %v2650 = vld [vmem:[%s8 + $0xb4] sm:$0xff]
    %v2651 = vld [vmem:[%s8 + $0xbc] sm:$0xf]
    %v2652 = vld [vmem:[%s9] sm:$0x7]
    %v2654 = vlaneseq
    %v2655 = vshrl.u32 %v2654, 7
    %v2656 = vsub.s32 0, %v2655
    %v2657 = vrot.slane %v2652, %v2656
    %v2658 = vlaneseq
    %v2659 = vshrl.u32 %v2658, 7
    %v2660 = vsub.s32 1, %v2659
    %v2661 = vrot.slane %v2652, %v2660
    %v2662 = vlaneseq
    %v2663 = vshrl.u32 %v2662, 7
    %v2664 = vsub.s32 2, %v2663
    %v2665 = vrot.slane %v2652, %v2664
    %v2701 = vunpack.c.l.b16 %v2620
    %v2702 = vunpack.c.h.b16 %v2620
    %v2703 = vunpack.c.l.b16 %v2621
    %v2704 = vunpack.c.l.b16 %v2622
    %v2705 = vunpack.c.h.b16 %v2622
    %v2706 = vunpack.c.l.b16 %v2623
    %v2707 = vunpack.c.l.b16 %v2624
    %v2708 = vunpack.c.h.b16 %v2624
    %v2709 = vunpack.c.l.b16 %v2625
    %v2710 = vunpack.c.l.b16 %v2626
    %v2711 = vunpack.c.h.b16 %v2626
    %v2712 = vunpack.c.l.b16 %v2627
    %v2713 = vunpack.c.l.b16 %v2628
    %v2714 = vunpack.c.h.b16 %v2628
    %v2715 = vunpack.c.l.b16 %v2629
    %v2716 = vunpack.c.l.b16 %v2630
    %v2717 = vunpack.c.h.b16 %v2630
    %v2718 = vunpack.c.l.b16 %v2631
    %v2719 = vunpack.c.l.b16 %v2632
    %v2720 = vunpack.c.h.b16 %v2632
    %v2721 = vunpack.c.l.b16 %v2633
    %v2722 = vunpack.c.l.b16 %v2634
    %v2723 = vunpack.c.h.b16 %v2634
    %v2724 = vunpack.c.l.b16 %v2635
    %v2725 = vunpack.c.l.b16 %v2636
    %v2726 = vunpack.c.h.b16 %v2636
    %v2727 = vunpack.c.l.b16 %v2637
    %v2728 = vunpack.c.l.b16 %v2638
    %v2729 = vunpack.c.h.b16 %v2638
    %v2730 = vunpack.c.l.b16 %v2639
    %v2731 = vunpack.c.l.b16 %v2640
    %v2732 = vunpack.c.h.b16 %v2640
    %v2733 = vunpack.c.l.b16 %v2641
    %v2734 = vunpack.c.l.b16 %v2642
    %v2735 = vunpack.c.h.b16 %v2642
    %v2736 = vunpack.c.l.b16 %v2643
    %v2737 = vunpack.c.l.b16 %v2644
    %v2738 = vunpack.c.h.b16 %v2644
    %v2739 = vunpack.c.l.b16 %v2645
    %v2740 = vunpack.c.l.b16 %v2646
    %v2741 = vunpack.c.h.b16 %v2646
    %v2742 = vunpack.c.l.b16 %v2647
    %v2743 = vunpack.c.l.b16 %v2648
    %v2744 = vunpack.c.h.b16 %v2648
    %v2745 = vunpack.c.l.b16 %v2649
    %v2746 = vunpack.c.l.b16 %v2650
    %v2747 = vunpack.c.h.b16 %v2650
    %v2748 = vunpack.c.l.b16 %v2651
    %v2749 = vpack.c.b16 %v2704, %v2701
    %v2750 = vpack.c.b16 %v2705, %v2702
    %v2751 = vpack.c.b16 %v2706, %v2703
    %v2752 = vpack.c.b16 %v2710, %v2707
    %v2753 = vpack.c.b16 %v2711, %v2708
    %v2754 = vpack.c.b16 %v2712, %v2709
    %v2755 = vpack.c.b16 %v2716, %v2713
    %v2756 = vpack.c.b16 %v2717, %v2714
    %v2757 = vpack.c.b16 %v2718, %v2715
    %v2758 = vpack.c.b16 %v2722, %v2719
    %v2759 = vpack.c.b16 %v2723, %v2720
    %v2760 = vpack.c.b16 %v2724, %v2721
    %v2761 = vpack.c.b16 %v2728, %v2725
    %v2762 = vpack.c.b16 %v2729, %v2726
    %v2763 = vpack.c.b16 %v2730, %v2727
    %v2764 = vpack.c.b16 %v2734, %v2731
    %v2765 = vpack.c.b16 %v2735, %v2732
    %v2766 = vpack.c.b16 %v2736, %v2733
    %v2767 = vpack.c.b16 %v2740, %v2737
    %v2768 = vpack.c.b16 %v2741, %v2738
    %v2769 = vpack.c.b16 %v2742, %v2739
    %v2770 = vpack.c.b16 %v2746, %v2743
    %v2771 = vpack.c.b16 %v2747, %v2744
    %v2772 = vpack.c.b16 %v2748, %v2745
    %2797 = vmatprep.subr.bf16.mxu0 %v2750
    %2798 = vmatpush1.bf16.msra.mxu0 %v2749
    %2799 = vmatprep.subr.bf16.mxu0 %v2753
    %2800 = vmatpush1.bf16.msra.mxu0 %v2752
    %2801 = vmatprep.subr.bf16.mxu0 %v2756
    %2802 = vmatpush1.bf16.msra.mxu0 %v2755
    %2803 = vmatprep.subr.bf16.mxu0 %v2759
    %2804 = vmatpush1.bf16.msra.mxu0 %v2758
    %2805 = vmatprep.subr.bf16.mxu0 %v2762
    %2806 = vmatpush1.bf16.msra.mxu0 %v2761
    %2807 = vmatprep.subr.bf16.mxu0 %v2765
    %2808 = vmatpush1.bf16.msra.mxu0 %v2764
    %2809 = vmatprep.subr.bf16.mxu0 %v2768
    %2810 = vmatpush1.bf16.msra.mxu0 %v2767
    %2811 = vmatprep.subr.bf16.mxu0 %v2771
    %2812 = vmatpush1.bf16.msra.mxu0 %v2770
    %2813 = vmatprep.subr.bf16.mxu0 0
    %2814 = vmatpush1.bf16.msra.mxu0 0
    %2815 = vmatprep.subr.bf16.mxu0 0
    %2816 = vmatpush1.bf16.msra.mxu0 0
    %2817 = vmatprep.subr.bf16.mxu0 0
    %2818 = vmatpush1.bf16.msra.mxu0 0
    %2819 = vmatprep.subr.bf16.mxu0 0
    %2820 = vmatpush1.bf16.msra.mxu0 0
    %2821 = vmatprep.subr.bf16.mxu0 0
    %2822 = vmatpush1.bf16.msra.mxu0 0
    %2823 = vmatprep.subr.bf16.mxu0 0
    %2824 = vmatpush1.bf16.msra.mxu0 0
    %2825 = vmatprep.subr.bf16.mxu0 0
    %2826 = vmatpush1.bf16.msra.mxu0 0
    %2827 = vmatprep.subr.bf16.mxu0 0
    %2828 = vmatpush1.bf16.msra.mxu0 0
    %2829 = vmatprep.mubr.bf16.mxu0 0
    %2830 = vmatmul.mubr.bf16.gmra.mrb[0].mxu0 %v2619
    %v2831 = vpop.f32.mrb[0].mxu0
    %v2832 = vadd.f32 %v2657, %v2831
    %v2833 = vpop.f32.mrb[0].mxu0
    %v2834 = vadd.f32 %v2661, %v2833
    %v2835 = vpop.f32.mrb[0].mxu0
    %v2836 = vpop.f32.mrb[0].mxu0
    %2837 = vdwg.mxu0
    %2838 = vmatprep.subr.bf16.mxu0 0
    %2839 = vmatpush1.bf16.msra.mxu0 %v2751
    %2840 = vmatprep.subr.bf16.mxu0 0
    %2841 = vmatpush1.bf16.msra.mxu0 %v2754
    %2842 = vmatprep.subr.bf16.mxu0 0
    %2843 = vmatpush1.bf16.msra.mxu0 %v2757
    %2844 = vmatprep.subr.bf16.mxu0 0
    %2845 = vmatpush1.bf16.msra.mxu0 %v2760
    %2846 = vmatprep.subr.bf16.mxu0 0
    %2847 = vmatpush1.bf16.msra.mxu0 %v2763
    %2848 = vmatprep.subr.bf16.mxu0 0
    %2849 = vmatpush1.bf16.msra.mxu0 %v2766
    %2850 = vmatprep.subr.bf16.mxu0 0
    %2851 = vmatpush1.bf16.msra.mxu0 %v2769
    %2852 = vmatprep.subr.bf16.mxu0 0
    %2853 = vmatpush1.bf16.msra.mxu0 %v2772
    %2854 = vmatprep.subr.bf16.mxu0 0
    %2855 = vmatpush1.bf16.msra.mxu0 0
    %2856 = vmatprep.subr.bf16.mxu0 0
    %2857 = vmatpush1.bf16.msra.mxu0 0
    %2858 = vmatprep.subr.bf16.mxu0 0
    %2859 = vmatpush1.bf16.msra.mxu0 0
    %2860 = vmatprep.subr.bf16.mxu0 0
    %2861 = vmatpush1.bf16.msra.mxu0 0
    %2862 = vmatprep.subr.bf16.mxu0 0
    %2863 = vmatpush1.bf16.msra.mxu0 0
    %2864 = vmatprep.subr.bf16.mxu0 0
    %2865 = vmatpush1.bf16.msra.mxu0 0
    %2866 = vmatprep.subr.bf16.mxu0 0
    %2867 = vmatpush1.bf16.msra.mxu0 0
    %2868 = vmatprep.subr.bf16.mxu0 0
    %2869 = vmatpush1.bf16.msra.mxu0 0
    %2870 = vmatprep.mubr.bf16.mxu0 0
    %2871 = vmatmul.mubr.bf16.gmra.mrb[0].mxu0 %v2619
    %v2872 = vpop.f32.mrb[0].mxu0
    %v2873 = vadd.f32 %v2665, %v2872
    %v2874 = vpop.f32.mrb[0].mxu0
    %v2875 = vpop.f32.mrb[0].mxu0
    %v2876 = vpop.f32.mrb[0].mxu0
    %2877 = vdwg.mxu0
    %v2878 = vmul.f32 %v2832, 0.01
    %v2879 = vmul.f32 %v2834, 0.01
    %v2880 = vmul.f32 %v2873, 0.01
    %v2881 = vmax.f32 %v2832, %v2878
    %v2882 = vmax.f32 %v2834, %v2879
    %v2883 = vmax.f32 %v2873, %v2880
    %v2884 = vpack.c.bf16 %v2881, %v2881
    %v2885 = vpack.c.bf16 %v2882, %v2882
    %v2886 = vpack.c.bf16 %v2883, %v2883
    %v2887 = vld [vmem:[%s10] sm:$0xff]
    %v2888 = vld [vmem:[%s10 + $0x8] sm:$0xff]
    %v2889 = vld [vmem:[%s10 + $0x10] sm:$0xff]
    %v2890 = vld [vmem:[%s10 + $0x18] sm:$0xff]
    %v2891 = vld [vmem:[%s10 + $0x20] sm:$0xff]
    %v2892 = vld [vmem:[%s10 + $0x28] sm:$0xff]
    %v2893 = vld [vmem:[%s10 + $0x30] sm:$0xff]
    %v2894 = vld [vmem:[%s10 + $0x38] sm:$0xff]
    %v2895 = vld [vmem:[%s10 + $0x40] sm:$0xff]
    %v2896 = vld [vmem:[%s10 + $0x48] sm:$0xff]
    %v2897 = vld [vmem:[%s10 + $0x50] sm:$0xff]
    %v2898 = vld [vmem:[%s10 + $0x58] sm:$0xff]
    %v2899 = vld [vmem:[%s10 + $0x60] sm:$0xff]
    %v2900 = vld [vmem:[%s10 + $0x68] sm:$0xff]
    %v2901 = vld [vmem:[%s10 + $0x70] sm:$0xff]
    %v2902 = vld [vmem:[%s10 + $0x78] sm:$0xff]
    %v2903 = vld [vmem:[%s10 + $0x80] sm:$0xff]
    %v2904 = vld [vmem:[%s10 + $0x88] sm:$0xff]
    %v2905 = vld [vmem:[%s10 + $0x90] sm:$0xff]
    %v2906 = vld [vmem:[%s10 + $0x98] sm:$0xff]
    %v2907 = vld [vmem:[%s10 + $0xa0] sm:$0xff]
    %v2908 = vld [vmem:[%s10 + $0xa8] sm:$0xff]
    %v2909 = vld [vmem:[%s10 + $0xb0] sm:$0xff]
    %v2910 = vld [vmem:[%s10 + $0xb8] sm:$0xff]
    %v2911 = vld [vmem:[%s10 + $0xc0] sm:$0xff]
    %v2912 = vld [vmem:[%s10 + $0xc8] sm:$0xff]
    %v2913 = vld [vmem:[%s10 + $0xd0] sm:$0xff]
    %v2914 = vld [vmem:[%s10 + $0xd8] sm:$0xff]
    %v2915 = vld [vmem:[%s10 + $0xe0] sm:$0xff]
    %v2916 = vld [vmem:[%s10 + $0xe8] sm:$0xff]
    %v2917 = vld [vmem:[%s10 + $0xf0] sm:$0xff]
    %v2918 = vld [vmem:[%s10 + $0xf8] sm:$0xff]
    %v2919 = vld [vmem:[%s10 + $0x100] sm:$0xff]
    %v2920 = vld [vmem:[%s10 + $0x108] sm:$0xff]
    %v2921 = vld [vmem:[%s10 + $0x110] sm:$0xff]
    %v2922 = vld [vmem:[%s10 + $0x118] sm:$0xff]
    %v2923 = vld [vmem:[%s10 + $0x120] sm:$0xff]
    %v2924 = vld [vmem:[%s10 + $0x128] sm:$0xff]
    %v2925 = vld [vmem:[%s10 + $0x130] sm:$0xff]
    %v2926 = vld [vmem:[%s10 + $0x138] sm:$0xff]
    %v2927 = vld [vmem:[%s10 + $0x140] sm:$0xff]
    %v2928 = vld [vmem:[%s10 + $0x148] sm:$0xff]
    %v2929 = vld [vmem:[%s10 + $0x150] sm:$0xff]
    %v2930 = vld [vmem:[%s10 + $0x158] sm:$0xff]
    %v2931 = vld [vmem:[%s10 + $0x160] sm:$0xff]
    %v2932 = vld [vmem:[%s10 + $0x168] sm:$0xff]
    %v2933 = vld [vmem:[%s10 + $0x170] sm:$0xff]
    %v2934 = vld [vmem:[%s10 + $0x178] sm:$0xff]
    %v2935 = vld [vmem:[%s10 + $0x180] sm:$0xff]
    %v2936 = vld [vmem:[%s10 + $0x188] sm:$0xff]
    %v2937 = vld [vmem:[%s10 + $0x190] sm:$0xff]
    %v2938 = vld [vmem:[%s10 + $0x198] sm:$0xff]
    %v2939 = vld [vmem:[%s10 + $0x1a0] sm:$0xff]
    %v2940 = vld [vmem:[%s10 + $0x1a8] sm:$0xff]
    %v2941 = vld [vmem:[%s10 + $0x1b0] sm:$0xff]
    %v2942 = vld [vmem:[%s10 + $0x1b8] sm:$0xff]
    %v2943 = vld [vmem:[%s10 + $0x1c0] sm:$0xff]
    %v2944 = vld [vmem:[%s10 + $0x1c8] sm:$0xff]
    %v2945 = vld [vmem:[%s10 + $0x1d0] sm:$0xff]
    %v2946 = vld [vmem:[%s10 + $0x1d8] sm:$0xff]
    %v2947 = vld [vmem:[%s10 + $0x1e0] sm:$0xff]
    %v2948 = vld [vmem:[%s10 + $0x1e8] sm:$0xff]
    %v2949 = vld [vmem:[%s10 + $0x1f0] sm:$0xff]
    %v2950 = vld [vmem:[%s10 + $0x1f8] sm:$0xff]
    %v2951 = vld [vmem:[%s10 + $0x200] sm:$0xff]
    %v2952 = vld [vmem:[%s10 + $0x208] sm:$0xff]
    %v2953 = vld [vmem:[%s10 + $0x210] sm:$0xff]
    %v2954 = vld [vmem:[%s10 + $0x218] sm:$0xff]
    %v2955 = vld [vmem:[%s10 + $0x220] sm:$0xff]
    %v2956 = vld [vmem:[%s10 + $0x228] sm:$0xff]
    %v2957 = vld [vmem:[%s10 + $0x230] sm:$0xff]
    %v2958 = vld [vmem:[%s10 + $0x238] sm:$0xff]
    %v2959 = vld [vmem:[%s10 + $0x240] sm:$0xff]
    %v2960 = vld [vmem:[%s10 + $0x248] sm:$0xff]
    %v2961 = vld [vmem:[%s10 + $0x250] sm:$0xff]
    %v2962 = vld [vmem:[%s10 + $0x258] sm:$0xff]
    %v2963 = vld [vmem:[%s10 + $0x260] sm:$0xff]
    %v2964 = vld [vmem:[%s10 + $0x268] sm:$0xff]
    %v2965 = vld [vmem:[%s10 + $0x270] sm:$0xff]
    %v2966 = vld [vmem:[%s10 + $0x278] sm:$0xff]
    %v2967 = vld [vmem:[%s10 + $0x280] sm:$0xff]
    %v2968 = vld [vmem:[%s10 + $0x288] sm:$0xff]
    %v2969 = vld [vmem:[%s10 + $0x290] sm:$0xff]
    %v2970 = vld [vmem:[%s10 + $0x298] sm:$0xff]
    %v2971 = vld [vmem:[%s10 + $0x2a0] sm:$0xff]
    %v2972 = vld [vmem:[%s10 + $0x2a8] sm:$0xff]
    %v2973 = vld [vmem:[%s10 + $0x2b0] sm:$0xff]
    %v2974 = vld [vmem:[%s10 + $0x2b8] sm:$0xff]
    %v2975 = vld [vmem:[%s10 + $0x2c0] sm:$0xff]
    %v2976 = vld [vmem:[%s10 + $0x2c8] sm:$0xff]
    %v2977 = vld [vmem:[%s10 + $0x2d0] sm:$0xff]
    %v2978 = vld [vmem:[%s10 + $0x2d8] sm:$0xff]
    %v2979 = vld [vmem:[%s10 + $0x2e0] sm:$0xff]
    %v2980 = vld [vmem:[%s10 + $0x2e8] sm:$0xff]
    %v2981 = vld [vmem:[%s10 + $0x2f0] sm:$0xff]
    %v2982 = vld [vmem:[%s10 + $0x2f8] sm:$0xff]
    %v2983 = vld [vmem:[%s10 + $0x300] sm:$0xff]
    %v2984 = vld [vmem:[%s10 + $0x308] sm:$0xff]
    %v2985 = vld [vmem:[%s10 + $0x310] sm:$0xff]
    %v2986 = vld [vmem:[%s10 + $0x318] sm:$0xff]
    %v2987 = vld [vmem:[%s10 + $0x320] sm:$0xff]
    %v2988 = vld [vmem:[%s10 + $0x328] sm:$0xff]
    %v2989 = vld [vmem:[%s10 + $0x330] sm:$0xff]
    %v2990 = vld [vmem:[%s10 + $0x338] sm:$0xff]
    %v2991 = vld [vmem:[%s10 + $0x340] sm:$0xff]
    %v2992 = vld [vmem:[%s10 + $0x348] sm:$0xff]
    %v2993 = vld [vmem:[%s10 + $0x350] sm:$0xff]
    %v2994 = vld [vmem:[%s10 + $0x358] sm:$0xff]
    %v2995 = vld [vmem:[%s10 + $0x360] sm:$0xff]
    %v2996 = vld [vmem:[%s10 + $0x368] sm:$0xff]
    %v2997 = vld [vmem:[%s10 + $0x370] sm:$0xff]
    %v2998 = vld [vmem:[%s10 + $0x378] sm:$0xff]
    %v2999 = vld [vmem:[%s10 + $0x380] sm:$0xff]
    %v3000 = vld [vmem:[%s10 + $0x388] sm:$0xff]
    %v3001 = vld [vmem:[%s10 + $0x390] sm:$0xff]
    %v3002 = vld [vmem:[%s10 + $0x398] sm:$0xff]
    %v3003 = vld [vmem:[%s10 + $0x3a0] sm:$0xff]
    %v3004 = vld [vmem:[%s10 + $0x3a8] sm:$0xff]
    %v3005 = vld [vmem:[%s10 + $0x3b0] sm:$0xff]
    %v3006 = vld [vmem:[%s10 + $0x3b8] sm:$0xff]
    %v3007 = vld [vmem:[%s10 + $0x3c0] sm:$0xff]
    %v3008 = vld [vmem:[%s10 + $0x3c8] sm:$0xff]
    %v3009 = vld [vmem:[%s10 + $0x3d0] sm:$0xff]
    %v3010 = vld [vmem:[%s10 + $0x3d8] sm:$0xff]
    %v3011 = vld [vmem:[%s10 + $0x3e0] sm:$0xff]
    %v3012 = vld [vmem:[%s10 + $0x3e8] sm:$0xff]
    %v3013 = vld [vmem:[%s10 + $0x3f0] sm:$0xff]
    %v3014 = vld [vmem:[%s10 + $0x3f8] sm:$0xff]
    %v3015 = vld [vmem:[%s10 + $0x400] sm:$0xff]
    %v3016 = vld [vmem:[%s10 + $0x408] sm:$0xff]
    %v3017 = vld [vmem:[%s10 + $0x410] sm:$0xff]
    %v3018 = vld [vmem:[%s10 + $0x418] sm:$0xff]
    %v3019 = vld [vmem:[%s10 + $0x420] sm:$0xff]
    %v3020 = vld [vmem:[%s10 + $0x428] sm:$0xff]
    %v3021 = vld [vmem:[%s10 + $0x430] sm:$0xff]
    %v3022 = vld [vmem:[%s10 + $0x438] sm:$0xff]
    %v3023 = vld [vmem:[%s10 + $0x440] sm:$0xff]
    %v3024 = vld [vmem:[%s10 + $0x448] sm:$0xff]
    %v3025 = vld [vmem:[%s10 + $0x450] sm:$0xff]
    %v3026 = vld [vmem:[%s10 + $0x458] sm:$0xff]
    %v3027 = vld [vmem:[%s10 + $0x460] sm:$0xff]
    %v3028 = vld [vmem:[%s10 + $0x468] sm:$0xff]
    %v3029 = vld [vmem:[%s10 + $0x470] sm:$0xff]
    %v3030 = vld [vmem:[%s10 + $0x478] sm:$0xff]
    %v3031 = vld [vmem:[%s10 + $0x480] sm:$0xff]
    %v3032 = vld [vmem:[%s10 + $0x488] sm:$0xff]
    %v3033 = vld [vmem:[%s10 + $0x490] sm:$0xff]
    %v3034 = vld [vmem:[%s10 + $0x498] sm:$0xff]
    %v3035 = vld [vmem:[%s10 + $0x4a0] sm:$0x33]
    %v3036 = vld [vmem:[%s10 + $0x4a8] sm:$0x33]
    %v3037 = vld [vmem:[%s10 + $0x4b0] sm:$0x33]
    %v3038 = vld [vmem:[%s10 + $0x4b8] sm:$0x33]
    %v3039 = vld [vmem:[%s11] sm:$0xff]
    %v3041 = vlaneseq
    %v3042 = vshrl.u32 %v3041, 7
    %v3043 = vsub.s32 0, %v3042
    %v3044 = vrot.slane %v3039, %v3043
    %v3045 = vlaneseq
    %v3046 = vshrl.u32 %v3045, 7
    %v3047 = vsub.s32 1, %v3046
    %v3048 = vrot.slane %v3039, %v3047
    %v3049 = vlaneseq
    %v3050 = vshrl.u32 %v3049, 7
    %v3051 = vsub.s32 2, %v3050
    %v3052 = vrot.slane %v3039, %v3051
    %v3053 = vlaneseq
    %v3054 = vshrl.u32 %v3053, 7
    %v3055 = vsub.s32 3, %v3054
    %v3056 = vrot.slane %v3039, %v3055
    %v3057 = vlaneseq
    %v3058 = vshrl.u32 %v3057, 7
    %v3059 = vsub.s32 4, %v3058
    %v3060 = vrot.slane %v3039, %v3059
    %v3061 = vlaneseq
    %v3062 = vshrl.u32 %v3061, 7
    %v3063 = vsub.s32 5, %v3062
    %v3064 = vrot.slane %v3039, %v3063
    %v3065 = vlaneseq
    %v3066 = vshrl.u32 %v3065, 7
    %v3067 = vsub.s32 6, %v3066
    %v3068 = vrot.slane %v3039, %v3067
    %v3069 = vlaneseq
    %v3070 = vshrl.u32 %v3069, 7
    %v3071 = vsub.s32 7, %v3070
    %v3072 = vrot.slane %v3039, %v3071
    %v3233 = vunpack.c.l.b16 %v2887
    %v3234 = vunpack.c.h.b16 %v2887
    %v3235 = vunpack.c.l.b16 %v2888
    %v3236 = vunpack.c.h.b16 %v2888
    %v3237 = vunpack.c.l.b16 %v2889
    %v3238 = vunpack.c.h.b16 %v2889
    %v3239 = vunpack.c.l.b16 %v2890
    %v3240 = vunpack.c.h.b16 %v2890
    %v3241 = vunpack.c.l.b16 %v2891
    %v3242 = vunpack.c.h.b16 %v2891
    %v3243 = vunpack.c.l.b16 %v2892
    %v3244 = vunpack.c.h.b16 %v2892
    %v3245 = vunpack.c.l.b16 %v2893
    %v3246 = vunpack.c.h.b16 %v2893
    %v3247 = vunpack.c.l.b16 %v2894
    %v3248 = vunpack.c.h.b16 %v2894
    %v3249 = vunpack.c.l.b16 %v2895
    %v3250 = vunpack.c.h.b16 %v2895
    %v3251 = vunpack.c.l.b16 %v2896
    %v3252 = vunpack.c.h.b16 %v2896
    %v3253 = vunpack.c.l.b16 %v2897
    %v3254 = vunpack.c.h.b16 %v2897
    %v3255 = vunpack.c.l.b16 %v2898
    %v3256 = vunpack.c.h.b16 %v2898
    %v3257 = vunpack.c.l.b16 %v2899
    %v3258 = vunpack.c.h.b16 %v2899
    %v3259 = vunpack.c.l.b16 %v2900
    %v3260 = vunpack.c.h.b16 %v2900
    %v3261 = vunpack.c.l.b16 %v2901
    %v3262 = vunpack.c.h.b16 %v2901
    %v3263 = vunpack.c.l.b16 %v2902
    %v3264 = vunpack.c.h.b16 %v2902
    %v3265 = vunpack.c.l.b16 %v2903
    %v3266 = vunpack.c.h.b16 %v2903
    %v3267 = vunpack.c.l.b16 %v2904
    %v3268 = vunpack.c.h.b16 %v2904
    %v3269 = vunpack.c.l.b16 %v2905
    %v3270 = vunpack.c.h.b16 %v2905
    %v3271 = vunpack.c.l.b16 %v2906
    %v3272 = vunpack.c.h.b16 %v2906
    %v3273 = vunpack.c.l.b16 %v2907
    %v3274 = vunpack.c.h.b16 %v2907
    %v3275 = vunpack.c.l.b16 %v2908
    %v3276 = vunpack.c.h.b16 %v2908
    %v3277 = vunpack.c.l.b16 %v2909
    %v3278 = vunpack.c.h.b16 %v2909
    %v3279 = vunpack.c.l.b16 %v2910
    %v3280 = vunpack.c.h.b16 %v2910
    %v3281 = vunpack.c.l.b16 %v2911
    %v3282 = vunpack.c.h.b16 %v2911
    %v3283 = vunpack.c.l.b16 %v2912
    %v3284 = vunpack.c.h.b16 %v2912
    %v3285 = vunpack.c.l.b16 %v2913
    %v3286 = vunpack.c.h.b16 %v2913
    %v3287 = vunpack.c.l.b16 %v2914
    %v3288 = vunpack.c.h.b16 %v2914
    %v3289 = vunpack.c.l.b16 %v2915
    %v3290 = vunpack.c.h.b16 %v2915
    %v3291 = vunpack.c.l.b16 %v2916
    %v3292 = vunpack.c.h.b16 %v2916
    %v3293 = vunpack.c.l.b16 %v2917
    %v3294 = vunpack.c.h.b16 %v2917
    %v3295 = vunpack.c.l.b16 %v2918
    %v3296 = vunpack.c.h.b16 %v2918
    %v3297 = vunpack.c.l.b16 %v2919
    %v3298 = vunpack.c.h.b16 %v2919
    %v3299 = vunpack.c.l.b16 %v2920
    %v3300 = vunpack.c.h.b16 %v2920
    %v3301 = vunpack.c.l.b16 %v2921
    %v3302 = vunpack.c.h.b16 %v2921
    %v3303 = vunpack.c.l.b16 %v2922
    %v3304 = vunpack.c.h.b16 %v2922
    %v3305 = vunpack.c.l.b16 %v2923
    %v3306 = vunpack.c.h.b16 %v2923
    %v3307 = vunpack.c.l.b16 %v2924
    %v3308 = vunpack.c.h.b16 %v2924
    %v3309 = vunpack.c.l.b16 %v2925
    %v3310 = vunpack.c.h.b16 %v2925
    %v3311 = vunpack.c.l.b16 %v2926
    %v3312 = vunpack.c.h.b16 %v2926
    %v3313 = vunpack.c.l.b16 %v2927
    %v3314 = vunpack.c.h.b16 %v2927
    %v3315 = vunpack.c.l.b16 %v2928
    %v3316 = vunpack.c.h.b16 %v2928
    %v3317 = vunpack.c.l.b16 %v2929
    %v3318 = vunpack.c.h.b16 %v2929
    %v3319 = vunpack.c.l.b16 %v2930
    %v3320 = vunpack.c.h.b16 %v2930
    %v3321 = vunpack.c.l.b16 %v2931
    %v3322 = vunpack.c.h.b16 %v2931
    %v3323 = vunpack.c.l.b16 %v2932
    %v3324 = vunpack.c.h.b16 %v2932
    %v3325 = vunpack.c.l.b16 %v2933
    %v3326 = vunpack.c.h.b16 %v2933
    %v3327 = vunpack.c.l.b16 %v2934
    %v3328 = vunpack.c.h.b16 %v2934
    %v3329 = vunpack.c.l.b16 %v2935
    %v3330 = vunpack.c.h.b16 %v2935
    %v3331 = vunpack.c.l.b16 %v2936
    %v3332 = vunpack.c.h.b16 %v2936
    %v3333 = vunpack.c.l.b16 %v2937
    %v3334 = vunpack.c.h.b16 %v2937
    %v3335 = vunpack.c.l.b16 %v2938
    %v3336 = vunpack.c.h.b16 %v2938
    %v3337 = vunpack.c.l.b16 %v2939
    %v3338 = vunpack.c.h.b16 %v2939
    %v3339 = vunpack.c.l.b16 %v2940
    %v3340 = vunpack.c.h.b16 %v2940
    %v3341 = vunpack.c.l.b16 %v2941
    %v3342 = vunpack.c.h.b16 %v2941
    %v3343 = vunpack.c.l.b16 %v2942
    %v3344 = vunpack.c.h.b16 %v2942
    %v3345 = vunpack.c.l.b16 %v2943
    %v3346 = vunpack.c.h.b16 %v2943
    %v3347 = vunpack.c.l.b16 %v2944
    %v3348 = vunpack.c.h.b16 %v2944
    %v3349 = vunpack.c.l.b16 %v2945
    %v3350 = vunpack.c.h.b16 %v2945
    %v3351 = vunpack.c.l.b16 %v2946
    %v3352 = vunpack.c.h.b16 %v2946
    %v3353 = vunpack.c.l.b16 %v2947
    %v3354 = vunpack.c.h.b16 %v2947
    %v3355 = vunpack.c.l.b16 %v2948
    %v3356 = vunpack.c.h.b16 %v2948
    %v3357 = vunpack.c.l.b16 %v2949
    %v3358 = vunpack.c.h.b16 %v2949
    %v3359 = vunpack.c.l.b16 %v2950
    %v3360 = vunpack.c.h.b16 %v2950
    %v3361 = vunpack.c.l.b16 %v2951
    %v3362 = vunpack.c.h.b16 %v2951
    %v3363 = vunpack.c.l.b16 %v2952
    %v3364 = vunpack.c.h.b16 %v2952
    %v3365 = vunpack.c.l.b16 %v2953
    %v3366 = vunpack.c.h.b16 %v2953
    %v3367 = vunpack.c.l.b16 %v2954
    %v3368 = vunpack.c.h.b16 %v2954
    %v3369 = vunpack.c.l.b16 %v2955
    %v3370 = vunpack.c.h.b16 %v2955
    %v3371 = vunpack.c.l.b16 %v2956
    %v3372 = vunpack.c.h.b16 %v2956
    %v3373 = vunpack.c.l.b16 %v2957
    %v3374 = vunpack.c.h.b16 %v2957
    %v3375 = vunpack.c.l.b16 %v2958
    %v3376 = vunpack.c.h.b16 %v2958
    %v3377 = vunpack.c.l.b16 %v2959
    %v3378 = vunpack.c.h.b16 %v2959
    %v3379 = vunpack.c.l.b16 %v2960
    %v3380 = vunpack.c.h.b16 %v2960
    %v3381 = vunpack.c.l.b16 %v2961
    %v3382 = vunpack.c.h.b16 %v2961
    %v3383 = vunpack.c.l.b16 %v2962
    %v3384 = vunpack.c.h.b16 %v2962
    %v3385 = vunpack.c.l.b16 %v2963
    %v3386 = vunpack.c.h.b16 %v2963
    %v3387 = vunpack.c.l.b16 %v2964
    %v3388 = vunpack.c.h.b16 %v2964
    %v3389 = vunpack.c.l.b16 %v2965
    %v3390 = vunpack.c.h.b16 %v2965
    %v3391 = vunpack.c.l.b16 %v2966
    %v3392 = vunpack.c.h.b16 %v2966
    %v3393 = vunpack.c.l.b16 %v2967
    %v3394 = vunpack.c.h.b16 %v2967
    %v3395 = vunpack.c.l.b16 %v2968
    %v3396 = vunpack.c.h.b16 %v2968
    %v3397 = vunpack.c.l.b16 %v2969
    %v3398 = vunpack.c.h.b16 %v2969
    %v3399 = vunpack.c.l.b16 %v2970
    %v3400 = vunpack.c.h.b16 %v2970
    %v3401 = vunpack.c.l.b16 %v2971
    %v3402 = vunpack.c.h.b16 %v2971
    %v3403 = vunpack.c.l.b16 %v2972
    %v3404 = vunpack.c.h.b16 %v2972
    %v3405 = vunpack.c.l.b16 %v2973
    %v3406 = vunpack.c.h.b16 %v2973
    %v3407 = vunpack.c.l.b16 %v2974
    %v3408 = vunpack.c.h.b16 %v2974
    %v3409 = vunpack.c.l.b16 %v2975
    %v3410 = vunpack.c.h.b16 %v2975
    %v3411 = vunpack.c.l.b16 %v2976
    %v3412 = vunpack.c.h.b16 %v2976
    %v3413 = vunpack.c.l.b16 %v2977
    %v3414 = vunpack.c.h.b16 %v2977
    %v3415 = vunpack.c.l.b16 %v2978
    %v3416 = vunpack.c.h.b16 %v2978
    %v3417 = vunpack.c.l.b16 %v2979
    %v3418 = vunpack.c.h.b16 %v2979
    %v3419 = vunpack.c.l.b16 %v2980
    %v3420 = vunpack.c.h.b16 %v2980
    %v3421 = vunpack.c.l.b16 %v2981
    %v3422 = vunpack.c.h.b16 %v2981
    %v3423 = vunpack.c.l.b16 %v2982
    %v3424 = vunpack.c.h.b16 %v2982
    %v3425 = vunpack.c.l.b16 %v2983
    %v3426 = vunpack.c.h.b16 %v2983
    %v3427 = vunpack.c.l.b16 %v2984
    %v3428 = vunpack.c.h.b16 %v2984
    %v3429 = vunpack.c.l.b16 %v2985
    %v3430 = vunpack.c.h.b16 %v2985
    %v3431 = vunpack.c.l.b16 %v2986
    %v3432 = vunpack.c.h.b16 %v2986
    %v3433 = vunpack.c.l.b16 %v2987
    %v3434 = vunpack.c.h.b16 %v2987
    %v3435 = vunpack.c.l.b16 %v2988
    %v3436 = vunpack.c.h.b16 %v2988
    %v3437 = vunpack.c.l.b16 %v2989
    %v3438 = vunpack.c.h.b16 %v2989
    %v3439 = vunpack.c.l.b16 %v2990
    %v3440 = vunpack.c.h.b16 %v2990
    %v3441 = vunpack.c.l.b16 %v2991
    %v3442 = vunpack.c.h.b16 %v2991
    %v3443 = vunpack.c.l.b16 %v2992
    %v3444 = vunpack.c.h.b16 %v2992
    %v3445 = vunpack.c.l.b16 %v2993
    %v3446 = vunpack.c.h.b16 %v2993
    %v3447 = vunpack.c.l.b16 %v2994
    %v3448 = vunpack.c.h.b16 %v2994
    %v3449 = vunpack.c.l.b16 %v2995
    %v3450 = vunpack.c.h.b16 %v2995
    %v3451 = vunpack.c.l.b16 %v2996
    %v3452 = vunpack.c.h.b16 %v2996
    %v3453 = vunpack.c.l.b16 %v2997
    %v3454 = vunpack.c.h.b16 %v2997
    %v3455 = vunpack.c.l.b16 %v2998
    %v3456 = vunpack.c.h.b16 %v2998
    %v3457 = vunpack.c.l.b16 %v2999
    %v3458 = vunpack.c.h.b16 %v2999
    %v3459 = vunpack.c.l.b16 %v3000
    %v3460 = vunpack.c.h.b16 %v3000
    %v3461 = vunpack.c.l.b16 %v3001
    %v3462 = vunpack.c.h.b16 %v3001
    %v3463 = vunpack.c.l.b16 %v3002
    %v3464 = vunpack.c.h.b16 %v3002
    %v3465 = vunpack.c.l.b16 %v3003
    %v3466 = vunpack.c.h.b16 %v3003
    %v3467 = vunpack.c.l.b16 %v3004
    %v3468 = vunpack.c.h.b16 %v3004
    %v3469 = vunpack.c.l.b16 %v3005
    %v3470 = vunpack.c.h.b16 %v3005
    %v3471 = vunpack.c.l.b16 %v3006
    %v3472 = vunpack.c.h.b16 %v3006
    %v3473 = vunpack.c.l.b16 %v3007
    %v3474 = vunpack.c.h.b16 %v3007
    %v3475 = vunpack.c.l.b16 %v3008
    %v3476 = vunpack.c.h.b16 %v3008
    %v3477 = vunpack.c.l.b16 %v3009
    %v3478 = vunpack.c.h.b16 %v3009
    %v3479 = vunpack.c.l.b16 %v3010
    %v3480 = vunpack.c.h.b16 %v3010
    %v3481 = vunpack.c.l.b16 %v3011
    %v3482 = vunpack.c.h.b16 %v3011
    %v3483 = vunpack.c.l.b16 %v3012
    %v3484 = vunpack.c.h.b16 %v3012
    %v3485 = vunpack.c.l.b16 %v3013
    %v3486 = vunpack.c.h.b16 %v3013
    %v3487 = vunpack.c.l.b16 %v3014
    %v3488 = vunpack.c.h.b16 %v3014
    %v3489 = vunpack.c.l.b16 %v3015
    %v3490 = vunpack.c.h.b16 %v3015
    %v3491 = vunpack.c.l.b16 %v3016
    %v3492 = vunpack.c.h.b16 %v3016
    %v3493 = vunpack.c.l.b16 %v3017
    %v3494 = vunpack.c.h.b16 %v3017
    %v3495 = vunpack.c.l.b16 %v3018
    %v3496 = vunpack.c.h.b16 %v3018
    %v3497 = vunpack.c.l.b16 %v3019
    %v3498 = vunpack.c.h.b16 %v3019
    %v3499 = vunpack.c.l.b16 %v3020
    %v3500 = vunpack.c.h.b16 %v3020
    %v3501 = vunpack.c.l.b16 %v3021
    %v3502 = vunpack.c.h.b16 %v3021
    %v3503 = vunpack.c.l.b16 %v3022
    %v3504 = vunpack.c.h.b16 %v3022
    %v3505 = vunpack.c.l.b16 %v3023
    %v3506 = vunpack.c.h.b16 %v3023
    %v3507 = vunpack.c.l.b16 %v3024
    %v3508 = vunpack.c.h.b16 %v3024
    %v3509 = vunpack.c.l.b16 %v3025
    %v3510 = vunpack.c.h.b16 %v3025
    %v3511 = vunpack.c.l.b16 %v3026
    %v3512 = vunpack.c.h.b16 %v3026
    %v3513 = vunpack.c.l.b16 %v3027
    %v3514 = vunpack.c.h.b16 %v3027
    %v3515 = vunpack.c.l.b16 %v3028
    %v3516 = vunpack.c.h.b16 %v3028
    %v3517 = vunpack.c.l.b16 %v3029
    %v3518 = vunpack.c.h.b16 %v3029
    %v3519 = vunpack.c.l.b16 %v3030
    %v3520 = vunpack.c.h.b16 %v3030
    %v3521 = vunpack.c.l.b16 %v3031
    %v3522 = vunpack.c.h.b16 %v3031
    %v3523 = vunpack.c.l.b16 %v3032
    %v3524 = vunpack.c.h.b16 %v3032
    %v3525 = vunpack.c.l.b16 %v3033
    %v3526 = vunpack.c.h.b16 %v3033
    %v3527 = vunpack.c.l.b16 %v3034
    %v3528 = vunpack.c.h.b16 %v3034
    %v3529 = vunpack.c.l.b16 %v3035
    %v3530 = vunpack.c.h.b16 %v3035
    %v3531 = vunpack.c.l.b16 %v3036
    %v3532 = vunpack.c.h.b16 %v3036
    %v3533 = vunpack.c.l.b16 %v3037
    %v3534 = vunpack.c.h.b16 %v3037
    %v3535 = vunpack.c.l.b16 %v3038
    %v3536 = vunpack.c.h.b16 %v3038
    %v3537 = vpack.c.b16 %v3241, %v3233
    %v3538 = vpack.c.b16 %v3242, %v3234
    %v3539 = vpack.c.b16 %v3243, %v3235
    %v3540 = vpack.c.b16 %v3244, %v3236
    %v3541 = vpack.c.b16 %v3245, %v3237
    %v3542 = vpack.c.b16 %v3246, %v3238
    %v3543 = vpack.c.b16 %v3247, %v3239
    %v3544 = vpack.c.b16 %v3248, %v3240
    %v3545 = vpack.c.b16 %v3257, %v3249
    %v3546 = vpack.c.b16 %v3258, %v3250
    %v3547 = vpack.c.b16 %v3259, %v3251
    %v3548 = vpack.c.b16 %v3260, %v3252
    %v3549 = vpack.c.b16 %v3261, %v3253
    %v3550 = vpack.c.b16 %v3262, %v3254
    %v3551 = vpack.c.b16 %v3263, %v3255
    %v3552 = vpack.c.b16 %v3264, %v3256
    %v3553 = vpack.c.b16 %v3273, %v3265
    %v3554 = vpack.c.b16 %v3274, %v3266
    %v3555 = vpack.c.b16 %v3275, %v3267
    %v3556 = vpack.c.b16 %v3276, %v3268
    %v3557 = vpack.c.b16 %v3277, %v3269
    %v3558 = vpack.c.b16 %v3278, %v3270
    %v3559 = vpack.c.b16 %v3279, %v3271
    %v3560 = vpack.c.b16 %v3280, %v3272
    %v3561 = vpack.c.b16 %v3289, %v3281
    %v3562 = vpack.c.b16 %v3290, %v3282
    %v3563 = vpack.c.b16 %v3291, %v3283
    %v3564 = vpack.c.b16 %v3292, %v3284
    %v3565 = vpack.c.b16 %v3293, %v3285
    %v3566 = vpack.c.b16 %v3294, %v3286
    %v3567 = vpack.c.b16 %v3295, %v3287
    %v3568 = vpack.c.b16 %v3296, %v3288
    %v3569 = vpack.c.b16 %v3305, %v3297
    %v3570 = vpack.c.b16 %v3306, %v3298
    %v3571 = vpack.c.b16 %v3307, %v3299
    %v3572 = vpack.c.b16 %v3308, %v3300
    %v3573 = vpack.c.b16 %v3309, %v3301
    %v3574 = vpack.c.b16 %v3310, %v3302
    %v3575 = vpack.c.b16 %v3311, %v3303
    %v3576 = vpack.c.b16 %v3312, %v3304
    %v3577 = vpack.c.b16 %v3321, %v3313
    %v3578 = vpack.c.b16 %v3322, %v3314
    %v3579 = vpack.c.b16 %v3323, %v3315
    %v3580 = vpack.c.b16 %v3324, %v3316
    %v3581 = vpack.c.b16 %v3325, %v3317
    %v3582 = vpack.c.b16 %v3326, %v3318
    %v3583 = vpack.c.b16 %v3327, %v3319
    %v3584 = vpack.c.b16 %v3328, %v3320
    %v3585 = vpack.c.b16 %v3337, %v3329
    %v3586 = vpack.c.b16 %v3338, %v3330
    %v3587 = vpack.c.b16 %v3339, %v3331
    %v3588 = vpack.c.b16 %v3340, %v3332
    %v3589 = vpack.c.b16 %v3341, %v3333
    %v3590 = vpack.c.b16 %v3342, %v3334
    %v3591 = vpack.c.b16 %v3343, %v3335
    %v3592 = vpack.c.b16 %v3344, %v3336
    %v3593 = vpack.c.b16 %v3353, %v3345
    %v3594 = vpack.c.b16 %v3354, %v3346
    %v3595 = vpack.c.b16 %v3355, %v3347
    %v3596 = vpack.c.b16 %v3356, %v3348
    %v3597 = vpack.c.b16 %v3357, %v3349
    %v3598 = vpack.c.b16 %v3358, %v3350
    %v3599 = vpack.c.b16 %v3359, %v3351
    %v3600 = vpack.c.b16 %v3360, %v3352
    %v3601 = vpack.c.b16 %v3369, %v3361
    %v3602 = vpack.c.b16 %v3370, %v3362
    %v3603 = vpack.c.b16 %v3371, %v3363
    %v3604 = vpack.c.b16 %v3372, %v3364
    %v3605 = vpack.c.b16 %v3373, %v3365
    %v3606 = vpack.c.b16 %v3374, %v3366
    %v3607 = vpack.c.b16 %v3375, %v3367
    %v3608 = vpack.c.b16 %v3376, %v3368
    %v3609 = vpack.c.b16 %v3385, %v3377
    %v3610 = vpack.c.b16 %v3386, %v3378
    %v3611 = vpack.c.b16 %v3387, %v3379
    %v3612 = vpack.c.b16 %v3388, %v3380
    %v3613 = vpack.c.b16 %v3389, %v3381
    %v3614 = vpack.c.b16 %v3390, %v3382
    %v3615 = vpack.c.b16 %v3391, %v3383
    %v3616 = vpack.c.b16 %v3392, %v3384
    %v3617 = vpack.c.b16 %v3401, %v3393
    %v3618 = vpack.c.b16 %v3402, %v3394
    %v3619 = vpack.c.b16 %v3403, %v3395
    %v3620 = vpack.c.b16 %v3404, %v3396
    %v3621 = vpack.c.b16 %v3405, %v3397
    %v3622 = vpack.c.b16 %v3406, %v3398
    %v3623 = vpack.c.b16 %v3407, %v3399
    %v3624 = vpack.c.b16 %v3408, %v3400
    %v3625 = vpack.c.b16 %v3417, %v3409
    %v3626 = vpack.c.b16 %v3418, %v3410
    %v3627 = vpack.c.b16 %v3419, %v3411
    %v3628 = vpack.c.b16 %v3420, %v3412
    %v3629 = vpack.c.b16 %v3421, %v3413
    %v3630 = vpack.c.b16 %v3422, %v3414
    %v3631 = vpack.c.b16 %v3423, %v3415
    %v3632 = vpack.c.b16 %v3424, %v3416
    %v3633 = vpack.c.b16 %v3433, %v3425
    %v3634 = vpack.c.b16 %v3434, %v3426
    %v3635 = vpack.c.b16 %v3435, %v3427
    %v3636 = vpack.c.b16 %v3436, %v3428
    %v3637 = vpack.c.b16 %v3437, %v3429
    %v3638 = vpack.c.b16 %v3438, %v3430
    %v3639 = vpack.c.b16 %v3439, %v3431
    %v3640 = vpack.c.b16 %v3440, %v3432
    %v3641 = vpack.c.b16 %v3449, %v3441
    %v3642 = vpack.c.b16 %v3450, %v3442
    %v3643 = vpack.c.b16 %v3451, %v3443
    %v3644 = vpack.c.b16 %v3452, %v3444
    %v3645 = vpack.c.b16 %v3453, %v3445
    %v3646 = vpack.c.b16 %v3454, %v3446
    %v3647 = vpack.c.b16 %v3455, %v3447
    %v3648 = vpack.c.b16 %v3456, %v3448
    %v3649 = vpack.c.b16 %v3465, %v3457
    %v3650 = vpack.c.b16 %v3466, %v3458
    %v3651 = vpack.c.b16 %v3467, %v3459
    %v3652 = vpack.c.b16 %v3468, %v3460
    %v3653 = vpack.c.b16 %v3469, %v3461
    %v3654 = vpack.c.b16 %v3470, %v3462
    %v3655 = vpack.c.b16 %v3471, %v3463
    %v3656 = vpack.c.b16 %v3472, %v3464
    %v3657 = vpack.c.b16 %v3481, %v3473
    %v3658 = vpack.c.b16 %v3482, %v3474
    %v3659 = vpack.c.b16 %v3483, %v3475
    %v3660 = vpack.c.b16 %v3484, %v3476
    %v3661 = vpack.c.b16 %v3485, %v3477
    %v3662 = vpack.c.b16 %v3486, %v3478
    %v3663 = vpack.c.b16 %v3487, %v3479
    %v3664 = vpack.c.b16 %v3488, %v3480
    %v3665 = vpack.c.b16 %v3497, %v3489
    %v3666 = vpack.c.b16 %v3498, %v3490
    %v3667 = vpack.c.b16 %v3499, %v3491
    %v3668 = vpack.c.b16 %v3500, %v3492
    %v3669 = vpack.c.b16 %v3501, %v3493
    %v3670 = vpack.c.b16 %v3502, %v3494
    %v3671 = vpack.c.b16 %v3503, %v3495
    %v3672 = vpack.c.b16 %v3504, %v3496
    %v3673 = vpack.c.b16 %v3513, %v3505
    %v3674 = vpack.c.b16 %v3514, %v3506
    %v3675 = vpack.c.b16 %v3515, %v3507
    %v3676 = vpack.c.b16 %v3516, %v3508
    %v3677 = vpack.c.b16 %v3517, %v3509
    %v3678 = vpack.c.b16 %v3518, %v3510
    %v3679 = vpack.c.b16 %v3519, %v3511
    %v3680 = vpack.c.b16 %v3520, %v3512
    %v3681 = vpack.c.b16 %v3529, %v3521
    %v3682 = vpack.c.b16 %v3530, %v3522
    %v3683 = vpack.c.b16 %v3531, %v3523
    %v3684 = vpack.c.b16 %v3532, %v3524
    %v3685 = vpack.c.b16 %v3533, %v3525
    %v3686 = vpack.c.b16 %v3534, %v3526
    %v3687 = vpack.c.b16 %v3535, %v3527
    %v3688 = vpack.c.b16 %v3536, %v3528
    %v3834 = vsel %vm2520, %v2886, 0
    %v3837 = vsel %vm2524, %v3681, 0
    %v3840 = vsel %vm2524, %v3682, 0
    %v3843 = vsel %vm2524, %v3683, 0
    %v3846 = vsel %vm2524, %v3684, 0
    %v3849 = vsel %vm2524, %v3685, 0
    %v3852 = vsel %vm2524, %v3686, 0
    %v3855 = vsel %vm2524, %v3687, 0
    %v3858 = vsel %vm2524, %v3688, 0
    %3860 = vmatprep.subr.bf16.mxu0 %v3538
    %3861 = vmatpush1.bf16.msra.mxu0 %v3537
    %3862 = vmatprep.subr.bf16.mxu0 %v3546
    %3863 = vmatpush1.bf16.msra.mxu0 %v3545
    %3864 = vmatprep.subr.bf16.mxu0 %v3554
    %3865 = vmatpush1.bf16.msra.mxu0 %v3553
    %3866 = vmatprep.subr.bf16.mxu0 %v3562
    %3867 = vmatpush1.bf16.msra.mxu0 %v3561
    %3868 = vmatprep.subr.bf16.mxu0 %v3570
    %3869 = vmatpush1.bf16.msra.mxu0 %v3569
    %3870 = vmatprep.subr.bf16.mxu0 %v3578
    %3871 = vmatpush1.bf16.msra.mxu0 %v3577
    %3872 = vmatprep.subr.bf16.mxu0 %v3586
    %3873 = vmatpush1.bf16.msra.mxu0 %v3585
    %3874 = vmatprep.subr.bf16.mxu0 %v3594
    %3875 = vmatpush1.bf16.msra.mxu0 %v3593
    %3876 = vmatprep.subr.bf16.mxu0 %v3602
    %3877 = vmatpush1.bf16.msra.mxu0 %v3601
    %3878 = vmatprep.subr.bf16.mxu0 %v3610
    %3879 = vmatpush1.bf16.msra.mxu0 %v3609
    %3880 = vmatprep.subr.bf16.mxu0 %v3618
    %3881 = vmatpush1.bf16.msra.mxu0 %v3617
    %3882 = vmatprep.subr.bf16.mxu0 %v3626
    %3883 = vmatpush1.bf16.msra.mxu0 %v3625
    %3884 = vmatprep.subr.bf16.mxu0 %v3634
    %3885 = vmatpush1.bf16.msra.mxu0 %v3633
    %3886 = vmatprep.subr.bf16.mxu0 %v3642
    %3887 = vmatpush1.bf16.msra.mxu0 %v3641
    %3888 = vmatprep.subr.bf16.mxu0 %v3650
    %3889 = vmatpush1.bf16.msra.mxu0 %v3649
    %3890 = vmatprep.subr.bf16.mxu0 %v3658
    %3891 = vmatpush1.bf16.msra.mxu0 %v3657
    %3892 = vmatprep.mubr.bf16.mxu0 %v2885
    %3893 = vmatmul.mubr.bf16.gmra.mrb[0].mxu0 %v2884
    %v3894 = vpop.f32.mrb[0].mxu0
    %v3895 = vadd.f32 %v3044, %v3894
    %v3896 = vpop.f32.mrb[0].mxu0
    %v3897 = vadd.f32 %v3048, %v3896
    %v3898 = vpop.f32.mrb[0].mxu0
    %v3899 = vpop.f32.mrb[0].mxu0
    %3900 = vdwg.mxu0
    %3901 = vmatprep.subr.bf16.mxu0 %v3666
    %3902 = vmatpush1.bf16.msra.mxu0 %v3665
    %3903 = vmatprep.subr.bf16.mxu0 %v3674
    %3904 = vmatpush1.bf16.msra.mxu0 %v3673
    %3905 = vmatprep.subr.bf16.mxu0 %v3840
    %3906 = vmatpush1.bf16.msra.mxu0 %v3837
    %3907 = vmatprep.subr.bf16.mxu0 0
    %3908 = vmatpush1.bf16.msra.mxu0 0
    %3909 = vmatprep.subr.bf16.mxu0 0
    %3910 = vmatpush1.bf16.msra.mxu0 0
    %3911 = vmatprep.subr.bf16.mxu0 0
    %3912 = vmatpush1.bf16.msra.mxu0 0
    %3913 = vmatprep.subr.bf16.mxu0 0
    %3914 = vmatpush1.bf16.msra.mxu0 0
    %3915 = vmatprep.subr.bf16.mxu0 0
    %3916 = vmatpush1.bf16.msra.mxu0 0
    %3917 = vmatprep.subr.bf16.mxu0 0
    %3918 = vmatpush1.bf16.msra.mxu0 0
    %3919 = vmatprep.subr.bf16.mxu0 0
    %3920 = vmatpush1.bf16.msra.mxu0 0
    %3921 = vmatprep.subr.bf16.mxu0 0
    %3922 = vmatpush1.bf16.msra.mxu0 0
    %3923 = vmatprep.subr.bf16.mxu0 0
    %3924 = vmatpush1.bf16.msra.mxu0 0
    %3925 = vmatprep.subr.bf16.mxu0 0
    %3926 = vmatpush1.bf16.msra.mxu0 0
    %3927 = vmatprep.subr.bf16.mxu0 0
    %3928 = vmatpush1.bf16.msra.mxu0 0
    %3929 = vmatprep.subr.bf16.mxu0 0
    %3930 = vmatpush1.bf16.msra.mxu0 0
    %3931 = vmatprep.subr.bf16.mxu0 0
    %3932 = vmatpush1.bf16.msra.mxu0 0
    %3933 = vmatprep.mubr.bf16.mxu0 0
    %3934 = vmatmul.mubr.bf16.gmra.mrb[0].mxu0 %v3834
    %v3935 = vpop.f32.mrb[0].mxu0
    %v3936 = vadd.f32 %v3895, %v3935
    %v3937 = vpop.f32.mrb[0].mxu0
    %v3938 = vadd.f32 %v3897, %v3937
    %v3939 = vpop.f32.mrb[0].mxu0
    %v3940 = vpop.f32.mrb[0].mxu0
    %3941 = vdwg.mxu0
    %3942 = vmatprep.subr.bf16.mxu0 %v3540
    %3943 = vmatpush1.bf16.msra.mxu0 %v3539
    %3944 = vmatprep.subr.bf16.mxu0 %v3548
    %3945 = vmatpush1.bf16.msra.mxu0 %v3547
    %3946 = vmatprep.subr.bf16.mxu0 %v3556
    %3947 = vmatpush1.bf16.msra.mxu0 %v3555
    %3948 = vmatprep.subr.bf16.mxu0 %v3564
    %3949 = vmatpush1.bf16.msra.mxu0 %v3563
    %3950 = vmatprep.subr.bf16.mxu0 %v3572
    %3951 = vmatpush1.bf16.msra.mxu0 %v3571
    %3952 = vmatprep.subr.bf16.mxu0 %v3580
    %3953 = vmatpush1.bf16.msra.mxu0 %v3579
    %3954 = vmatprep.subr.bf16.mxu0 %v3588
    %3955 = vmatpush1.bf16.msra.mxu0 %v3587
    %3956 = vmatprep.subr.bf16.mxu0 %v3596
    %3957 = vmatpush1.bf16.msra.mxu0 %v3595
    %3958 = vmatprep.subr.bf16.mxu0 %v3604
    %3959 = vmatpush1.bf16.msra.mxu0 %v3603
    %3960 = vmatprep.subr.bf16.mxu0 %v3612
    %3961 = vmatpush1.bf16.msra.mxu0 %v3611
    %3962 = vmatprep.subr.bf16.mxu0 %v3620
    %3963 = vmatpush1.bf16.msra.mxu0 %v3619
    %3964 = vmatprep.subr.bf16.mxu0 %v3628
    %3965 = vmatpush1.bf16.msra.mxu0 %v3627
    %3966 = vmatprep.subr.bf16.mxu0 %v3636
    %3967 = vmatpush1.bf16.msra.mxu0 %v3635
    %3968 = vmatprep.subr.bf16.mxu0 %v3644
    %3969 = vmatpush1.bf16.msra.mxu0 %v3643
    %3970 = vmatprep.subr.bf16.mxu0 %v3652
    %3971 = vmatpush1.bf16.msra.mxu0 %v3651
    %3972 = vmatprep.subr.bf16.mxu0 %v3660
    %3973 = vmatpush1.bf16.msra.mxu0 %v3659
    %3974 = vmatprep.mubr.bf16.mxu0 %v2885
    %3975 = vmatmul.mubr.bf16.gmra.mrb[0].mxu0 %v2884
    %v3976 = vpop.f32.mrb[0].mxu0
    %v3977 = vadd.f32 %v3052, %v3976
    %v3978 = vpop.f32.mrb[0].mxu0
    %v3979 = vadd.f32 %v3056, %v3978
    %v3980 = vpop.f32.mrb[0].mxu0
    %v3981 = vpop.f32.mrb[0].mxu0
    %3982 = vdwg.mxu0
    %3983 = vmatprep.subr.bf16.mxu0 %v3668
    %3984 = vmatpush1.bf16.msra.mxu0 %v3667
    %3985 = vmatprep.subr.bf16.mxu0 %v3676
    %3986 = vmatpush1.bf16.msra.mxu0 %v3675
    %3987 = vmatprep.subr.bf16.mxu0 %v3846
    %3988 = vmatpush1.bf16.msra.mxu0 %v3843
    %3989 = vmatprep.subr.bf16.mxu0 0
    %3990 = vmatpush1.bf16.msra.mxu0 0
    %3991 = vmatprep.subr.bf16.mxu0 0
    %3992 = vmatpush1.bf16.msra.mxu0 0
    %3993 = vmatprep.subr.bf16.mxu0 0
    %3994 = vmatpush1.bf16.msra.mxu0 0
    %3995 = vmatprep.subr.bf16.mxu0 0
    %3996 = vmatpush1.bf16.msra.mxu0 0
    %3997 = vmatprep.subr.bf16.mxu0 0
    %3998 = vmatpush1.bf16.msra.mxu0 0
    %3999 = vmatprep.subr.bf16.mxu0 0
    %4000 = vmatpush1.bf16.msra.mxu0 0
    %4001 = vmatprep.subr.bf16.mxu0 0
    %4002 = vmatpush1.bf16.msra.mxu0 0
    %4003 = vmatprep.subr.bf16.mxu0 0
    %4004 = vmatpush1.bf16.msra.mxu0 0
    %4005 = vmatprep.subr.bf16.mxu0 0
    %4006 = vmatpush1.bf16.msra.mxu0 0
    %4007 = vmatprep.subr.bf16.mxu0 0
    %4008 = vmatpush1.bf16.msra.mxu0 0
    %4009 = vmatprep.subr.bf16.mxu0 0
    %4010 = vmatpush1.bf16.msra.mxu0 0
    %4011 = vmatprep.subr.bf16.mxu0 0
    %4012 = vmatpush1.bf16.msra.mxu0 0
    %4013 = vmatprep.subr.bf16.mxu0 0
    %4014 = vmatpush1.bf16.msra.mxu0 0
    %4015 = vmatprep.mubr.bf16.mxu0 0
    %4016 = vmatmul.mubr.bf16.gmra.mrb[0].mxu0 %v3834
    %v4017 = vpop.f32.mrb[0].mxu0
    %v4018 = vadd.f32 %v3977, %v4017
    %v4019 = vpop.f32.mrb[0].mxu0
    %v4020 = vadd.f32 %v3979, %v4019
    %v4021 = vpop.f32.mrb[0].mxu0
    %v4022 = vpop.f32.mrb[0].mxu0
    %4023 = vdwg.mxu0
    %4024 = vmatprep.subr.bf16.mxu0 %v3542
    %4025 = vmatpush1.bf16.msra.mxu0 %v3541
    %4026 = vmatprep.subr.bf16.mxu0 %v3550
    %4027 = vmatpush1.bf16.msra.mxu0 %v3549
    %4028 = vmatprep.subr.bf16.mxu0 %v3558
    %4029 = vmatpush1.bf16.msra.mxu0 %v3557
    %4030 = vmatprep.subr.bf16.mxu0 %v3566
    %4031 = vmatpush1.bf16.msra.mxu0 %v3565
    %4032 = vmatprep.subr.bf16.mxu0 %v3574
    %4033 = vmatpush1.bf16.msra.mxu0 %v3573
    %4034 = vmatprep.subr.bf16.mxu0 %v3582
    %4035 = vmatpush1.bf16.msra.mxu0 %v3581
    %4036 = vmatprep.subr.bf16.mxu0 %v3590
    %4037 = vmatpush1.bf16.msra.mxu0 %v3589
    %4038 = vmatprep.subr.bf16.mxu0 %v3598
    %4039 = vmatpush1.bf16.msra.mxu0 %v3597
    %4040 = vmatprep.subr.bf16.mxu0 %v3606
    %4041 = vmatpush1.bf16.msra.mxu0 %v3605
    %4042 = vmatprep.subr.bf16.mxu0 %v3614
    %4043 = vmatpush1.bf16.msra.mxu0 %v3613
    %4044 = vmatprep.subr.bf16.mxu0 %v3622
    %4045 = vmatpush1.bf16.msra.mxu0 %v3621
    %4046 = vmatprep.subr.bf16.mxu0 %v3630
    %4047 = vmatpush1.bf16.msra.mxu0 %v3629
    %4048 = vmatprep.subr.bf16.mxu0 %v3638
    %4049 = vmatpush1.bf16.msra.mxu0 %v3637
    %4050 = vmatprep.subr.bf16.mxu0 %v3646
    %4051 = vmatpush1.bf16.msra.mxu0 %v3645
    %4052 = vmatprep.subr.bf16.mxu0 %v3654
    %4053 = vmatpush1.bf16.msra.mxu0 %v3653
    %4054 = vmatprep.subr.bf16.mxu0 %v3662
    %4055 = vmatpush1.bf16.msra.mxu0 %v3661
    %4056 = vmatprep.mubr.bf16.mxu0 %v2885
    %4057 = vmatmul.mubr.bf16.gmra.mrb[0].mxu0 %v2884
    %v4058 = vpop.f32.mrb[0].mxu0
    %v4059 = vadd.f32 %v3060, %v4058
    %v4060 = vpop.f32.mrb[0].mxu0
    %v4061 = vadd.f32 %v3064, %v4060
    %v4062 = vpop.f32.mrb[0].mxu0
    %v4063 = vpop.f32.mrb[0].mxu0
    %4064 = vdwg.mxu0
    %4065 = vmatprep.subr.bf16.mxu0 %v3670
    %4066 = vmatpush1.bf16.msra.mxu0 %v3669
    %4067 = vmatprep.subr.bf16.mxu0 %v3678
    %4068 = vmatpush1.bf16.msra.mxu0 %v3677
    %4069 = vmatprep.subr.bf16.mxu0 %v3852
    %4070 = vmatpush1.bf16.msra.mxu0 %v3849
    %4071 = vmatprep.subr.bf16.mxu0 0
    %4072 = vmatpush1.bf16.msra.mxu0 0
    %4073 = vmatprep.subr.bf16.mxu0 0
    %4074 = vmatpush1.bf16.msra.mxu0 0
    %4075 = vmatprep.subr.bf16.mxu0 0
    %4076 = vmatpush1.bf16.msra.mxu0 0
    %4077 = vmatprep.subr.bf16.mxu0 0
    %4078 = vmatpush1.bf16.msra.mxu0 0
    %4079 = vmatprep.subr.bf16.mxu0 0
    %4080 = vmatpush1.bf16.msra.mxu0 0
    %4081 = vmatprep.subr.bf16.mxu0 0
    %4082 = vmatpush1.bf16.msra.mxu0 0
    %4083 = vmatprep.subr.bf16.mxu0 0
    %4084 = vmatpush1.bf16.msra.mxu0 0
    %4085 = vmatprep.subr.bf16.mxu0 0
    %4086 = vmatpush1.bf16.msra.mxu0 0
    %4087 = vmatprep.subr.bf16.mxu0 0
    %4088 = vmatpush1.bf16.msra.mxu0 0
    %4089 = vmatprep.subr.bf16.mxu0 0
    %4090 = vmatpush1.bf16.msra.mxu0 0
    %4091 = vmatprep.subr.bf16.mxu0 0
    %4092 = vmatpush1.bf16.msra.mxu0 0
    %4093 = vmatprep.subr.bf16.mxu0 0
    %4094 = vmatpush1.bf16.msra.mxu0 0
    %4095 = vmatprep.subr.bf16.mxu0 0
    %4096 = vmatpush1.bf16.msra.mxu0 0
    %4097 = vmatprep.mubr.bf16.mxu0 0
    %4098 = vmatmul.mubr.bf16.gmra.mrb[0].mxu0 %v3834
    %v4099 = vpop.f32.mrb[0].mxu0
    %v4100 = vadd.f32 %v4059, %v4099
    %v4101 = vpop.f32.mrb[0].mxu0
    %v4102 = vadd.f32 %v4061, %v4101
    %v4103 = vpop.f32.mrb[0].mxu0
    %v4104 = vpop.f32.mrb[0].mxu0
    %4105 = vdwg.mxu0
    %4106 = vmatprep.subr.bf16.mxu0 %v3544
    %4107 = vmatpush1.bf16.msra.mxu0 %v3543
    %4108 = vmatprep.subr.bf16.mxu0 %v3552
    %4109 = vmatpush1.bf16.msra.mxu0 %v3551
    %4110 = vmatprep.subr.bf16.mxu0 %v3560
    %4111 = vmatpush1.bf16.msra.mxu0 %v3559
    %4112 = vmatprep.subr.bf16.mxu0 %v3568
    %4113 = vmatpush1.bf16.msra.mxu0 %v3567
    %4114 = vmatprep.subr.bf16.mxu0 %v3576
    %4115 = vmatpush1.bf16.msra.mxu0 %v3575
    %4116 = vmatprep.subr.bf16.mxu0 %v3584
    %4117 = vmatpush1.bf16.msra.mxu0 %v3583
    %4118 = vmatprep.subr.bf16.mxu0 %v3592
    %4119 = vmatpush1.bf16.msra.mxu0 %v3591
    %4120 = vmatprep.subr.bf16.mxu0 %v3600
    %4121 = vmatpush1.bf16.msra.mxu0 %v3599
    %4122 = vmatprep.subr.bf16.mxu0 %v3608
    %4123 = vmatpush1.bf16.msra.mxu0 %v3607
    %4124 = vmatprep.subr.bf16.mxu0 %v3616
    %4125 = vmatpush1.bf16.msra.mxu0 %v3615
    %4126 = vmatprep.subr.bf16.mxu0 %v3624
    %4127 = vmatpush1.bf16.msra.mxu0 %v3623
    %4128 = vmatprep.subr.bf16.mxu0 %v3632
    %4129 = vmatpush1.bf16.msra.mxu0 %v3631
    %4130 = vmatprep.subr.bf16.mxu0 %v3640
    %4131 = vmatpush1.bf16.msra.mxu0 %v3639
    %4132 = vmatprep.subr.bf16.mxu0 %v3648
    %4133 = vmatpush1.bf16.msra.mxu0 %v3647
    %4134 = vmatprep.subr.bf16.mxu0 %v3656
    %4135 = vmatpush1.bf16.msra.mxu0 %v3655
    %4136 = vmatprep.subr.bf16.mxu0 %v3664
    %4137 = vmatpush1.bf16.msra.mxu0 %v3663
    %4138 = vmatprep.mubr.bf16.mxu0 %v2885
    %4139 = vmatmul.mubr.bf16.gmra.mrb[0].mxu0 %v2884
    %v4140 = vpop.f32.mrb[0].mxu0
    %v4141 = vadd.f32 %v3068, %v4140
    %v4142 = vpop.f32.mrb[0].mxu0
    %v4143 = vadd.f32 %v3072, %v4142
    %v4144 = vpop.f32.mrb[0].mxu0
    %v4145 = vpop.f32.mrb[0].mxu0
    %4146 = vdwg.mxu0
    %4147 = vmatprep.subr.bf16.mxu0 %v3672
    %4148 = vmatpush1.bf16.msra.mxu0 %v3671
    %4149 = vmatprep.subr.bf16.mxu0 %v3680
    %4150 = vmatpush1.bf16.msra.mxu0 %v3679
    %4151 = vmatprep.subr.bf16.mxu0 %v3858
    %4152 = vmatpush1.bf16.msra.mxu0 %v3855
    %4153 = vmatprep.subr.bf16.mxu0 0
    %4154 = vmatpush1.bf16.msra.mxu0 0
    %4155 = vmatprep.subr.bf16.mxu0 0
    %4156 = vmatpush1.bf16.msra.mxu0 0
    %4157 = vmatprep.subr.bf16.mxu0 0
    %4158 = vmatpush1.bf16.msra.mxu0 0
    %4159 = vmatprep.subr.bf16.mxu0 0
    %4160 = vmatpush1.bf16.msra.mxu0 0
    %4161 = vmatprep.subr.bf16.mxu0 0
    %4162 = vmatpush1.bf16.msra.mxu0 0
    %4163 = vmatprep.subr.bf16.mxu0 0
    %4164 = vmatpush1.bf16.msra.mxu0 0
    %4165 = vmatprep.subr.bf16.mxu0 0
    %4166 = vmatpush1.bf16.msra.mxu0 0
    %4167 = vmatprep.subr.bf16.mxu0 0
    %4168 = vmatpush1.bf16.msra.mxu0 0
    %4169 = vmatprep.subr.bf16.mxu0 0
    %4170 = vmatpush1.bf16.msra.mxu0 0
    %4171 = vmatprep.subr.bf16.mxu0 0
    %4172 = vmatpush1.bf16.msra.mxu0 0
    %4173 = vmatprep.subr.bf16.mxu0 0
    %4174 = vmatpush1.bf16.msra.mxu0 0
    %4175 = vmatprep.subr.bf16.mxu0 0
    %4176 = vmatpush1.bf16.msra.mxu0 0
    %4177 = vmatprep.subr.bf16.mxu0 0
    %4178 = vmatpush1.bf16.msra.mxu0 0
    %4179 = vmatprep.mubr.bf16.mxu0 0
    %4180 = vmatmul.mubr.bf16.gmra.mrb[0].mxu0 %v3834
    %v4181 = vpop.f32.mrb[0].mxu0
    %v4182 = vadd.f32 %v4141, %v4181
    %v4183 = vpop.f32.mrb[0].mxu0
    %v4184 = vadd.f32 %v4143, %v4183
    %v4185 = vpop.f32.mrb[0].mxu0
    %v4186 = vpop.f32.mrb[0].mxu0
    %4187 = vdwg.mxu0
    %v4188 = vmul.f32 %v3936, 0.01
    %v4189 = vmul.f32 %v3938, 0.01
    %v4190 = vmul.f32 %v4018, 0.01
    %v4191 = vmul.f32 %v4020, 0.01
    %v4192 = vmul.f32 %v4100, 0.01
    %v4193 = vmul.f32 %v4102, 0.01
    %v4194 = vmul.f32 %v4182, 0.01
    %v4195 = vmul.f32 %v4184, 0.01
    %v4196 = vmax.f32 %v3936, %v4188
    %v4197 = vmax.f32 %v3938, %v4189
    %v4198 = vmax.f32 %v4018, %v4190
    %v4199 = vmax.f32 %v4020, %v4191
    %v4200 = vmax.f32 %v4100, %v4192
    %v4201 = vmax.f32 %v4102, %v4193
    %v4202 = vmax.f32 %v4182, %v4194
    %v4203 = vmax.f32 %v4184, %v4195
    %v4204 = vpack.c.bf16 %v4196, %v4196
    %v4205 = vpack.c.bf16 %v4197, %v4197
    %v4206 = vpack.c.bf16 %v4198, %v4198
    %v4207 = vpack.c.bf16 %v4199, %v4199
    %v4208 = vpack.c.bf16 %v4200, %v4200
    %v4209 = vpack.c.bf16 %v4201, %v4201
    %v4210 = vpack.c.bf16 %v4202, %v4202
    %v4211 = vpack.c.bf16 %v4203, %v4203
    %v4212 = vld [vmem:[%s12] sm:$0xf]
    %v4213 = vld [vmem:[%s12 + $0x4] sm:$0xf]
    %v4214 = vld [vmem:[%s12 + $0x8] sm:$0xf]
    %v4215 = vld [vmem:[%s12 + $0xc] sm:$0xf]
    %v4216 = vld [vmem:[%s12 + $0x10] sm:$0xf]
    %v4217 = vld [vmem:[%s12 + $0x14] sm:$0xf]
    %v4218 = vld [vmem:[%s12 + $0x18] sm:$0xf]
    %v4219 = vld [vmem:[%s12 + $0x1c] sm:$0xf]
    %v4220 = vld [vmem:[%s12 + $0x20] sm:$0xf]
    %v4221 = vld [vmem:[%s12 + $0x24] sm:$0xf]
    %v4222 = vld [vmem:[%s12 + $0x28] sm:$0xf]
    %v4223 = vld [vmem:[%s12 + $0x2c] sm:$0xf]
    %v4224 = vld [vmem:[%s12 + $0x30] sm:$0xf]
    %v4225 = vld [vmem:[%s12 + $0x34] sm:$0xf]
    %v4226 = vld [vmem:[%s12 + $0x38] sm:$0xf]
    %v4227 = vld [vmem:[%s12 + $0x3c] sm:$0xf]
    %v4228 = vld [vmem:[%s12 + $0x40] sm:$0xf]
    %v4229 = vld [vmem:[%s12 + $0x44] sm:$0xf]
    %v4230 = vld [vmem:[%s12 + $0x48] sm:$0xf]
    %v4231 = vld [vmem:[%s12 + $0x4c] sm:$0xf]
    %v4232 = vld [vmem:[%s12 + $0x50] sm:$0xf]
    %v4233 = vld [vmem:[%s12 + $0x54] sm:$0xf]
    %v4234 = vld [vmem:[%s12 + $0x58] sm:$0xf]
    %v4235 = vld [vmem:[%s12 + $0x5c] sm:$0xf]
    %v4236 = vld [vmem:[%s12 + $0x60] sm:$0xf]
    %v4237 = vld [vmem:[%s12 + $0x64] sm:$0xf]
    %v4238 = vld [vmem:[%s12 + $0x68] sm:$0xf]
    %v4239 = vld [vmem:[%s12 + $0x6c] sm:$0xf]
    %v4240 = vld [vmem:[%s12 + $0x70] sm:$0xf]
    %v4241 = vld [vmem:[%s12 + $0x74] sm:$0xf]
    %v4242 = vld [vmem:[%s12 + $0x78] sm:$0xf]
    %v4243 = vld [vmem:[%s12 + $0x7c] sm:$0xf]
    %v4244 = vld [vmem:[%s12 + $0x80] sm:$0xf]
    %v4245 = vld [vmem:[%s12 + $0x84] sm:$0xf]
    %v4246 = vld [vmem:[%s12 + $0x88] sm:$0xf]
    %v4247 = vld [vmem:[%s12 + $0x8c] sm:$0xf]
    %v4248 = vld [vmem:[%s12 + $0x90] sm:$0xf]
    %v4249 = vld [vmem:[%s12 + $0x94] sm:$0xf]
    %v4250 = vld [vmem:[%s12 + $0x98] sm:$0xf]
    %v4251 = vld [vmem:[%s12 + $0x9c] sm:$0xf]
    %v4252 = vld [vmem:[%s12 + $0xa0] sm:$0xf]
    %v4253 = vld [vmem:[%s12 + $0xa4] sm:$0xf]
    %v4254 = vld [vmem:[%s12 + $0xa8] sm:$0xf]
    %v4255 = vld [vmem:[%s12 + $0xac] sm:$0xf]
    %v4256 = vld [vmem:[%s12 + $0xb0] sm:$0xf]
    %v4257 = vld [vmem:[%s12 + $0xb4] sm:$0xf]
    %v4258 = vld [vmem:[%s12 + $0xb8] sm:$0xf]
    %v4259 = vld [vmem:[%s12 + $0xbc] sm:$0xf]
    %v4260 = vld [vmem:[%s12 + $0xc0] sm:$0xf]
    %v4261 = vld [vmem:[%s12 + $0xc4] sm:$0xf]
    %v4262 = vld [vmem:[%s12 + $0xc8] sm:$0xf]
    %v4263 = vld [vmem:[%s12 + $0xcc] sm:$0xf]
    %v4264 = vld [vmem:[%s12 + $0xd0] sm:$0xf]
    %v4265 = vld [vmem:[%s12 + $0xd4] sm:$0xf]
    %v4266 = vld [vmem:[%s12 + $0xd8] sm:$0xf]
    %v4267 = vld [vmem:[%s12 + $0xdc] sm:$0xf]
    %v4268 = vld [vmem:[%s12 + $0xe0] sm:$0xf]
    %v4269 = vld [vmem:[%s12 + $0xe4] sm:$0xf]
    %v4270 = vld [vmem:[%s12 + $0xe8] sm:$0xf]
    %v4271 = vld [vmem:[%s12 + $0xec] sm:$0xf]
    %v4272 = vld [vmem:[%s12 + $0xf0] sm:$0xf]
    %v4273 = vld [vmem:[%s12 + $0xf4] sm:$0xf]
    %v4274 = vld [vmem:[%s12 + $0xf8] sm:$0xf]
    %v4275 = vld [vmem:[%s12 + $0xfc] sm:$0xf]
    %v4276 = vld [vmem:[%s12 + $0x100] sm:$0xf]
    %v4277 = vld [vmem:[%s12 + $0x104] sm:$0xf]
    %v4278 = vld [vmem:[%s12 + $0x108] sm:$0xf]
    %v4279 = vld [vmem:[%s12 + $0x10c] sm:$0xf]
    %v4280 = vld [vmem:[%s12 + $0x110] sm:$0xf]
    %v4281 = vld [vmem:[%s12 + $0x114] sm:$0xf]
    %v4282 = vld [vmem:[%s12 + $0x118] sm:$0xf]
    %v4283 = vld [vmem:[%s12 + $0x11c] sm:$0xf]
    %v4284 = vld [vmem:[%s12 + $0x120] sm:$0xf]
    %v4285 = vld [vmem:[%s12 + $0x124] sm:$0xf]
    %v4286 = vld [vmem:[%s12 + $0x128] sm:$0xf]
    %v4287 = vld [vmem:[%s12 + $0x12c] sm:$0xf]
    %v4288 = vld [vmem:[%s12 + $0x130] sm:$0xf]
    %v4289 = vld [vmem:[%s12 + $0x134] sm:$0xf]
    %v4290 = vld [vmem:[%s12 + $0x138] sm:$0xf]
    %v4291 = vld [vmem:[%s12 + $0x13c] sm:$0xf]
    %v4292 = vld [vmem:[%s12 + $0x140] sm:$0xf]
    %v4293 = vld [vmem:[%s12 + $0x144] sm:$0xf]
    %v4294 = vld [vmem:[%s12 + $0x148] sm:$0xf]
    %v4295 = vld [vmem:[%s12 + $0x14c] sm:$0xf]
    %v4296 = vld [vmem:[%s12 + $0x150] sm:$0xf]
    %v4297 = vld [vmem:[%s12 + $0x154] sm:$0xf]
    %v4298 = vld [vmem:[%s12 + $0x158] sm:$0xf]
    %v4299 = vld [vmem:[%s12 + $0x15c] sm:$0xf]
    %v4300 = vld [vmem:[%s12 + $0x160] sm:$0xf]
    %v4301 = vld [vmem:[%s12 + $0x164] sm:$0xf]
    %v4302 = vld [vmem:[%s12 + $0x168] sm:$0xf]
    %v4303 = vld [vmem:[%s12 + $0x16c] sm:$0xf]
    %v4304 = vld [vmem:[%s12 + $0x170] sm:$0xf]
    %v4305 = vld [vmem:[%s12 + $0x174] sm:$0xf]
    %v4306 = vld [vmem:[%s12 + $0x178] sm:$0xf]
    %v4307 = vld [vmem:[%s12 + $0x17c] sm:$0xf]
    %v4308 = vld [vmem:[%s12 + $0x180] sm:$0xf]
    %v4309 = vld [vmem:[%s12 + $0x184] sm:$0xf]
    %v4310 = vld [vmem:[%s12 + $0x188] sm:$0xf]
    %v4311 = vld [vmem:[%s12 + $0x18c] sm:$0xf]
    %v4312 = vld [vmem:[%s12 + $0x190] sm:$0xf]
    %v4313 = vld [vmem:[%s12 + $0x194] sm:$0xf]
    %v4314 = vld [vmem:[%s12 + $0x198] sm:$0xf]
    %v4315 = vld [vmem:[%s12 + $0x19c] sm:$0xf]
    %v4316 = vld [vmem:[%s12 + $0x1a0] sm:$0xf]
    %v4317 = vld [vmem:[%s12 + $0x1a4] sm:$0xf]
    %v4318 = vld [vmem:[%s12 + $0x1a8] sm:$0xf]
    %v4319 = vld [vmem:[%s12 + $0x1ac] sm:$0xf]
    %v4320 = vld [vmem:[%s12 + $0x1b0] sm:$0xf]
    %v4321 = vld [vmem:[%s12 + $0x1b4] sm:$0xf]
    %v4322 = vld [vmem:[%s12 + $0x1b8] sm:$0xf]
    %v4323 = vld [vmem:[%s12 + $0x1bc] sm:$0xf]
    %v4324 = vld [vmem:[%s12 + $0x1c0] sm:$0xf]
    %v4325 = vld [vmem:[%s12 + $0x1c4] sm:$0xf]
    %v4326 = vld [vmem:[%s12 + $0x1c8] sm:$0xf]
    %v4327 = vld [vmem:[%s12 + $0x1cc] sm:$0xf]
    %v4328 = vld [vmem:[%s12 + $0x1d0] sm:$0xf]
    %v4329 = vld [vmem:[%s12 + $0x1d4] sm:$0xf]
    %v4330 = vld [vmem:[%s12 + $0x1d8] sm:$0xf]
    %v4331 = vld [vmem:[%s12 + $0x1dc] sm:$0xf]
    %v4332 = vld [vmem:[%s12 + $0x1e0] sm:$0xf]
    %v4333 = vld [vmem:[%s12 + $0x1e4] sm:$0xf]
    %v4334 = vld [vmem:[%s12 + $0x1e8] sm:$0xf]
    %v4335 = vld [vmem:[%s12 + $0x1ec] sm:$0xf]
    %v4336 = vld [vmem:[%s12 + $0x1f0] sm:$0xf]
    %v4337 = vld [vmem:[%s13] sm:$0x1]
    %v4339 = vlaneseq
    %v4340 = vshrl.u32 %v4339, 7
    %v4341 = vsub.s32 0, %v4340
    %v4342 = vrot.slane %v4337, %v4341
    %v4469 = vunpack.c.l.b16 %v4212
    %v4470 = vunpack.c.l.b16 %v4213
    %v4471 = vunpack.c.l.b16 %v4214
    %v4472 = vunpack.c.l.b16 %v4215
    %v4473 = vunpack.c.l.b16 %v4216
    %v4474 = vunpack.c.l.b16 %v4217
    %v4475 = vunpack.c.l.b16 %v4218
    %v4476 = vunpack.c.l.b16 %v4219
    %v4477 = vunpack.c.l.b16 %v4220
    %v4478 = vunpack.c.l.b16 %v4221
    %v4479 = vunpack.c.l.b16 %v4222
    %v4480 = vunpack.c.l.b16 %v4223
    %v4481 = vunpack.c.l.b16 %v4224
    %v4482 = vunpack.c.l.b16 %v4225
    %v4483 = vunpack.c.l.b16 %v4226
    %v4484 = vunpack.c.l.b16 %v4227
    %v4485 = vunpack.c.l.b16 %v4228
    %v4486 = vunpack.c.l.b16 %v4229
    %v4487 = vunpack.c.l.b16 %v4230
    %v4488 = vunpack.c.l.b16 %v4231
    %v4489 = vunpack.c.l.b16 %v4232
    %v4490 = vunpack.c.l.b16 %v4233
    %v4491 = vunpack.c.l.b16 %v4234
    %v4492 = vunpack.c.l.b16 %v4235
    %v4493 = vunpack.c.l.b16 %v4236
    %v4494 = vunpack.c.l.b16 %v4237
    %v4495 = vunpack.c.l.b16 %v4238
    %v4496 = vunpack.c.l.b16 %v4239
    %v4497 = vunpack.c.l.b16 %v4240
    %v4498 = vunpack.c.l.b16 %v4241
    %v4499 = vunpack.c.l.b16 %v4242
    %v4500 = vunpack.c.l.b16 %v4243
    %v4501 = vunpack.c.l.b16 %v4244
    %v4502 = vunpack.c.l.b16 %v4245
    %v4503 = vunpack.c.l.b16 %v4246
    %v4504 = vunpack.c.l.b16 %v4247
    %v4505 = vunpack.c.l.b16 %v4248
    %v4506 = vunpack.c.l.b16 %v4249
    %v4507 = vunpack.c.l.b16 %v4250
    %v4508 = vunpack.c.l.b16 %v4251
    %v4509 = vunpack.c.l.b16 %v4252
    %v4510 = vunpack.c.l.b16 %v4253
    %v4511 = vunpack.c.l.b16 %v4254
    %v4512 = vunpack.c.l.b16 %v4255
    %v4513 = vunpack.c.l.b16 %v4256
    %v4514 = vunpack.c.l.b16 %v4257
    %v4515 = vunpack.c.l.b16 %v4258
    %v4516 = vunpack.c.l.b16 %v4259
    %v4517 = vunpack.c.l.b16 %v4260
    %v4518 = vunpack.c.l.b16 %v4261
    %v4519 = vunpack.c.l.b16 %v4262
    %v4520 = vunpack.c.l.b16 %v4263
    %v4521 = vunpack.c.l.b16 %v4264
    %v4522 = vunpack.c.l.b16 %v4265
    %v4523 = vunpack.c.l.b16 %v4266
    %v4524 = vunpack.c.l.b16 %v4267
    %v4525 = vunpack.c.l.b16 %v4268
    %v4526 = vunpack.c.l.b16 %v4269
    %v4527 = vunpack.c.l.b16 %v4270
    %v4528 = vunpack.c.l.b16 %v4271
    %v4529 = vunpack.c.l.b16 %v4272
    %v4530 = vunpack.c.l.b16 %v4273
    %v4531 = vunpack.c.l.b16 %v4274
    %v4532 = vunpack.c.l.b16 %v4275
    %v4533 = vunpack.c.l.b16 %v4276
    %v4534 = vunpack.c.l.b16 %v4277
    %v4535 = vunpack.c.l.b16 %v4278
    %v4536 = vunpack.c.l.b16 %v4279
    %v4537 = vunpack.c.l.b16 %v4280
    %v4538 = vunpack.c.l.b16 %v4281
    %v4539 = vunpack.c.l.b16 %v4282
    %v4540 = vunpack.c.l.b16 %v4283
    %v4541 = vunpack.c.l.b16 %v4284
    %v4542 = vunpack.c.l.b16 %v4285
    %v4543 = vunpack.c.l.b16 %v4286
    %v4544 = vunpack.c.l.b16 %v4287
    %v4545 = vunpack.c.l.b16 %v4288
    %v4546 = vunpack.c.l.b16 %v4289
    %v4547 = vunpack.c.l.b16 %v4290
    %v4548 = vunpack.c.l.b16 %v4291
    %v4549 = vunpack.c.l.b16 %v4292
    %v4550 = vunpack.c.l.b16 %v4293
    %v4551 = vunpack.c.l.b16 %v4294
    %v4552 = vunpack.c.l.b16 %v4295
    %v4553 = vunpack.c.l.b16 %v4296
    %v4554 = vunpack.c.l.b16 %v4297
    %v4555 = vunpack.c.l.b16 %v4298
    %v4556 = vunpack.c.l.b16 %v4299
    %v4557 = vunpack.c.l.b16 %v4300
    %v4558 = vunpack.c.l.b16 %v4301
    %v4559 = vunpack.c.l.b16 %v4302
    %v4560 = vunpack.c.l.b16 %v4303
    %v4561 = vunpack.c.l.b16 %v4304
    %v4562 = vunpack.c.l.b16 %v4305
    %v4563 = vunpack.c.l.b16 %v4306
    %v4564 = vunpack.c.l.b16 %v4307
    %v4565 = vunpack.c.l.b16 %v4308
    %v4566 = vunpack.c.l.b16 %v4309
    %v4567 = vunpack.c.l.b16 %v4310
    %v4568 = vunpack.c.l.b16 %v4311
    %v4569 = vunpack.c.l.b16 %v4312
    %v4570 = vunpack.c.l.b16 %v4313
    %v4571 = vunpack.c.l.b16 %v4314
    %v4572 = vunpack.c.l.b16 %v4315
    %v4573 = vunpack.c.l.b16 %v4316
    %v4574 = vunpack.c.l.b16 %v4317
    %v4575 = vunpack.c.l.b16 %v4318
    %v4576 = vunpack.c.l.b16 %v4319
    %v4577 = vunpack.c.l.b16 %v4320
    %v4578 = vunpack.c.l.b16 %v4321
    %v4579 = vunpack.c.l.b16 %v4322
    %v4580 = vunpack.c.l.b16 %v4323
    %v4581 = vunpack.c.l.b16 %v4324
    %v4582 = vunpack.c.l.b16 %v4325
    %v4583 = vunpack.c.l.b16 %v4326
    %v4584 = vunpack.c.l.b16 %v4327
    %v4585 = vunpack.c.l.b16 %v4328
    %v4586 = vunpack.c.l.b16 %v4329
    %v4587 = vunpack.c.l.b16 %v4330
    %v4588 = vunpack.c.l.b16 %v4331
    %v4589 = vunpack.c.l.b16 %v4332
    %v4590 = vunpack.c.l.b16 %v4333
    %v4591 = vunpack.c.l.b16 %v4334
    %v4592 = vunpack.c.l.b16 %v4335
    %v4593 = vunpack.c.l.b16 %v4336
    %v4594 = vpack.c.b16 %v4470, %v4469
    %v4595 = vpack.c.b16 %v4472, %v4471
    %v4596 = vpack.c.b16 %v4474, %v4473
    %v4597 = vpack.c.b16 %v4476, %v4475
    %v4598 = vpack.c.b16 %v4478, %v4477
    %v4599 = vpack.c.b16 %v4480, %v4479
    %v4600 = vpack.c.b16 %v4482, %v4481
    %v4601 = vpack.c.b16 %v4484, %v4483
    %v4602 = vpack.c.b16 %v4486, %v4485
    %v4603 = vpack.c.b16 %v4488, %v4487
    %v4604 = vpack.c.b16 %v4490, %v4489
    %v4605 = vpack.c.b16 %v4492, %v4491
    %v4606 = vpack.c.b16 %v4494, %v4493
    %v4607 = vpack.c.b16 %v4496, %v4495
    %v4608 = vpack.c.b16 %v4498, %v4497
    %v4609 = vpack.c.b16 %v4500, %v4499
    %v4610 = vpack.c.b16 %v4502, %v4501
    %v4611 = vpack.c.b16 %v4504, %v4503
    %v4612 = vpack.c.b16 %v4506, %v4505
    %v4613 = vpack.c.b16 %v4508, %v4507
    %v4614 = vpack.c.b16 %v4510, %v4509
    %v4615 = vpack.c.b16 %v4512, %v4511
    %v4616 = vpack.c.b16 %v4514, %v4513
    %v4617 = vpack.c.b16 %v4516, %v4515
    %v4618 = vpack.c.b16 %v4518, %v4517
    %v4619 = vpack.c.b16 %v4520, %v4519
    %v4620 = vpack.c.b16 %v4522, %v4521
    %v4621 = vpack.c.b16 %v4524, %v4523
    %v4622 = vpack.c.b16 %v4526, %v4525
    %v4623 = vpack.c.b16 %v4528, %v4527
    %v4624 = vpack.c.b16 %v4530, %v4529
    %v4625 = vpack.c.b16 %v4532, %v4531
    %v4626 = vpack.c.b16 %v4534, %v4533
    %v4627 = vpack.c.b16 %v4536, %v4535
    %v4628 = vpack.c.b16 %v4538, %v4537
    %v4629 = vpack.c.b16 %v4540, %v4539
    %v4630 = vpack.c.b16 %v4542, %v4541
    %v4631 = vpack.c.b16 %v4544, %v4543
    %v4632 = vpack.c.b16 %v4546, %v4545
    %v4633 = vpack.c.b16 %v4548, %v4547
    %v4634 = vpack.c.b16 %v4550, %v4549
    %v4635 = vpack.c.b16 %v4552, %v4551
    %v4636 = vpack.c.b16 %v4554, %v4553
    %v4637 = vpack.c.b16 %v4556, %v4555
    %v4638 = vpack.c.b16 %v4558, %v4557
    %v4639 = vpack.c.b16 %v4560, %v4559
    %v4640 = vpack.c.b16 %v4562, %v4561
    %v4641 = vpack.c.b16 %v4564, %v4563
    %v4642 = vpack.c.b16 %v4566, %v4565
    %v4643 = vpack.c.b16 %v4568, %v4567
    %v4644 = vpack.c.b16 %v4570, %v4569
    %v4645 = vpack.c.b16 %v4572, %v4571
    %v4646 = vpack.c.b16 %v4574, %v4573
    %v4647 = vpack.c.b16 %v4576, %v4575
    %v4648 = vpack.c.b16 %v4578, %v4577
    %v4649 = vpack.c.b16 %v4580, %v4579
    %v4650 = vpack.c.b16 %v4582, %v4581
    %v4651 = vpack.c.b16 %v4584, %v4583
    %v4652 = vpack.c.b16 %v4586, %v4585
    %v4653 = vpack.c.b16 %v4588, %v4587
    %v4654 = vpack.c.b16 %v4590, %v4589
    %v4655 = vpack.c.b16 %v4592, %v4591
    %v4656 = vpack.c.b16 %v4593, %v4593
    %v4720 = vsel %vm1935, %v4211, 0
    %v4723 = vsel %vm1939, %v4656, 0
    %4725 = vmatprep.subr.bf16.mxu0 0
    %4726 = vmatpush1.bf16.msra.mxu0 %v4594
    %4727 = vmatprep.subr.bf16.mxu0 0
    %4728 = vmatpush1.bf16.msra.mxu0 %v4595
    %4729 = vmatprep.subr.bf16.mxu0 0
    %4730 = vmatpush1.bf16.msra.mxu0 %v4596
    %4731 = vmatprep.subr.bf16.mxu0 0
    %4732 = vmatpush1.bf16.msra.mxu0 %v4597
    %4733 = vmatprep.subr.bf16.mxu0 0
    %4734 = vmatpush1.bf16.msra.mxu0 %v4598
    %4735 = vmatprep.subr.bf16.mxu0 0
    %4736 = vmatpush1.bf16.msra.mxu0 %v4599
    %4737 = vmatprep.subr.bf16.mxu0 0
    %4738 = vmatpush1.bf16.msra.mxu0 %v4600
    %4739 = vmatprep.subr.bf16.mxu0 0
    %4740 = vmatpush1.bf16.msra.mxu0 %v4601
    %4741 = vmatprep.subr.bf16.mxu0 0
    %4742 = vmatpush1.bf16.msra.mxu0 %v4602
    %4743 = vmatprep.subr.bf16.mxu0 0
    %4744 = vmatpush1.bf16.msra.mxu0 %v4603
    %4745 = vmatprep.subr.bf16.mxu0 0
    %4746 = vmatpush1.bf16.msra.mxu0 %v4604
    %4747 = vmatprep.subr.bf16.mxu0 0
    %4748 = vmatpush1.bf16.msra.mxu0 %v4605
    %4749 = vmatprep.subr.bf16.mxu0 0
    %4750 = vmatpush1.bf16.msra.mxu0 %v4606
    %4751 = vmatprep.subr.bf16.mxu0 0
    %4752 = vmatpush1.bf16.msra.mxu0 %v4607
    %4753 = vmatprep.subr.bf16.mxu0 0
    %4754 = vmatpush1.bf16.msra.mxu0 %v4608
    %4755 = vmatprep.subr.bf16.mxu0 0
    %4756 = vmatpush1.bf16.msra.mxu0 %v4609
    %4757 = vmatprep.mubr.bf16.mxu0 %v4205
    %4758 = vmatmul.mubr.bf16.gmra.mrb[0].mxu0 %v4204
    %v4759 = vpop.f32.mrb[0].mxu0
    %v4760 = vadd.f32 %v4342, %v4759
    %v4761 = vpop.f32.mrb[0].mxu0
    %v4762 = vpop.f32.mrb[0].mxu0
    %v4763 = vpop.f32.mrb[0].mxu0
    %4764 = vdwg.mxu0
    %4765 = vmatprep.subr.bf16.mxu0 0
    %4766 = vmatpush1.bf16.msra.mxu0 %v4610
    %4767 = vmatprep.subr.bf16.mxu0 0
    %4768 = vmatpush1.bf16.msra.mxu0 %v4611
    %4769 = vmatprep.subr.bf16.mxu0 0
    %4770 = vmatpush1.bf16.msra.mxu0 %v4612
    %4771 = vmatprep.subr.bf16.mxu0 0
    %4772 = vmatpush1.bf16.msra.mxu0 %v4613
    %4773 = vmatprep.subr.bf16.mxu0 0
    %4774 = vmatpush1.bf16.msra.mxu0 %v4614
    %4775 = vmatprep.subr.bf16.mxu0 0
    %4776 = vmatpush1.bf16.msra.mxu0 %v4615
    %4777 = vmatprep.subr.bf16.mxu0 0
    %4778 = vmatpush1.bf16.msra.mxu0 %v4616
    %4779 = vmatprep.subr.bf16.mxu0 0
    %4780 = vmatpush1.bf16.msra.mxu0 %v4617
    %4781 = vmatprep.subr.bf16.mxu0 0
    %4782 = vmatpush1.bf16.msra.mxu0 %v4618
    %4783 = vmatprep.subr.bf16.mxu0 0
    %4784 = vmatpush1.bf16.msra.mxu0 %v4619
    %4785 = vmatprep.subr.bf16.mxu0 0
    %4786 = vmatpush1.bf16.msra.mxu0 %v4620
    %4787 = vmatprep.subr.bf16.mxu0 0
    %4788 = vmatpush1.bf16.msra.mxu0 %v4621
    %4789 = vmatprep.subr.bf16.mxu0 0
    %4790 = vmatpush1.bf16.msra.mxu0 %v4622
    %4791 = vmatprep.subr.bf16.mxu0 0
    %4792 = vmatpush1.bf16.msra.mxu0 %v4623
    %4793 = vmatprep.subr.bf16.mxu0 0
    %4794 = vmatpush1.bf16.msra.mxu0 %v4624
    %4795 = vmatprep.subr.bf16.mxu0 0
    %4796 = vmatpush1.bf16.msra.mxu0 %v4625
    %4797 = vmatprep.mubr.bf16.mxu0 %v4207
    %4798 = vmatmul.mubr.bf16.gmra.mrb[0].mxu0 %v4206
    %v4799 = vpop.f32.mrb[0].mxu0
    %v4800 = vadd.f32 %v4760, %v4799
    %v4801 = vpop.f32.mrb[0].mxu0
    %v4802 = vpop.f32.mrb[0].mxu0
    %v4803 = vpop.f32.mrb[0].mxu0
    %4804 = vdwg.mxu0
    %4805 = vmatprep.subr.bf16.mxu0 0
    %4806 = vmatpush1.bf16.msra.mxu0 %v4626
    %4807 = vmatprep.subr.bf16.mxu0 0
    %4808 = vmatpush1.bf16.msra.mxu0 %v4627
    %4809 = vmatprep.subr.bf16.mxu0 0
    %4810 = vmatpush1.bf16.msra.mxu0 %v4628
    %4811 = vmatprep.subr.bf16.mxu0 0
    %4812 = vmatpush1.bf16.msra.mxu0 %v4629
    %4813 = vmatprep.subr.bf16.mxu0 0
    %4814 = vmatpush1.bf16.msra.mxu0 %v4630
    %4815 = vmatprep.subr.bf16.mxu0 0
    %4816 = vmatpush1.bf16.msra.mxu0 %v4631
    %4817 = vmatprep.subr.bf16.mxu0 0
    %4818 = vmatpush1.bf16.msra.mxu0 %v4632
    %4819 = vmatprep.subr.bf16.mxu0 0
    %4820 = vmatpush1.bf16.msra.mxu0 %v4633
    %4821 = vmatprep.subr.bf16.mxu0 0
    %4822 = vmatpush1.bf16.msra.mxu0 %v4634
    %4823 = vmatprep.subr.bf16.mxu0 0
    %4824 = vmatpush1.bf16.msra.mxu0 %v4635
    %4825 = vmatprep.subr.bf16.mxu0 0
    %4826 = vmatpush1.bf16.msra.mxu0 %v4636
    %4827 = vmatprep.subr.bf16.mxu0 0
    %4828 = vmatpush1.bf16.msra.mxu0 %v4637
    %4829 = vmatprep.subr.bf16.mxu0 0
    %4830 = vmatpush1.bf16.msra.mxu0 %v4638
    %4831 = vmatprep.subr.bf16.mxu0 0
    %4832 = vmatpush1.bf16.msra.mxu0 %v4639
    %4833 = vmatprep.subr.bf16.mxu0 0
    %4834 = vmatpush1.bf16.msra.mxu0 %v4640
    %4835 = vmatprep.subr.bf16.mxu0 0
    %4836 = vmatpush1.bf16.msra.mxu0 %v4641
    %4837 = vmatprep.mubr.bf16.mxu0 %v4209
    %4838 = vmatmul.mubr.bf16.gmra.mrb[0].mxu0 %v4208
    %v4839 = vpop.f32.mrb[0].mxu0
    %v4840 = vadd.f32 %v4800, %v4839
    %v4841 = vpop.f32.mrb[0].mxu0
    %v4842 = vpop.f32.mrb[0].mxu0
    %v4843 = vpop.f32.mrb[0].mxu0
    %4844 = vdwg.mxu0
    %4845 = vmatprep.subr.bf16.mxu0 0
    %4846 = vmatpush1.bf16.msra.mxu0 %v4642
    %4847 = vmatprep.subr.bf16.mxu0 0
    %4848 = vmatpush1.bf16.msra.mxu0 %v4643
    %4849 = vmatprep.subr.bf16.mxu0 0
    %4850 = vmatpush1.bf16.msra.mxu0 %v4644
    %4851 = vmatprep.subr.bf16.mxu0 0
    %4852 = vmatpush1.bf16.msra.mxu0 %v4645
    %4853 = vmatprep.subr.bf16.mxu0 0
    %4854 = vmatpush1.bf16.msra.mxu0 %v4646
    %4855 = vmatprep.subr.bf16.mxu0 0
    %4856 = vmatpush1.bf16.msra.mxu0 %v4647
    %4857 = vmatprep.subr.bf16.mxu0 0
    %4858 = vmatpush1.bf16.msra.mxu0 %v4648
    %4859 = vmatprep.subr.bf16.mxu0 0
    %4860 = vmatpush1.bf16.msra.mxu0 %v4649
    %4861 = vmatprep.subr.bf16.mxu0 0
    %4862 = vmatpush1.bf16.msra.mxu0 %v4650
    %4863 = vmatprep.subr.bf16.mxu0 0
    %4864 = vmatpush1.bf16.msra.mxu0 %v4651
    %4865 = vmatprep.subr.bf16.mxu0 0
    %4866 = vmatpush1.bf16.msra.mxu0 %v4652
    %4867 = vmatprep.subr.bf16.mxu0 0
    %4868 = vmatpush1.bf16.msra.mxu0 %v4653
    %4869 = vmatprep.subr.bf16.mxu0 0
    %4870 = vmatpush1.bf16.msra.mxu0 %v4654
    %4871 = vmatprep.subr.bf16.mxu0 0
    %4872 = vmatpush1.bf16.msra.mxu0 %v4655
    %4873 = vmatprep.subr.bf16.mxu0 0
    %4874 = vmatpush1.bf16.msra.mxu0 %v4723
    %4875 = vmatprep.subr.bf16.mxu0 0
    %4876 = vmatpush1.bf16.msra.mxu0 0
    %4877 = vmatprep.mubr.bf16.mxu0 %v4720
    %4878 = vmatmul.mubr.bf16.gmra.mrb[0].mxu0 %v4210
    %v4879 = vpop.f32.mrb[0].mxu0
    %v4880 = vadd.f32 %v4840, %v4879
    %v4881 = vpop.f32.mrb[0].mxu0
    %v4882 = vpop.f32.mrb[0].mxu0
    %v4883 = vpop.f32.mrb[0].mxu0
    %4884 = vdwg.mxu0
    %4885 = vst [vmem:[#allocation2] sm:$0xff] %v4880
    %4886 = vst [vmem:[#allocation4] sm:$0xff] %v2607
    %4887 = vst [vmem:[#allocation4 + $0x8] sm:$0xff] %v2609
    // Predicated region
    $region58: #{tpu_custom_call.1} parent=1 // pred_check
      _
    $region59: #{tpu_custom_call.1} parent=1 // pred_check_branch
      %4889 = sbr.rel (0) target = $region61
    $region60: #{tpu_custom_call.1} parent=1 // pred_region
      %s4891 = ssub.s32 128, 128
      %4892 = vsyncadd [#allocation3], %s4891
      %s4894 = sshll.u32 [#allocation2], 4
      %s4895 = int_to_ptr.vmem [resolvable:$true] %s4894
      %4897 = dma.vmem_to_hbm [thread:$0]  %s4895, 128, %s14, [#allocation3]
    $region61: #{tpu_custom_call.1} parent=1 // pred_fallthru
      _
    // Predicated region
    $region62: #{tpu_custom_call.1} parent=1 // pred_check
      _
    $region63: #{tpu_custom_call.1} parent=1 // pred_check_branch
      %4899 = sbr.rel (0) target = $region65
    $region64: #{tpu_custom_call.1} parent=1 // pred_region
      %s4901 = ssub.s32 256, 256
      %4902 = vsyncadd [#allocation5], %s4901
      %s4904 = sshll.u32 [#allocation4], 4
      %s4905 = int_to_ptr.vmem [resolvable:$true] %s4904
      %4907 = dma.vmem_to_hbm [thread:$0]  %s4905, 256, %s15, [#allocation5]
    $region65: #{tpu_custom_call.1} parent=1 // pred_fallthru
      _
    // Predicated region
    $region66: #{tpu_custom_call.1} parent=1 // pred_check
      _
    $region67: #{tpu_custom_call.1} parent=1 // pred_check_branch
      %4909 = sbr.rel (0) target = $region69
    $region68: #{tpu_custom_call.1} parent=1 // pred_region
      %4910 = dma.done [#allocation3], 128
    $region69: #{tpu_custom_call.1} parent=1 // pred_fallthru
      _
    // Predicated region
    $region70: #{tpu_custom_call.1} parent=1 // pred_check
      _
    $region71: #{tpu_custom_call.1} parent=1 // pred_check_branch
      %4912 = sbr.rel (0) target = $region73
    $region72: #{tpu_custom_call.1} parent=1 // pred_region
      %4913 = dma.done [#allocation5], 256
    $region73: #{tpu_custom_call.1} parent=1 // pred_fallthru
      _
    %4914 = vsyncpa [#allocation3], 1
    %4915 = vsyncpa [#allocation5], 1

</llo_original>
